<compile_context>
chip_gen: v7x
topology: tpu7x:2x2x1
jax: 0.10.0
libtpu: 0.0.40
codegen_flags: <defaults>
</compile_context>

<pallas_src>
import functools

import jax
import jax.numpy as jnp
from jax.experimental import pallas as pl
from jax.experimental.pallas import tpu as pltpu


def _round_up(n, m):
    return -(-n // m) * m


# ----------------------------------------------------------------------------
# Refinement conv stack: 4 x (3x3 conv, padding=1), ReLU after conv1/conv2
# ----------------------------------------------------------------------------
def _rm_kernel(flat_p, margin, Wp, x_ref,
               w1, b1, w2, b2, w3, b3, w4, b4, m_ref,
               out_ref, buf_a, buf_b):
    """Channel-major, lane-dense 4-layer conv stack.

    x_ref : (cin_p, ext) bf16   zero-padded, flattened-spatial input block
    wN    : (9, coN_p, ciN_p) bf16  per-tap weight matrices
    bN    : (coN_p, 1) f32
    m_ref : (1, flat_p) f32     1.0 at interior pixels, 0.0 at pad/tail lanes
    out   : (co_p, flat_p) f32
    buf_* : (nf_p, ext) bf16    VMEM ping-pong feature maps (halo-extended)
    """
    # Tap offsets of a 3x3 SAME conv in the flattened (Hp*Wp) coordinate.
    shifts = [margin + (dy - 1) * Wp + (dx - 1)
              for dy in range(3) for dx in range(3)]

    nf_p = buf_a.shape[0]
    hi = margin + flat_p

    # Only the 128-lane halo margins need zeroing (interiors are fully
    # overwritten every layer).  Kept per grid step: correct even if the batch
    # axis is megacore-sharded (a program_id==0 guard would not fire on TC1).
    zhalo = jnp.zeros((nf_p, margin), buf_a.dtype)
    buf_a[:, :margin] = zhalo
    buf_a[:, hi:hi + margin] = zhalo
    buf_b[:, :margin] = zhalo
    buf_b[:, hi:hi + margin] = zhalo

    # Hoisted broadcast (JAX does not CSE broadcast_in_dim).
    mask = jnp.broadcast_to(m_ref[...], (nf_p, flat_p))

    def conv(src_ref, w_ref, b_ref):
        # 9 accumulated matmuls on lane-shifted Ref views (no im2col temp).
        acc = None
        for t, s in enumerate(shifts):
            view = src_ref[:, s:s + flat_p]          # bf16 (ci_p, flat_p)
            part = jnp.dot(w_ref[t], view, preferred_element_type=jnp.float32)
            acc = part if acc is None else acc + part
        return acc + b_ref[...]                      # f32, bias lane-broadcast

    inner = slice(margin, hi)

    # conv1 + ReLU
    y = jnp.maximum(conv(x_ref, w1, b1), 0.0) * mask
    buf_a[:, inner] = y.astype(buf_a.dtype)
    # conv2 + ReLU
    y = jnp.maximum(conv(buf_a, w2, b2), 0.0) * mask
    buf_b[:, inner] = y.astype(buf_b.dtype)
    # conv3 (no activation) — mask keeps pad pixels zero for conv4's taps
    y = conv(buf_b, w3, b3) * mask
    buf_a[:, inner] = y.astype(buf_a.dtype)
    # conv4 (no activation) -> lane-dense f32 output block
    out_ref[...] = conv(buf_a, w4, b4).astype(out_ref.dtype)


def _prep_w(w, b, ci, ci_p, co, co_p):
    """(co, 9*ci) tap-major im2col weights -> (9, co_p, ci_p) bf16 + f32 bias."""
    w = w.reshape(co, 9, ci).transpose(1, 0, 2)                # (9, co, ci)
    w = jnp.pad(w, ((0, 0), (0, co_p - co), (0, ci_p - ci)))
    b = jnp.pad(b.astype(jnp.float32), ((0, co_p - co), (0, 0)))
    return w.astype(jnp.bfloat16), b


def _pick_batch_block(N, Hp, Wp, cin_p, nf_p, co_p,
                      budget_bytes=24 * 1024 * 1024):
    """How many images to fold onto the lane axis per grid step.

    Keeps nb >= 2 when N >= 2 (so the "parallel" grid axis actually spans both
    v7x TensorCores and the pipeline can prefetch block i+1), and sizes the
    block against a VMEM budget that leaves headroom inside v7x's 64 MiB.
    """
    hw = Hp * Wp
    margin = _round_up(Wp + 1, 128)
    bb = max(1, min(N, 8))
    if N >= 2:
        bb = min(bb, -(-N // 2))
    while bb > 1:
        flat_p = _round_up(bb * hw, 128)
        ext = flat_p + 2 * margin
        need = (2 * cin_p * ext * 2        # double-buffered bf16 input block
                + 2 * nf_p * ext * 2       # bf16 ping-pong feature buffers
                + 2 * co_p * flat_p * 4)   # double-buffered f32 output block
        if need <= budget_bytes:
            break
        bb -= 1
    return bb


def rm_pallas(x_nchw, params, batch_block=None):
    """4x(3x3 conv, pad=1) stack, ReLU after conv1/conv2.  NCHW in / NCHW out."""
    (w1, b1), (w2, b2), (w3, b3), (w4, b4) = params
    N, cin, H, W = x_nchw.shape
    nf = w1.shape[0]
    cout = w4.shape[0]

    cin_p = _round_up(cin, 8)
    nf_p = _round_up(nf, 8)
    co_p = _round_up(cout, 8)

    Hp, Wp = H + 2, W + 2
    hw = Hp * Wp

    if batch_block is None:
        batch_block = _pick_batch_block(N, Hp, Wp, cin_p, nf_p, co_p)
    nb = -(-N // batch_block)
    n_pad = nb * batch_block

    flat = batch_block * hw
    flat_p = _round_up(flat, 128)          # lane-aligned matmul N / store width
    margin = _round_up(Wp + 1, 128)        # lane-aligned halo for the tap shifts
    ext = flat_p + 2 * margin

    # NCHW -> (nb, cin_p, ext): channel-major, per-image zero-padded spatially,
    # batch block folded onto the flattened (lane) axis, zero halos + tail.
    xp = jnp.pad(x_nchw.astype(jnp.bfloat16),
                 ((0, n_pad - N), (0, cin_p - cin), (1, 1), (1, 1)))
    xb = xp.reshape(nb, batch_block, cin_p, hw).transpose(0, 2, 1, 3)
    xb = xb.reshape(nb, cin_p, flat)
    xb = jnp.pad(xb, ((0, 0), (0, 0), (margin, margin + flat_p - flat)))

    # Interior mask: 0 at spatial pad pixels and at the 128-alignment tail.
    im = jnp.zeros((Hp, Wp), jnp.float32).at[1:H + 1, 1:W + 1].set(1.0)
    imask = jnp.tile(im.reshape(-1), batch_block)
    imask = jnp.pad(imask, (0, flat_p - flat)).reshape(1, flat_p)

    w1p, b1p = _prep_w(w1, b1, cin, cin_p, nf, nf_p)
    w2p, b2p = _prep_w(w2, b2, nf, nf_p, nf, nf_p)
    w3p, b3p = _prep_w(w3, b3, nf, nf_p, nf, nf_p)
    w4p, b4p = _prep_w(w4, b4, nf, nf_p, cout, co_p)

    kernel = functools.partial(_rm_kernel, flat_p, margin, Wp)

    def cst2(i): return (0, 0)
    def cst3(i): return (0, 0, 0)

    grid_spec = pltpu.PrefetchScalarGridSpec(
        num_scalar_prefetch=0,
        grid=(nb,),
        in_specs=[
            pl.BlockSpec((None, cin_p, ext), lambda i: (i, 0, 0)),
            pl.BlockSpec(w1p.shape, cst3), pl.BlockSpec(b1p.shape, cst2),
            pl.BlockSpec(w2p.shape, cst3), pl.BlockSpec(b2p.shape, cst2),
            pl.BlockSpec(w3p.shape, cst3), pl.BlockSpec(b3p.shape, cst2),
            pl.BlockSpec(w4p.shape, cst3), pl.BlockSpec(b4p.shape, cst2),
            pl.BlockSpec((1, flat_p), cst2),
        ],
        # co_p = 8 rows -> full (8,128) output tiles, unmasked vst, no sublane
        # padding relayout; extra zero channels are sliced off after the call.
        out_specs=pl.BlockSpec((None, co_p, flat_p), lambda i: (i, 0, 0)),
        scratch_shapes=[pltpu.VMEM((nf_p, ext), jnp.bfloat16),
                        pltpu.VMEM((nf_p, ext), jnp.bfloat16)],
    )

    out = pl.pallas_call(
        kernel,
        out_shape=jax.ShapeDtypeStruct((nb, co_p, flat_p), jnp.float32),
        grid_spec=grid_spec,
        compiler_params=pltpu.CompilerParams(
            dimension_semantics=("parallel",),       # shard batch blocks on TCs
            vmem_limit_bytes=64 * 1024 * 1024),
    )(xb, w1p, b1p, w2p, b2p, w3p, b3p, w4p, b4p, imask)

    # (nb, co_p, flat_p) -> NCHW interior.
    y = out[:, :cout, :flat].reshape(nb, cout, batch_block, Hp, Wp)
    y = y.transpose(0, 2, 1, 3, 4).reshape(n_pad, cout, Hp, Wp)
    return y[:N, :, 1:H + 1, 1:W + 1]


# ----------------------------------------------------------------------------
# Data-consistency kernel:  where(mask, k0, k)  — lane-dense, in-place on k
# ----------------------------------------------------------------------------
def _dc_kernel(k_ref, k0_ref, m_ref, o_ref):
    o_ref[...] = jnp.where(m_ref[...] != 0, k0_ref[...], k_ref[...])


def dc_pallas(k, k0, mask_i8):
    N, C, H, W = k.shape
    L = C * H * W
    kf = k.reshape(N, L).astype(jnp.float32)
    k0f = k0.reshape(N, L).astype(jnp.float32)
    mf = mask_i8.reshape(N, L)

    # Blocking: up to 8 images on the sublane axis, large 128-aligned lane
    # tiles; purely HBM-bound so full (8,128) tiles + a 4x smaller (int8) mask
    # stream are the levers that matter.
    sb = min(N, 8)
    n_pad = _round_up(N, sb)
    L_p = _round_up(L, 128)
    lt = min(L_p, 16 * 1024)
    L_p = _round_up(L_p, lt)

    if (n_pad, L_p) != (N, L):
        kf = jnp.pad(kf, ((0, n_pad - N), (0, L_p - L)))
        k0f = jnp.pad(k0f, ((0, n_pad - N), (0, L_p - L)))
        mf = jnp.pad(mf, ((0, n_pad - N), (0, L_p - L)))

    spec = pl.BlockSpec((sb, lt), lambda i, j: (i, j))
    out = pl.pallas_call(
        _dc_kernel,
        out_shape=jax.ShapeDtypeStruct((n_pad, L_p), jnp.float32),
        grid=(n_pad // sb, L_p // lt),
        in_specs=[spec, spec, spec],
        out_specs=spec,
        input_output_aliases={0: 0},        # write DC result in place over k
        compiler_params=pltpu.CompilerParams(
            dimension_semantics=("parallel", "parallel")),
    )(kf, k0f, mf)
    return out[:N, :L].reshape(N, C, H, W)


# ----------------------------------------------------------------------------
# Centered orthonormal 2D FFT / IFFT (fastmri.fft2c / ifft2c), NCHW real/imag.
# TODO(synk): no Pallas FFT primitive; done with jnp.fft outside the kernels.
# ----------------------------------------------------------------------------
def fft2c_nchw(x):
    c = x[:, 0] + 1j * x[:, 1]
    c = jnp.fft.ifftshift(c, axes=(-2, -1))
    k = jnp.fft.fft2(c, norm="ortho")
    k = jnp.fft.fftshift(k, axes=(-2, -1))
    return jnp.stack([jnp.real(k), jnp.imag(k)], axis=1).astype(jnp.float32)


def ifft2c_nchw(x):
    c = x[:, 0] + 1j * x[:, 1]
    c = jnp.fft.ifftshift(c, axes=(-2, -1))
    img = jnp.fft.ifft2(c, norm="ortho")
    img = jnp.fft.fftshift(img, axes=(-2, -1))
    return jnp.stack([jnp.real(img), jnp.imag(img)], axis=1).astype(jnp.float32)


# ----------------------------------------------------------------------------
# Full RefineModule forward (everything stays NCHW — no k0/mask transposes)
# ----------------------------------------------------------------------------
@jax.jit
def refine_module_forward(x_nchw, k0_nchw, mask_nchw, params):
    y = rm_pallas(x_nchw, params)                          # refinement convs
    k = fft2c_nchw(y)                                      # image -> k-space
    dc = dc_pallas(k, k0_nchw.astype(jnp.float32),
                   (mask_nchw != 0).astype(jnp.int8))      # data consistency
    return ifft2c_nchw(dc)                                 # k-space -> image


# ----------------------------------------------------------------------------
# Pure-JAX f32 reference (sanity check for the Pallas conv stack + DC)
# ----------------------------------------------------------------------------
def _conv_ref(x, wmat, b):
    co = wmat.shape[0]
    ci = wmat.shape[1] // 9
    w_oihw = wmat.reshape(co, 3, 3, ci).transpose(0, 3, 1, 2)
    y = jax.lax.conv_general_dilated(
        x, w_oihw, (1, 1), "SAME",
        dimension_numbers=("NCHW", "OIHW", "NCHW"))
    return y + b.reshape(1, co, 1, 1)


def _ref_forward(x, k0, mask, params):
    (w1, b1), (w2, b2), (w3, b3), (w4, b4) = params
    x = x.astype(jnp.float32)
    y = jnp.maximum(_conv_ref(x, w1, b1), 0.0)
    y = jnp.maximum(_conv_ref(y, w2, b2), 0.0)
    y = _conv_ref(y, w3, b3)
    y = _conv_ref(y, w4, b4)
    k = fft2c_nchw(y)
    dc = jnp.where(mask != 0.0, k0.astype(jnp.float32), k)
    return ifft2c_nchw(dc)


# ----------------------------------------------------------------------------
def init_params(key, in_channels, nf, out_channels):
    def init_conv(k, ci, co):
        k1, k2 = jax.random.split(k)
        w = jax.random.normal(k1, (co, 9 * ci), jnp.float32) * 0.1   # (co, 9*ci)
        b = jax.random.normal(k2, (co, 1), jnp.float32) * 0.1
        return w, b

    ks = jax.random.split(key, 4)
    return (init_conv(ks[0], in_channels, nf),
            init_conv(ks[1], nf, nf),
            init_conv(ks[2], nf, nf),
            init_conv(ks[3], nf, out_channels))


def _run_case(key, N, C, H, W, nf, tol):
    kp, kx, kk0, km = jax.random.split(key, 4)
    params = init_params(kp, C, nf, C)
    x = jax.random.normal(kx, (N, C, H, W), jnp.float32)
    k0 = jax.random.normal(kk0, (N, C, H, W), jnp.float32)
    mask = (jax.random.uniform(km, (N, 1, H, W)) > 0.5)
    mask_f32 = jnp.broadcast_to(mask, (N, C, H, W)).astype(jnp.float32)

    out = jax.block_until_ready(refine_module_forward(x, k0, mask_f32, params))
    ref = jax.block_until_ready(_ref_forward(x, k0, mask_f32, params))

    assert out.shape == (N, C, H, W)
    max_err = float(jnp.max(jnp.abs(out - ref)))
    assert max_err < tol, f"mismatch vs reference: {max_err}"
    return max_err


if __name__ == "__main__":
    key = jax.random.PRNGKey(0)
    k1, k2 = jax.random.split(key)

    # (n, 2, nx, ny): channel dim = real/imag.  Case 1 exercises nb=2 grid
    # steps; case 2 exercises odd N, batch padding and non-square H/W.
    _run_case(k1, N=2, C=2, H=16, W=16, nf=8, tol=3e-2)
    _run_case(k2, N=3, C=2, H=10, W=12, nf=8, tol=3e-2)

    print("KERNEL_OK")
</pallas_src>

<mosaic_0001>
module attributes {stable_mosaic.version = 11 : i64} {
  func.func @_rm_kernel(%arg0: i32, %arg1: memref<1x8x640xbf16, #tpu.memory_space<vmem>>, %arg2: memref<9x8x8xbf16, #tpu.memory_space<vmem>>, %arg3: memref<8x1xf32, #tpu.memory_space<vmem>>, %arg4: memref<9x8x8xbf16, #tpu.memory_space<vmem>>, %arg5: memref<8x1xf32, #tpu.memory_space<vmem>>, %arg6: memref<9x8x8xbf16, #tpu.memory_space<vmem>>, %arg7: memref<8x1xf32, #tpu.memory_space<vmem>>, %arg8: memref<9x8x8xbf16, #tpu.memory_space<vmem>>, %arg9: memref<8x1xf32, #tpu.memory_space<vmem>>, %arg10: memref<1x384xf32, #tpu.memory_space<vmem>>, %arg11: memref<1x8x384xf32, #tpu.memory_space<vmem>>, %arg12: memref<8x640xbf16, #tpu.memory_space<vmem>>, %arg13: memref<8x640xbf16, #tpu.memory_space<vmem>>) attributes {dimension_semantics = [#tpu.dimension_semantics<parallel>], iteration_bounds = array<i64: 2>, scalar_prefetch = 0 : i64, scratch_operands = 2 : i64, tpu.core_type = #tpu.core_type<tc>, window_params = [{transform_indices = @transform_0, window_bounds = array<i64: 1, 8, 640>}, {pipeline_mode = #tpu.pipeline_mode<synchronous>, transform_indices = @transform_1, window_bounds = array<i64: 9, 8, 8>}, {pipeline_mode = #tpu.pipeline_mode<synchronous>, transform_indices = @transform_2, window_bounds = array<i64: 8, 1>}, {pipeline_mode = #tpu.pipeline_mode<synchronous>, transform_indices = @transform_3, window_bounds = array<i64: 9, 8, 8>}, {pipeline_mode = #tpu.pipeline_mode<synchronous>, transform_indices = @transform_4, window_bounds = array<i64: 8, 1>}, {pipeline_mode = #tpu.pipeline_mode<synchronous>, transform_indices = @transform_5, window_bounds = array<i64: 9, 8, 8>}, {pipeline_mode = #tpu.pipeline_mode<synchronous>, transform_indices = @transform_6, window_bounds = array<i64: 8, 1>}, {pipeline_mode = #tpu.pipeline_mode<synchronous>, transform_indices = @transform_7, window_bounds = array<i64: 9, 8, 8>}, {pipeline_mode = #tpu.pipeline_mode<synchronous>, transform_indices = @transform_8, window_bounds = array<i64: 8, 1>}, {pipeline_mode = #tpu.pipeline_mode<synchronous>, transform_indices = @transform_9, window_bounds = array<i64: 1, 384>}, {transform_indices = @transform_10, window_bounds = array<i64: 1, 8, 384>}]} {
    %cst = arith.constant 0.000000e+00 : bf16
    %0 = vector.broadcast %cst : bf16 to vector<8x128xbf16>
    %c0 = arith.constant 0 : index
    %c0_0 = arith.constant 0 : index
    %1 = vector.load %arg12[%c0, %c0_0] : memref<8x640xbf16, #tpu.memory_space<vmem>>, vector<8x128xbf16>
    tpu.vector_store %arg12[%c0, %c0_0], %0 {strides = array<i32>} : memref<8x640xbf16, #tpu.memory_space<vmem>>, vector<8x128xbf16>,
    %c0_1 = arith.constant 0 : index
    %c512 = arith.constant 512 : index
    %2 = vector.load %arg12[%c0_1, %c512] : memref<8x640xbf16, #tpu.memory_space<vmem>>, vector<8x128xbf16>
    tpu.vector_store %arg12[%c0_1, %c512], %0 {strides = array<i32>} : memref<8x640xbf16, #tpu.memory_space<vmem>>, vector<8x128xbf16>,
    %c0_2 = arith.constant 0 : index
    %c0_3 = arith.constant 0 : index
    %3 = vector.load %arg13[%c0_2, %c0_3] : memref<8x640xbf16, #tpu.memory_space<vmem>>, vector<8x128xbf16>
    tpu.vector_store %arg13[%c0_2, %c0_3], %0 {strides = array<i32>} : memref<8x640xbf16, #tpu.memory_space<vmem>>, vector<8x128xbf16>,
    %c0_4 = arith.constant 0 : index
    %c512_5 = arith.constant 512 : index
    %4 = vector.load %arg13[%c0_4, %c512_5] : memref<8x640xbf16, #tpu.memory_space<vmem>>, vector<8x128xbf16>
    tpu.vector_store %arg13[%c0_4, %c512_5], %0 {strides = array<i32>} : memref<8x640xbf16, #tpu.memory_space<vmem>>, vector<8x128xbf16>,
    %c0_6 = arith.constant 0 : index
    %c0_7 = arith.constant 0 : index
    %5 = vector.load %arg10[%c0_6, %c0_7] : memref<1x384xf32, #tpu.memory_space<vmem>>, vector<1x384xf32>
    %6 = vector.shape_cast %5 : vector<1x384xf32> to vector<1x384xf32>
    %7 = vector.broadcast %6 : vector<1x384xf32> to vector<8x384xf32>
    %c0_8 = arith.constant 0 : index
    %c0_9 = arith.constant 0 : index
    %c109 = arith.constant 109 : index
    %8 = vector.load %arg1[%c0_8, %c0_9, %c109] : memref<1x8x640xbf16, #tpu.memory_space<vmem>>, vector<1x8x384xbf16>
    %9 = vector.shape_cast %8 : vector<1x8x384xbf16> to vector<8x384xbf16>
    %c0_10 = arith.constant 0 : index
    %c0_11 = arith.constant 0 : index
    %c0_12 = arith.constant 0 : index
    %10 = vector.load %arg2[%c0_10, %c0_11, %c0_12] : memref<9x8x8xbf16, #tpu.memory_space<vmem>>, vector<1x8x8xbf16>
    %11 = vector.shape_cast %10 : vector<1x8x8xbf16> to vector<8x8xbf16>
    %cst_13 = arith.constant dense<0.000000e+00> : vector<8x384xf32>
    %12 = tpu.matmul %11, %9, %cst_13 {dimension_numbers = #tpu.dot_dimension_numbers<[1], [0], [0], [1], [0, 0, 1, 1], [], []>} : vector<8x8xbf16>, vector<8x384xbf16>, vector<8x384xf32> -> vector<8x384xf32>
    %c0_14 = arith.constant 0 : index
    %c0_15 = arith.constant 0 : index
    %c110 = arith.constant 110 : index
    %13 = vector.load %arg1[%c0_14, %c0_15, %c110] : memref<1x8x640xbf16, #tpu.memory_space<vmem>>, vector<1x8x384xbf16>
    %14 = vector.shape_cast %13 : vector<1x8x384xbf16> to vector<8x384xbf16>
    %c1 = arith.constant 1 : index
    %c0_16 = arith.constant 0 : index
    %c0_17 = arith.constant 0 : index
    %15 = vector.load %arg2[%c1, %c0_16, %c0_17] : memref<9x8x8xbf16, #tpu.memory_space<vmem>>, vector<1x8x8xbf16>
    %16 = vector.shape_cast %15 : vector<1x8x8xbf16> to vector<8x8xbf16>
    %cst_18 = arith.constant dense<0.000000e+00> : vector<8x384xf32>
    %17 = tpu.matmul %16, %14, %cst_18 {dimension_numbers = #tpu.dot_dimension_numbers<[1], [0], [0], [1], [0, 0, 1, 1], [], []>} : vector<8x8xbf16>, vector<8x384xbf16>, vector<8x384xf32> -> vector<8x384xf32>
    %18 = arith.addf %12, %17 : vector<8x384xf32>
    %c0_19 = arith.constant 0 : index
    %c0_20 = arith.constant 0 : index
    %c111 = arith.constant 111 : index
    %19 = vector.load %arg1[%c0_19, %c0_20, %c111] : memref<1x8x640xbf16, #tpu.memory_space<vmem>>, vector<1x8x384xbf16>
    %20 = vector.shape_cast %19 : vector<1x8x384xbf16> to vector<8x384xbf16>
    %c2 = arith.constant 2 : index
    %c0_21 = arith.constant 0 : index
    %c0_22 = arith.constant 0 : index
    %21 = vector.load %arg2[%c2, %c0_21, %c0_22] : memref<9x8x8xbf16, #tpu.memory_space<vmem>>, vector<1x8x8xbf16>
    %22 = vector.shape_cast %21 : vector<1x8x8xbf16> to vector<8x8xbf16>
    %cst_23 = arith.constant dense<0.000000e+00> : vector<8x384xf32>
    %23 = tpu.matmul %22, %20, %cst_23 {dimension_numbers = #tpu.dot_dimension_numbers<[1], [0], [0], [1], [0, 0, 1, 1], [], []>} : vector<8x8xbf16>, vector<8x384xbf16>, vector<8x384xf32> -> vector<8x384xf32>
    %24 = arith.addf %18, %23 : vector<8x384xf32>
    %c0_24 = arith.constant 0 : index
    %c0_25 = arith.constant 0 : index
    %c127 = arith.constant 127 : index
    %25 = vector.load %arg1[%c0_24, %c0_25, %c127] : memref<1x8x640xbf16, #tpu.memory_space<vmem>>, vector<1x8x384xbf16>
    %26 = vector.shape_cast %25 : vector<1x8x384xbf16> to vector<8x384xbf16>
    %c3 = arith.constant 3 : index
    %c0_26 = arith.constant 0 : index
    %c0_27 = arith.constant 0 : index
    %27 = vector.load %arg2[%c3, %c0_26, %c0_27] : memref<9x8x8xbf16, #tpu.memory_space<vmem>>, vector<1x8x8xbf16>
    %28 = vector.shape_cast %27 : vector<1x8x8xbf16> to vector<8x8xbf16>
    %cst_28 = arith.constant dense<0.000000e+00> : vector<8x384xf32>
    %29 = tpu.matmul %28, %26, %cst_28 {dimension_numbers = #tpu.dot_dimension_numbers<[1], [0], [0], [1], [0, 0, 1, 1], [], []>} : vector<8x8xbf16>, vector<8x384xbf16>, vector<8x384xf32> -> vector<8x384xf32>
    %30 = arith.addf %24, %29 : vector<8x384xf32>
    %c0_29 = arith.constant 0 : index
    %c0_30 = arith.constant 0 : index
    %c128 = arith.constant 128 : index
    %31 = vector.load %arg1[%c0_29, %c0_30, %c128] : memref<1x8x640xbf16, #tpu.memory_space<vmem>>, vector<1x8x384xbf16>
    %32 = vector.shape_cast %31 : vector<1x8x384xbf16> to vector<8x384xbf16>
    %c4 = arith.constant 4 : index
    %c0_31 = arith.constant 0 : index
    %c0_32 = arith.constant 0 : index
    %33 = vector.load %arg2[%c4, %c0_31, %c0_32] : memref<9x8x8xbf16, #tpu.memory_space<vmem>>, vector<1x8x8xbf16>
    %34 = vector.shape_cast %33 : vector<1x8x8xbf16> to vector<8x8xbf16>
    %cst_33 = arith.constant dense<0.000000e+00> : vector<8x384xf32>
    %35 = tpu.matmul %34, %32, %cst_33 {dimension_numbers = #tpu.dot_dimension_numbers<[1], [0], [0], [1], [0, 0, 1, 1], [], []>} : vector<8x8xbf16>, vector<8x384xbf16>, vector<8x384xf32> -> vector<8x384xf32>
    %36 = arith.addf %30, %35 : vector<8x384xf32>
    %c0_34 = arith.constant 0 : index
    %c0_35 = arith.constant 0 : index
    %c129 = arith.constant 129 : index
    %37 = vector.load %arg1[%c0_34, %c0_35, %c129] : memref<1x8x640xbf16, #tpu.memory_space<vmem>>, vector<1x8x384xbf16>
    %38 = vector.shape_cast %37 : vector<1x8x384xbf16> to vector<8x384xbf16>
    %c5 = arith.constant 5 : index
    %c0_36 = arith.constant 0 : index
    %c0_37 = arith.constant 0 : index
    %39 = vector.load %arg2[%c5, %c0_36, %c0_37] : memref<9x8x8xbf16, #tpu.memory_space<vmem>>, vector<1x8x8xbf16>
    %40 = vector.shape_cast %39 : vector<1x8x8xbf16> to vector<8x8xbf16>
    %cst_38 = arith.constant dense<0.000000e+00> : vector<8x384xf32>
    %41 = tpu.matmul %40, %38, %cst_38 {dimension_numbers = #tpu.dot_dimension_numbers<[1], [0], [0], [1], [0, 0, 1, 1], [], []>} : vector<8x8xbf16>, vector<8x384xbf16>, vector<8x384xf32> -> vector<8x384xf32>
    %42 = arith.addf %36, %41 : vector<8x384xf32>
    %c0_39 = arith.constant 0 : index
    %c0_40 = arith.constant 0 : index
    %c145 = arith.constant 145 : index
    %43 = vector.load %arg1[%c0_39, %c0_40, %c145] : memref<1x8x640xbf16, #tpu.memory_space<vmem>>, vector<1x8x384xbf16>
    %44 = vector.shape_cast %43 : vector<1x8x384xbf16> to vector<8x384xbf16>
    %c6 = arith.constant 6 : index
    %c0_41 = arith.constant 0 : index
    %c0_42 = arith.constant 0 : index
    %45 = vector.load %arg2[%c6, %c0_41, %c0_42] : memref<9x8x8xbf16, #tpu.memory_space<vmem>>, vector<1x8x8xbf16>
    %46 = vector.shape_cast %45 : vector<1x8x8xbf16> to vector<8x8xbf16>
    %cst_43 = arith.constant dense<0.000000e+00> : vector<8x384xf32>
    %47 = tpu.matmul %46, %44, %cst_43 {dimension_numbers = #tpu.dot_dimension_numbers<[1], [0], [0], [1], [0, 0, 1, 1], [], []>} : vector<8x8xbf16>, vector<8x384xbf16>, vector<8x384xf32> -> vector<8x384xf32>
    %48 = arith.addf %42, %47 : vector<8x384xf32>
    %c0_44 = arith.constant 0 : index
    %c0_45 = arith.constant 0 : index
    %c146 = arith.constant 146 : index
    %49 = vector.load %arg1[%c0_44, %c0_45, %c146] : memref<1x8x640xbf16, #tpu.memory_space<vmem>>, vector<1x8x384xbf16>
    %50 = vector.shape_cast %49 : vector<1x8x384xbf16> to vector<8x384xbf16>
    %c7 = arith.constant 7 : index
    %c0_46 = arith.constant 0 : index
    %c0_47 = arith.constant 0 : index
    %51 = vector.load %arg2[%c7, %c0_46, %c0_47] : memref<9x8x8xbf16, #tpu.memory_space<vmem>>, vector<1x8x8xbf16>
    %52 = vector.shape_cast %51 : vector<1x8x8xbf16> to vector<8x8xbf16>
    %cst_48 = arith.constant dense<0.000000e+00> : vector<8x384xf32>
    %53 = tpu.matmul %52, %50, %cst_48 {dimension_numbers = #tpu.dot_dimension_numbers<[1], [0], [0], [1], [0, 0, 1, 1], [], []>} : vector<8x8xbf16>, vector<8x384xbf16>, vector<8x384xf32> -> vector<8x384xf32>
    %54 = arith.addf %48, %53 : vector<8x384xf32>
    %c0_49 = arith.constant 0 : index
    %c0_50 = arith.constant 0 : index
    %c147 = arith.constant 147 : index
    %55 = vector.load %arg1[%c0_49, %c0_50, %c147] : memref<1x8x640xbf16, #tpu.memory_space<vmem>>, vector<1x8x384xbf16>
    %56 = vector.shape_cast %55 : vector<1x8x384xbf16> to vector<8x384xbf16>
    %c8 = arith.constant 8 : index
    %c0_51 = arith.constant 0 : index
    %c0_52 = arith.constant 0 : index
    %57 = vector.load %arg2[%c8, %c0_51, %c0_52] : memref<9x8x8xbf16, #tpu.memory_space<vmem>>, vector<1x8x8xbf16>
    %58 = vector.shape_cast %57 : vector<1x8x8xbf16> to vector<8x8xbf16>
    %cst_53 = arith.constant dense<0.000000e+00> : vector<8x384xf32>
    %59 = tpu.matmul %58, %56, %cst_53 {dimension_numbers = #tpu.dot_dimension_numbers<[1], [0], [0], [1], [0, 0, 1, 1], [], []>} : vector<8x8xbf16>, vector<8x384xbf16>, vector<8x384xf32> -> vector<8x384xf32>
    %60 = arith.addf %54, %59 : vector<8x384xf32>
    %c0_54 = arith.constant 0 : index
    %c0_55 = arith.constant 0 : index
    %61 = vector.load %arg3[%c0_54, %c0_55] : memref<8x1xf32, #tpu.memory_space<vmem>>, vector<8x1xf32>
    %62 = vector.broadcast %61 : vector<8x1xf32> to vector<8x384xf32>
    %63 = arith.addf %60, %62 : vector<8x384xf32>
    %cst_56 = arith.constant 0.000000e+00 : f32
    %64 = vector.broadcast %cst_56 : f32 to vector<8x384xf32>
    %65 = arith.maximumf %63, %64 : vector<8x384xf32>
    %66 = arith.mulf %65, %7 : vector<8x384xf32>
    %67 = arith.truncf %66 : vector<8x384xf32> to vector<8x384xbf16>
    %c0_57 = arith.constant 0 : index
    %c128_58 = arith.constant 128 : index
    %68 = vector.load %arg12[%c0_57, %c128_58] : memref<8x640xbf16, #tpu.memory_space<vmem>>, vector<8x384xbf16>
    tpu.vector_store %arg12[%c0_57, %c128_58], %67 {strides = array<i32>} : memref<8x640xbf16, #tpu.memory_space<vmem>>, vector<8x384xbf16>,
    %c0_59 = arith.constant 0 : index
    %c109_60 = arith.constant 109 : index
    %69 = vector.load %arg12[%c0_59, %c109_60] : memref<8x640xbf16, #tpu.memory_space<vmem>>, vector<8x384xbf16>
    %c0_61 = arith.constant 0 : index
    %c0_62 = arith.constant 0 : index
    %c0_63 = arith.constant 0 : index
    %70 = vector.load %arg4[%c0_61, %c0_62, %c0_63] : memref<9x8x8xbf16, #tpu.memory_space<vmem>>, vector<1x8x8xbf16>
    %71 = vector.shape_cast %70 : vector<1x8x8xbf16> to vector<8x8xbf16>
    %cst_64 = arith.constant dense<0.000000e+00> : vector<8x384xf32>
    %72 = tpu.matmul %71, %69, %cst_64 {dimension_numbers = #tpu.dot_dimension_numbers<[1], [0], [0], [1], [0, 0, 1, 1], [], []>} : vector<8x8xbf16>, vector<8x384xbf16>, vector<8x384xf32> -> vector<8x384xf32>
    %c0_65 = arith.constant 0 : index
    %c110_66 = arith.constant 110 : index
    %73 = vector.load %arg12[%c0_65, %c110_66] : memref<8x640xbf16, #tpu.memory_space<vmem>>, vector<8x384xbf16>
    %c1_67 = arith.constant 1 : index
    %c0_68 = arith.constant 0 : index
    %c0_69 = arith.constant 0 : index
    %74 = vector.load %arg4[%c1_67, %c0_68, %c0_69] : memref<9x8x8xbf16, #tpu.memory_space<vmem>>, vector<1x8x8xbf16>
    %75 = vector.shape_cast %74 : vector<1x8x8xbf16> to vector<8x8xbf16>
    %cst_70 = arith.constant dense<0.000000e+00> : vector<8x384xf32>
    %76 = tpu.matmul %75, %73, %cst_70 {dimension_numbers = #tpu.dot_dimension_numbers<[1], [0], [0], [1], [0, 0, 1, 1], [], []>} : vector<8x8xbf16>, vector<8x384xbf16>, vector<8x384xf32> -> vector<8x384xf32>
    %77 = arith.addf %72, %76 : vector<8x384xf32>
    %c0_71 = arith.constant 0 : index
    %c111_72 = arith.constant 111 : index
    %78 = vector.load %arg12[%c0_71, %c111_72] : memref<8x640xbf16, #tpu.memory_space<vmem>>, vector<8x384xbf16>
    %c2_73 = arith.constant 2 : index
    %c0_74 = arith.constant 0 : index
    %c0_75 = arith.constant 0 : index
    %79 = vector.load %arg4[%c2_73, %c0_74, %c0_75] : memref<9x8x8xbf16, #tpu.memory_space<vmem>>, vector<1x8x8xbf16>
    %80 = vector.shape_cast %79 : vector<1x8x8xbf16> to vector<8x8xbf16>
    %cst_76 = arith.constant dense<0.000000e+00> : vector<8x384xf32>
    %81 = tpu.matmul %80, %78, %cst_76 {dimension_numbers = #tpu.dot_dimension_numbers<[1], [0], [0], [1], [0, 0, 1, 1], [], []>} : vector<8x8xbf16>, vector<8x384xbf16>, vector<8x384xf32> -> vector<8x384xf32>
    %82 = arith.addf %77, %81 : vector<8x384xf32>
    %c0_77 = arith.constant 0 : index
    %c127_78 = arith.constant 127 : index
    %83 = vector.load %arg12[%c0_77, %c127_78] : memref<8x640xbf16, #tpu.memory_space<vmem>>, vector<8x384xbf16>
    %c3_79 = arith.constant 3 : index
    %c0_80 = arith.constant 0 : index
    %c0_81 = arith.constant 0 : index
    %84 = vector.load %arg4[%c3_79, %c0_80, %c0_81] : memref<9x8x8xbf16, #tpu.memory_space<vmem>>, vector<1x8x8xbf16>
    %85 = vector.shape_cast %84 : vector<1x8x8xbf16> to vector<8x8xbf16>
    %cst_82 = arith.constant dense<0.000000e+00> : vector<8x384xf32>
    %86 = tpu.matmul %85, %83, %cst_82 {dimension_numbers = #tpu.dot_dimension_numbers<[1], [0], [0], [1], [0, 0, 1, 1], [], []>} : vector<8x8xbf16>, vector<8x384xbf16>, vector<8x384xf32> -> vector<8x384xf32>
    %87 = arith.addf %82, %86 : vector<8x384xf32>
    %c0_83 = arith.constant 0 : index
    %c128_84 = arith.constant 128 : index
    %88 = vector.load %arg12[%c0_83, %c128_84] : memref<8x640xbf16, #tpu.memory_space<vmem>>, vector<8x384xbf16>
    %c4_85 = arith.constant 4 : index
    %c0_86 = arith.constant 0 : index
    %c0_87 = arith.constant 0 : index
    %89 = vector.load %arg4[%c4_85, %c0_86, %c0_87] : memref<9x8x8xbf16, #tpu.memory_space<vmem>>, vector<1x8x8xbf16>
    %90 = vector.shape_cast %89 : vector<1x8x8xbf16> to vector<8x8xbf16>
    %cst_88 = arith.constant dense<0.000000e+00> : vector<8x384xf32>
    %91 = tpu.matmul %90, %88, %cst_88 {dimension_numbers = #tpu.dot_dimension_numbers<[1], [0], [0], [1], [0, 0, 1, 1], [], []>} : vector<8x8xbf16>, vector<8x384xbf16>, vector<8x384xf32> -> vector<8x384xf32>
    %92 = arith.addf %87, %91 : vector<8x384xf32>
    %c0_89 = arith.constant 0 : index
    %c129_90 = arith.constant 129 : index
    %93 = vector.load %arg12[%c0_89, %c129_90] : memref<8x640xbf16, #tpu.memory_space<vmem>>, vector<8x384xbf16>
    %c5_91 = arith.constant 5 : index
    %c0_92 = arith.constant 0 : index
    %c0_93 = arith.constant 0 : index
    %94 = vector.load %arg4[%c5_91, %c0_92, %c0_93] : memref<9x8x8xbf16, #tpu.memory_space<vmem>>, vector<1x8x8xbf16>
    %95 = vector.shape_cast %94 : vector<1x8x8xbf16> to vector<8x8xbf16>
    %cst_94 = arith.constant dense<0.000000e+00> : vector<8x384xf32>
    %96 = tpu.matmul %95, %93, %cst_94 {dimension_numbers = #tpu.dot_dimension_numbers<[1], [0], [0], [1], [0, 0, 1, 1], [], []>} : vector<8x8xbf16>, vector<8x384xbf16>, vector<8x384xf32> -> vector<8x384xf32>
    %97 = arith.addf %92, %96 : vector<8x384xf32>
    %c0_95 = arith.constant 0 : index
    %c145_96 = arith.constant 145 : index
    %98 = vector.load %arg12[%c0_95, %c145_96] : memref<8x640xbf16, #tpu.memory_space<vmem>>, vector<8x384xbf16>
    %c6_97 = arith.constant 6 : index
    %c0_98 = arith.constant 0 : index
    %c0_99 = arith.constant 0 : index
    %99 = vector.load %arg4[%c6_97, %c0_98, %c0_99] : memref<9x8x8xbf16, #tpu.memory_space<vmem>>, vector<1x8x8xbf16>
    %100 = vector.shape_cast %99 : vector<1x8x8xbf16> to vector<8x8xbf16>
    %cst_100 = arith.constant dense<0.000000e+00> : vector<8x384xf32>
    %101 = tpu.matmul %100, %98, %cst_100 {dimension_numbers = #tpu.dot_dimension_numbers<[1], [0], [0], [1], [0, 0, 1, 1], [], []>} : vector<8x8xbf16>, vector<8x384xbf16>, vector<8x384xf32> -> vector<8x384xf32>
    %102 = arith.addf %97, %101 : vector<8x384xf32>
    %c0_101 = arith.constant 0 : index
    %c146_102 = arith.constant 146 : index
    %103 = vector.load %arg12[%c0_101, %c146_102] : memref<8x640xbf16, #tpu.memory_space<vmem>>, vector<8x384xbf16>
    %c7_103 = arith.constant 7 : index
    %c0_104 = arith.constant 0 : index
    %c0_105 = arith.constant 0 : index
    %104 = vector.load %arg4[%c7_103, %c0_104, %c0_105] : memref<9x8x8xbf16, #tpu.memory_space<vmem>>, vector<1x8x8xbf16>
    %105 = vector.shape_cast %104 : vector<1x8x8xbf16> to vector<8x8xbf16>
    %cst_106 = arith.constant dense<0.000000e+00> : vector<8x384xf32>
    %106 = tpu.matmul %105, %103, %cst_106 {dimension_numbers = #tpu.dot_dimension_numbers<[1], [0], [0], [1], [0, 0, 1, 1], [], []>} : vector<8x8xbf16>, vector<8x384xbf16>, vector<8x384xf32> -> vector<8x384xf32>
    %107 = arith.addf %102, %106 : vector<8x384xf32>
    %c0_107 = arith.constant 0 : index
    %c147_108 = arith.constant 147 : index
    %108 = vector.load %arg12[%c0_107, %c147_108] : memref<8x640xbf16, #tpu.memory_space<vmem>>, vector<8x384xbf16>
    %c8_109 = arith.constant 8 : index
    %c0_110 = arith.constant 0 : index
    %c0_111 = arith.constant 0 : index
    %109 = vector.load %arg4[%c8_109, %c0_110, %c0_111] : memref<9x8x8xbf16, #tpu.memory_space<vmem>>, vector<1x8x8xbf16>
    %110 = vector.shape_cast %109 : vector<1x8x8xbf16> to vector<8x8xbf16>
    %cst_112 = arith.constant dense<0.000000e+00> : vector<8x384xf32>
    %111 = tpu.matmul %110, %108, %cst_112 {dimension_numbers = #tpu.dot_dimension_numbers<[1], [0], [0], [1], [0, 0, 1, 1], [], []>} : vector<8x8xbf16>, vector<8x384xbf16>, vector<8x384xf32> -> vector<8x384xf32>
    %112 = arith.addf %107, %111 : vector<8x384xf32>
    %c0_113 = arith.constant 0 : index
    %c0_114 = arith.constant 0 : index
    %113 = vector.load %arg5[%c0_113, %c0_114] : memref<8x1xf32, #tpu.memory_space<vmem>>, vector<8x1xf32>
    %114 = vector.broadcast %113 : vector<8x1xf32> to vector<8x384xf32>
    %115 = arith.addf %112, %114 : vector<8x384xf32>
    %cst_115 = arith.constant 0.000000e+00 : f32
    %116 = vector.broadcast %cst_115 : f32 to vector<8x384xf32>
    %117 = arith.maximumf %115, %116 : vector<8x384xf32>
    %118 = arith.mulf %117, %7 : vector<8x384xf32>
    %119 = arith.truncf %118 : vector<8x384xf32> to vector<8x384xbf16>
    %c0_116 = arith.constant 0 : index
    %c128_117 = arith.constant 128 : index
    %120 = vector.load %arg13[%c0_116, %c128_117] : memref<8x640xbf16, #tpu.memory_space<vmem>>, vector<8x384xbf16>
    tpu.vector_store %arg13[%c0_116, %c128_117], %119 {strides = array<i32>} : memref<8x640xbf16, #tpu.memory_space<vmem>>, vector<8x384xbf16>,
    %c0_118 = arith.constant 0 : index
    %c109_119 = arith.constant 109 : index
    %121 = vector.load %arg13[%c0_118, %c109_119] : memref<8x640xbf16, #tpu.memory_space<vmem>>, vector<8x384xbf16>
    %c0_120 = arith.constant 0 : index
    %c0_121 = arith.constant 0 : index
    %c0_122 = arith.constant 0 : index
    %122 = vector.load %arg6[%c0_120, %c0_121, %c0_122] : memref<9x8x8xbf16, #tpu.memory_space<vmem>>, vector<1x8x8xbf16>
    %123 = vector.shape_cast %122 : vector<1x8x8xbf16> to vector<8x8xbf16>
    %cst_123 = arith.constant dense<0.000000e+00> : vector<8x384xf32>
    %124 = tpu.matmul %123, %121, %cst_123 {dimension_numbers = #tpu.dot_dimension_numbers<[1], [0], [0], [1], [0, 0, 1, 1], [], []>} : vector<8x8xbf16>, vector<8x384xbf16>, vector<8x384xf32> -> vector<8x384xf32>
    %c0_124 = arith.constant 0 : index
    %c110_125 = arith.constant 110 : index
    %125 = vector.load %arg13[%c0_124, %c110_125] : memref<8x640xbf16, #tpu.memory_space<vmem>>, vector<8x384xbf16>
    %c1_126 = arith.constant 1 : index
    %c0_127 = arith.constant 0 : index
    %c0_128 = arith.constant 0 : index
    %126 = vector.load %arg6[%c1_126, %c0_127, %c0_128] : memref<9x8x8xbf16, #tpu.memory_space<vmem>>, vector<1x8x8xbf16>
    %127 = vector.shape_cast %126 : vector<1x8x8xbf16> to vector<8x8xbf16>
    %cst_129 = arith.constant dense<0.000000e+00> : vector<8x384xf32>
    %128 = tpu.matmul %127, %125, %cst_129 {dimension_numbers = #tpu.dot_dimension_numbers<[1], [0], [0], [1], [0, 0, 1, 1], [], []>} : vector<8x8xbf16>, vector<8x384xbf16>, vector<8x384xf32> -> vector<8x384xf32>
    %129 = arith.addf %124, %128 : vector<8x384xf32>
    %c0_130 = arith.constant 0 : index
    %c111_131 = arith.constant 111 : index
    %130 = vector.load %arg13[%c0_130, %c111_131] : memref<8x640xbf16, #tpu.memory_space<vmem>>, vector<8x384xbf16>
    %c2_132 = arith.constant 2 : index
    %c0_133 = arith.constant 0 : index
    %c0_134 = arith.constant 0 : index
    %131 = vector.load %arg6[%c2_132, %c0_133, %c0_134] : memref<9x8x8xbf16, #tpu.memory_space<vmem>>, vector<1x8x8xbf16>
    %132 = vector.shape_cast %131 : vector<1x8x8xbf16> to vector<8x8xbf16>
    %cst_135 = arith.constant dense<0.000000e+00> : vector<8x384xf32>
    %133 = tpu.matmul %132, %130, %cst_135 {dimension_numbers = #tpu.dot_dimension_numbers<[1], [0], [0], [1], [0, 0, 1, 1], [], []>} : vector<8x8xbf16>, vector<8x384xbf16>, vector<8x384xf32> -> vector<8x384xf32>
    %134 = arith.addf %129, %133 : vector<8x384xf32>
    %c0_136 = arith.constant 0 : index
    %c127_137 = arith.constant 127 : index
    %135 = vector.load %arg13[%c0_136, %c127_137] : memref<8x640xbf16, #tpu.memory_space<vmem>>, vector<8x384xbf16>
    %c3_138 = arith.constant 3 : index
    %c0_139 = arith.constant 0 : index
    %c0_140 = arith.constant 0 : index
    %136 = vector.load %arg6[%c3_138, %c0_139, %c0_140] : memref<9x8x8xbf16, #tpu.memory_space<vmem>>, vector<1x8x8xbf16>
    %137 = vector.shape_cast %136 : vector<1x8x8xbf16> to vector<8x8xbf16>
    %cst_141 = arith.constant dense<0.000000e+00> : vector<8x384xf32>
    %138 = tpu.matmul %137, %135, %cst_141 {dimension_numbers = #tpu.dot_dimension_numbers<[1], [0], [0], [1], [0, 0, 1, 1], [], []>} : vector<8x8xbf16>, vector<8x384xbf16>, vector<8x384xf32> -> vector<8x384xf32>
    %139 = arith.addf %134, %138 : vector<8x384xf32>
    %c0_142 = arith.constant 0 : index
    %c128_143 = arith.constant 128 : index
    %140 = vector.load %arg13[%c0_142, %c128_143] : memref<8x640xbf16, #tpu.memory_space<vmem>>, vector<8x384xbf16>
    %c4_144 = arith.constant 4 : index
    %c0_145 = arith.constant 0 : index
    %c0_146 = arith.constant 0 : index
    %141 = vector.load %arg6[%c4_144, %c0_145, %c0_146] : memref<9x8x8xbf16, #tpu.memory_space<vmem>>, vector<1x8x8xbf16>
    %142 = vector.shape_cast %141 : vector<1x8x8xbf16> to vector<8x8xbf16>
    %cst_147 = arith.constant dense<0.000000e+00> : vector<8x384xf32>
    %143 = tpu.matmul %142, %140, %cst_147 {dimension_numbers = #tpu.dot_dimension_numbers<[1], [0], [0], [1], [0, 0, 1, 1], [], []>} : vector<8x8xbf16>, vector<8x384xbf16>, vector<8x384xf32> -> vector<8x384xf32>
    %144 = arith.addf %139, %143 : vector<8x384xf32>
    %c0_148 = arith.constant 0 : index
    %c129_149 = arith.constant 129 : index
    %145 = vector.load %arg13[%c0_148, %c129_149] : memref<8x640xbf16, #tpu.memory_space<vmem>>, vector<8x384xbf16>
    %c5_150 = arith.constant 5 : index
    %c0_151 = arith.constant 0 : index
    %c0_152 = arith.constant 0 : index
    %146 = vector.load %arg6[%c5_150, %c0_151, %c0_152] : memref<9x8x8xbf16, #tpu.memory_space<vmem>>, vector<1x8x8xbf16>
    %147 = vector.shape_cast %146 : vector<1x8x8xbf16> to vector<8x8xbf16>
    %cst_153 = arith.constant dense<0.000000e+00> : vector<8x384xf32>
    %148 = tpu.matmul %147, %145, %cst_153 {dimension_numbers = #tpu.dot_dimension_numbers<[1], [0], [0], [1], [0, 0, 1, 1], [], []>} : vector<8x8xbf16>, vector<8x384xbf16>, vector<8x384xf32> -> vector<8x384xf32>
    %149 = arith.addf %144, %148 : vector<8x384xf32>
    %c0_154 = arith.constant 0 : index
    %c145_155 = arith.constant 145 : index
    %150 = vector.load %arg13[%c0_154, %c145_155] : memref<8x640xbf16, #tpu.memory_space<vmem>>, vector<8x384xbf16>
    %c6_156 = arith.constant 6 : index
    %c0_157 = arith.constant 0 : index
    %c0_158 = arith.constant 0 : index
    %151 = vector.load %arg6[%c6_156, %c0_157, %c0_158] : memref<9x8x8xbf16, #tpu.memory_space<vmem>>, vector<1x8x8xbf16>
    %152 = vector.shape_cast %151 : vector<1x8x8xbf16> to vector<8x8xbf16>
    %cst_159 = arith.constant dense<0.000000e+00> : vector<8x384xf32>
    %153 = tpu.matmul %152, %150, %cst_159 {dimension_numbers = #tpu.dot_dimension_numbers<[1], [0], [0], [1], [0, 0, 1, 1], [], []>} : vector<8x8xbf16>, vector<8x384xbf16>, vector<8x384xf32> -> vector<8x384xf32>
    %154 = arith.addf %149, %153 : vector<8x384xf32>
    %c0_160 = arith.constant 0 : index
    %c146_161 = arith.constant 146 : index
    %155 = vector.load %arg13[%c0_160, %c146_161] : memref<8x640xbf16, #tpu.memory_space<vmem>>, vector<8x384xbf16>
    %c7_162 = arith.constant 7 : index
    %c0_163 = arith.constant 0 : index
    %c0_164 = arith.constant 0 : index
    %156 = vector.load %arg6[%c7_162, %c0_163, %c0_164] : memref<9x8x8xbf16, #tpu.memory_space<vmem>>, vector<1x8x8xbf16>
    %157 = vector.shape_cast %156 : vector<1x8x8xbf16> to vector<8x8xbf16>
    %cst_165 = arith.constant dense<0.000000e+00> : vector<8x384xf32>
    %158 = tpu.matmul %157, %155, %cst_165 {dimension_numbers = #tpu.dot_dimension_numbers<[1], [0], [0], [1], [0, 0, 1, 1], [], []>} : vector<8x8xbf16>, vector<8x384xbf16>, vector<8x384xf32> -> vector<8x384xf32>
    %159 = arith.addf %154, %158 : vector<8x384xf32>
    %c0_166 = arith.constant 0 : index
    %c147_167 = arith.constant 147 : index
    %160 = vector.load %arg13[%c0_166, %c147_167] : memref<8x640xbf16, #tpu.memory_space<vmem>>, vector<8x384xbf16>
    %c8_168 = arith.constant 8 : index
    %c0_169 = arith.constant 0 : index
    %c0_170 = arith.constant 0 : index
    %161 = vector.load %arg6[%c8_168, %c0_169, %c0_170] : memref<9x8x8xbf16, #tpu.memory_space<vmem>>, vector<1x8x8xbf16>
    %162 = vector.shape_cast %161 : vector<1x8x8xbf16> to vector<8x8xbf16>
    %cst_171 = arith.constant dense<0.000000e+00> : vector<8x384xf32>
    %163 = tpu.matmul %162, %160, %cst_171 {dimension_numbers = #tpu.dot_dimension_numbers<[1], [0], [0], [1], [0, 0, 1, 1], [], []>} : vector<8x8xbf16>, vector<8x384xbf16>, vector<8x384xf32> -> vector<8x384xf32>
    %164 = arith.addf %159, %163 : vector<8x384xf32>
    %c0_172 = arith.constant 0 : index
    %c0_173 = arith.constant 0 : index
    %165 = vector.load %arg7[%c0_172, %c0_173] : memref<8x1xf32, #tpu.memory_space<vmem>>, vector<8x1xf32>
    %166 = vector.broadcast %165 : vector<8x1xf32> to vector<8x384xf32>
    %167 = arith.addf %164, %166 : vector<8x384xf32>
    %168 = arith.mulf %167, %7 : vector<8x384xf32>
    %169 = arith.truncf %168 : vector<8x384xf32> to vector<8x384xbf16>
    %c0_174 = arith.constant 0 : index
    %c128_175 = arith.constant 128 : index
    %170 = vector.load %arg12[%c0_174, %c128_175] : memref<8x640xbf16, #tpu.memory_space<vmem>>, vector<8x384xbf16>
    tpu.vector_store %arg12[%c0_174, %c128_175], %169 {strides = array<i32>} : memref<8x640xbf16, #tpu.memory_space<vmem>>, vector<8x384xbf16>,
    %c0_176 = arith.constant 0 : index
    %c109_177 = arith.constant 109 : index
    %171 = vector.load %arg12[%c0_176, %c109_177] : memref<8x640xbf16, #tpu.memory_space<vmem>>, vector<8x384xbf16>
    %c0_178 = arith.constant 0 : index
    %c0_179 = arith.constant 0 : index
    %c0_180 = arith.constant 0 : index
    %172 = vector.load %arg8[%c0_178, %c0_179, %c0_180] : memref<9x8x8xbf16, #tpu.memory_space<vmem>>, vector<1x8x8xbf16>
    %173 = vector.shape_cast %172 : vector<1x8x8xbf16> to vector<8x8xbf16>
    %cst_181 = arith.constant dense<0.000000e+00> : vector<8x384xf32>
    %174 = tpu.matmul %173, %171, %cst_181 {dimension_numbers = #tpu.dot_dimension_numbers<[1], [0], [0], [1], [0, 0, 1, 1], [], []>} : vector<8x8xbf16>, vector<8x384xbf16>, vector<8x384xf32> -> vector<8x384xf32>
    %c0_182 = arith.constant 0 : index
    %c110_183 = arith.constant 110 : index
    %175 = vector.load %arg12[%c0_182, %c110_183] : memref<8x640xbf16, #tpu.memory_space<vmem>>, vector<8x384xbf16>
    %c1_184 = arith.constant 1 : index
    %c0_185 = arith.constant 0 : index
    %c0_186 = arith.constant 0 : index
    %176 = vector.load %arg8[%c1_184, %c0_185, %c0_186] : memref<9x8x8xbf16, #tpu.memory_space<vmem>>, vector<1x8x8xbf16>
    %177 = vector.shape_cast %176 : vector<1x8x8xbf16> to vector<8x8xbf16>
    %cst_187 = arith.constant dense<0.000000e+00> : vector<8x384xf32>
    %178 = tpu.matmul %177, %175, %cst_187 {dimension_numbers = #tpu.dot_dimension_numbers<[1], [0], [0], [1], [0, 0, 1, 1], [], []>} : vector<8x8xbf16>, vector<8x384xbf16>, vector<8x384xf32> -> vector<8x384xf32>
    %179 = arith.addf %174, %178 : vector<8x384xf32>
    %c0_188 = arith.constant 0 : index
    %c111_189 = arith.constant 111 : index
    %180 = vector.load %arg12[%c0_188, %c111_189] : memref<8x640xbf16, #tpu.memory_space<vmem>>, vector<8x384xbf16>
    %c2_190 = arith.constant 2 : index
    %c0_191 = arith.constant 0 : index
    %c0_192 = arith.constant 0 : index
    %181 = vector.load %arg8[%c2_190, %c0_191, %c0_192] : memref<9x8x8xbf16, #tpu.memory_space<vmem>>, vector<1x8x8xbf16>
    %182 = vector.shape_cast %181 : vector<1x8x8xbf16> to vector<8x8xbf16>
    %cst_193 = arith.constant dense<0.000000e+00> : vector<8x384xf32>
    %183 = tpu.matmul %182, %180, %cst_193 {dimension_numbers = #tpu.dot_dimension_numbers<[1], [0], [0], [1], [0, 0, 1, 1], [], []>} : vector<8x8xbf16>, vector<8x384xbf16>, vector<8x384xf32> -> vector<8x384xf32>
    %184 = arith.addf %179, %183 : vector<8x384xf32>
    %c0_194 = arith.constant 0 : index
    %c127_195 = arith.constant 127 : index
    %185 = vector.load %arg12[%c0_194, %c127_195] : memref<8x640xbf16, #tpu.memory_space<vmem>>, vector<8x384xbf16>
    %c3_196 = arith.constant 3 : index
    %c0_197 = arith.constant 0 : index
    %c0_198 = arith.constant 0 : index
    %186 = vector.load %arg8[%c3_196, %c0_197, %c0_198] : memref<9x8x8xbf16, #tpu.memory_space<vmem>>, vector<1x8x8xbf16>
    %187 = vector.shape_cast %186 : vector<1x8x8xbf16> to vector<8x8xbf16>
    %cst_199 = arith.constant dense<0.000000e+00> : vector<8x384xf32>
    %188 = tpu.matmul %187, %185, %cst_199 {dimension_numbers = #tpu.dot_dimension_numbers<[1], [0], [0], [1], [0, 0, 1, 1], [], []>} : vector<8x8xbf16>, vector<8x384xbf16>, vector<8x384xf32> -> vector<8x384xf32>
    %189 = arith.addf %184, %188 : vector<8x384xf32>
    %c0_200 = arith.constant 0 : index
    %c128_201 = arith.constant 128 : index
    %190 = vector.load %arg12[%c0_200, %c128_201] : memref<8x640xbf16, #tpu.memory_space<vmem>>, vector<8x384xbf16>
    %c4_202 = arith.constant 4 : index
    %c0_203 = arith.constant 0 : index
    %c0_204 = arith.constant 0 : index
    %191 = vector.load %arg8[%c4_202, %c0_203, %c0_204] : memref<9x8x8xbf16, #tpu.memory_space<vmem>>, vector<1x8x8xbf16>
    %192 = vector.shape_cast %191 : vector<1x8x8xbf16> to vector<8x8xbf16>
    %cst_205 = arith.constant dense<0.000000e+00> : vector<8x384xf32>
    %193 = tpu.matmul %192, %190, %cst_205 {dimension_numbers = #tpu.dot_dimension_numbers<[1], [0], [0], [1], [0, 0, 1, 1], [], []>} : vector<8x8xbf16>, vector<8x384xbf16>, vector<8x384xf32> -> vector<8x384xf32>
    %194 = arith.addf %189, %193 : vector<8x384xf32>
    %c0_206 = arith.constant 0 : index
    %c129_207 = arith.constant 129 : index
    %195 = vector.load %arg12[%c0_206, %c129_207] : memref<8x640xbf16, #tpu.memory_space<vmem>>, vector<8x384xbf16>
    %c5_208 = arith.constant 5 : index
    %c0_209 = arith.constant 0 : index
    %c0_210 = arith.constant 0 : index
    %196 = vector.load %arg8[%c5_208, %c0_209, %c0_210] : memref<9x8x8xbf16, #tpu.memory_space<vmem>>, vector<1x8x8xbf16>
    %197 = vector.shape_cast %196 : vector<1x8x8xbf16> to vector<8x8xbf16>
    %cst_211 = arith.constant dense<0.000000e+00> : vector<8x384xf32>
    %198 = tpu.matmul %197, %195, %cst_211 {dimension_numbers = #tpu.dot_dimension_numbers<[1], [0], [0], [1], [0, 0, 1, 1], [], []>} : vector<8x8xbf16>, vector<8x384xbf16>, vector<8x384xf32> -> vector<8x384xf32>
    %199 = arith.addf %194, %198 : vector<8x384xf32>
    %c0_212 = arith.constant 0 : index
    %c145_213 = arith.constant 145 : index
    %200 = vector.load %arg12[%c0_212, %c145_213] : memref<8x640xbf16, #tpu.memory_space<vmem>>, vector<8x384xbf16>
    %c6_214 = arith.constant 6 : index
    %c0_215 = arith.constant 0 : index
    %c0_216 = arith.constant 0 : index
    %201 = vector.load %arg8[%c6_214, %c0_215, %c0_216] : memref<9x8x8xbf16, #tpu.memory_space<vmem>>, vector<1x8x8xbf16>
    %202 = vector.shape_cast %201 : vector<1x8x8xbf16> to vector<8x8xbf16>
    %cst_217 = arith.constant dense<0.000000e+00> : vector<8x384xf32>
    %203 = tpu.matmul %202, %200, %cst_217 {dimension_numbers = #tpu.dot_dimension_numbers<[1], [0], [0], [1], [0, 0, 1, 1], [], []>} : vector<8x8xbf16>, vector<8x384xbf16>, vector<8x384xf32> -> vector<8x384xf32>
    %204 = arith.addf %199, %203 : vector<8x384xf32>
    %c0_218 = arith.constant 0 : index
    %c146_219 = arith.constant 146 : index
    %205 = vector.load %arg12[%c0_218, %c146_219] : memref<8x640xbf16, #tpu.memory_space<vmem>>, vector<8x384xbf16>
    %c7_220 = arith.constant 7 : index
    %c0_221 = arith.constant 0 : index
    %c0_222 = arith.constant 0 : index
    %206 = vector.load %arg8[%c7_220, %c0_221, %c0_222] : memref<9x8x8xbf16, #tpu.memory_space<vmem>>, vector<1x8x8xbf16>
    %207 = vector.shape_cast %206 : vector<1x8x8xbf16> to vector<8x8xbf16>
    %cst_223 = arith.constant dense<0.000000e+00> : vector<8x384xf32>
    %208 = tpu.matmul %207, %205, %cst_223 {dimension_numbers = #tpu.dot_dimension_numbers<[1], [0], [0], [1], [0, 0, 1, 1], [], []>} : vector<8x8xbf16>, vector<8x384xbf16>, vector<8x384xf32> -> vector<8x384xf32>
    %209 = arith.addf %204, %208 : vector<8x384xf32>
    %c0_224 = arith.constant 0 : index
    %c147_225 = arith.constant 147 : index
    %210 = vector.load %arg12[%c0_224, %c147_225] : memref<8x640xbf16, #tpu.memory_space<vmem>>, vector<8x384xbf16>
    %c8_226 = arith.constant 8 : index
    %c0_227 = arith.constant 0 : index
    %c0_228 = arith.constant 0 : index
    %211 = vector.load %arg8[%c8_226, %c0_227, %c0_228] : memref<9x8x8xbf16, #tpu.memory_space<vmem>>, vector<1x8x8xbf16>
    %212 = vector.shape_cast %211 : vector<1x8x8xbf16> to vector<8x8xbf16>
    %cst_229 = arith.constant dense<0.000000e+00> : vector<8x384xf32>
    %213 = tpu.matmul %212, %210, %cst_229 {dimension_numbers = #tpu.dot_dimension_numbers<[1], [0], [0], [1], [0, 0, 1, 1], [], []>} : vector<8x8xbf16>, vector<8x384xbf16>, vector<8x384xf32> -> vector<8x384xf32>
    %214 = arith.addf %209, %213 : vector<8x384xf32>
    %c0_230 = arith.constant 0 : index
    %c0_231 = arith.constant 0 : index
    %215 = vector.load %arg9[%c0_230, %c0_231] : memref<8x1xf32, #tpu.memory_space<vmem>>, vector<8x1xf32>
    %216 = vector.broadcast %215 : vector<8x1xf32> to vector<8x384xf32>
    %217 = arith.addf %214, %216 : vector<8x384xf32>
    %c0_232 = arith.constant 0 : index
    %c0_233 = arith.constant 0 : index
    %c0_234 = arith.constant 0 : index
    %218 = vector.load %arg11[%c0_232, %c0_233, %c0_234] : memref<1x8x384xf32, #tpu.memory_space<vmem>>, vector<1x8x384xf32>
    %219 = vector.shape_cast %218 : vector<1x8x384xf32> to vector<8x384xf32>
    %220 = vector.shape_cast %217 : vector<8x384xf32> to vector<1x8x384xf32>
    tpu.vector_store %arg11[%c0_232, %c0_233, %c0_234], %220 {strides = array<i32>} : memref<1x8x384xf32, #tpu.memory_space<vmem>>, vector<1x8x384xf32>,
    return
  }
  func.func @transform_0(%arg0: i32) -> (i32, i32, i32) {
    %c0_i32 = arith.constant 0 : i32
    %c0_i32_0 = arith.constant 0 : i32
    %c0_i32_1 = arith.constant 0 : i32
    return %arg0, %c0_i32, %c0_i32_0 : i32, i32, i32
  }
  func.func @transform_1(%arg0: i32) -> (i32, i32, i32) {
    %c0_i32 = arith.constant 0 : i32
    %c0_i32_0 = arith.constant 0 : i32
    %c0_i32_1 = arith.constant 0 : i32
    %c0_i32_2 = arith.constant 0 : i32
    return %c0_i32, %c0_i32_0, %c0_i32_1 : i32, i32, i32
  }
  func.func @transform_2(%arg0: i32) -> (i32, i32) {
    %c0_i32 = arith.constant 0 : i32
    %c0_i32_0 = arith.constant 0 : i32
    %c0_i32_1 = arith.constant 0 : i32
    return %c0_i32, %c0_i32_0 : i32, i32
  }
  func.func @transform_3(%arg0: i32) -> (i32, i32, i32) {
    %c0_i32 = arith.constant 0 : i32
    %c0_i32_0 = arith.constant 0 : i32
    %c0_i32_1 = arith.constant 0 : i32
    %c0_i32_2 = arith.constant 0 : i32
    return %c0_i32, %c0_i32_0, %c0_i32_1 : i32, i32, i32
  }
  func.func @transform_4(%arg0: i32) -> (i32, i32) {
    %c0_i32 = arith.constant 0 : i32
    %c0_i32_0 = arith.constant 0 : i32
    %c0_i32_1 = arith.constant 0 : i32
    return %c0_i32, %c0_i32_0 : i32, i32
  }
  func.func @transform_5(%arg0: i32) -> (i32, i32, i32) {
    %c0_i32 = arith.constant 0 : i32
    %c0_i32_0 = arith.constant 0 : i32
    %c0_i32_1 = arith.constant 0 : i32
    %c0_i32_2 = arith.constant 0 : i32
    return %c0_i32, %c0_i32_0, %c0_i32_1 : i32, i32, i32
  }
  func.func @transform_6(%arg0: i32) -> (i32, i32) {
    %c0_i32 = arith.constant 0 : i32
    %c0_i32_0 = arith.constant 0 : i32
    %c0_i32_1 = arith.constant 0 : i32
    return %c0_i32, %c0_i32_0 : i32, i32
  }
  func.func @transform_7(%arg0: i32) -> (i32, i32, i32) {
    %c0_i32 = arith.constant 0 : i32
    %c0_i32_0 = arith.constant 0 : i32
    %c0_i32_1 = arith.constant 0 : i32
    %c0_i32_2 = arith.constant 0 : i32
    return %c0_i32, %c0_i32_0, %c0_i32_1 : i32, i32, i32
  }
  func.func @transform_8(%arg0: i32) -> (i32, i32) {
    %c0_i32 = arith.constant 0 : i32
    %c0_i32_0 = arith.constant 0 : i32
    %c0_i32_1 = arith.constant 0 : i32
    return %c0_i32, %c0_i32_0 : i32, i32
  }
  func.func @transform_9(%arg0: i32) -> (i32, i32) {
    %c0_i32 = arith.constant 0 : i32
    %c0_i32_0 = arith.constant 0 : i32
    %c0_i32_1 = arith.constant 0 : i32
    return %c0_i32, %c0_i32_0 : i32, i32
  }
  func.func @transform_10(%arg0: i32) -> (i32, i32, i32) {
    %c0_i32 = arith.constant 0 : i32
    %c0_i32_0 = arith.constant 0 : i32
    %c0_i32_1 = arith.constant 0 : i32
    return %arg0, %c0_i32, %c0_i32_0 : i32, i32, i32
  }
}

module attributes {stable_mosaic.version = 11 : i64} {
  func.func @_dc_kernel(%arg0: i32, %arg1: i32, %arg2: memref<2x512xf32, #tpu.memory_space<vmem>>, %arg3: memref<2x512xf32, #tpu.memory_space<vmem>>, %arg4: memref<2x512xi8, #tpu.memory_space<vmem>>, %arg5: memref<2x512xf32, #tpu.memory_space<vmem>>) attributes {dimension_semantics = [#tpu.dimension_semantics<parallel>, #tpu.dimension_semantics<parallel>], iteration_bounds = array<i64: 1, 1>, scalar_prefetch = 0 : i64, scratch_operands = 0 : i64, tpu.core_type = #tpu.core_type<tc>, window_params = [{transform_indices = @transform_0, window_bounds = array<i64: 2, 512>}, {transform_indices = @transform_1, window_bounds = array<i64: 2, 512>}, {transform_indices = @transform_2, window_bounds = array<i64: 2, 512>}, {transform_indices = @transform_3, window_bounds = array<i64: 2, 512>}]} {
    %c0 = arith.constant 0 : index
    %c0_0 = arith.constant 0 : index
    %0 = vector.load %arg4[%c0, %c0_0] : memref<2x512xi8, #tpu.memory_space<vmem>>, vector<2x512xi8>
    %c0_i8 = arith.constant 0 : i8
    %1 = vector.broadcast %c0_i8 : i8 to vector<2x512xi8>
    %2 = arith.cmpi ne, %0, %1 : vector<2x512xi8>
    %c0_1 = arith.constant 0 : index
    %c0_2 = arith.constant 0 : index
    %3 = vector.load %arg3[%c0_1, %c0_2] : memref<2x512xf32, #tpu.memory_space<vmem>>, vector<2x512xf32>
    %c0_3 = arith.constant 0 : index
    %c0_4 = arith.constant 0 : index
    %4 = vector.load %arg2[%c0_3, %c0_4] : memref<2x512xf32, #tpu.memory_space<vmem>>, vector<2x512xf32>
    %5 = arith.select %2, %3, %4 : vector<2x512xi1>, vector<2x512xf32>
    %c0_5 = arith.constant 0 : index
    %c0_6 = arith.constant 0 : index
    %6 = vector.load %arg5[%c0_5, %c0_6] : memref<2x512xf32, #tpu.memory_space<vmem>>, vector<2x512xf32>
    tpu.vector_store %arg5[%c0_5, %c0_6], %5 {strides = array<i32>} : memref<2x512xf32, #tpu.memory_space<vmem>>, vector<2x512xf32>,
    return
  }
  func.func @transform_0(%arg0: i32, %arg1: i32) -> (i32, i32) {
    %c0_i32 = arith.constant 0 : i32
    return %arg0, %arg1 : i32, i32
  }
  func.func @transform_1(%arg0: i32, %arg1: i32) -> (i32, i32) {
    %c0_i32 = arith.constant 0 : i32
    return %arg0, %arg1 : i32, i32
  }
  func.func @transform_2(%arg0: i32, %arg1: i32) -> (i32, i32) {
    %c0_i32 = arith.constant 0 : i32
    return %arg0, %arg1 : i32, i32
  }
  func.func @transform_3(%arg0: i32, %arg1: i32) -> (i32, i32) {
    %c0_i32 = arith.constant 0 : i32
    return %arg0, %arg1 : i32, i32
  }
}

</mosaic_0001>

<llo_original>
// kernel: refine_module_forward.3
$region0: #{refine_module_forward.3}
  #allocation0 [shape = 'u32[]', space=smem, size = 0x4, offset = 0x4, fixed_abs, tag = 'smem constant byte address 0x4 - core index']
  #allocation1 [shape = 'u32[144,128]{1,0:T(1,128)}', space=vmem, size = 0x12000, scoped, tag = 'internal scratch']
  %s0 = inlined_call_operand.vmem [shape: f32[2,512], index: 0, kind: input, shape index: {}, may-alias: {0,3}]
  %s1 = inlined_call_operand.vmem [shape: f32[2,512], index: 1, kind: input, shape index: {}]
  %s2 = inlined_call_operand.vmem [shape: s8[2,512], index: 2, kind: input, shape index: {}]
  %s3 = inlined_call_operand.vmem [shape: f32[2,512], index: 3, kind: output, shape index: {}, may-alias: {0,3}]
  %s4 = sld [smem:[#allocation0]]
  $region22: #{refine_module_forward.3} parent=0
    _
  %s6 = ssub.s32 1, %s4
  %s7 = scalar_select 0, %s6, %s4
  // Predicated region
  $region2: #{refine_module_forward.3} parent=0 // pred_check
    _
  $region3: #{refine_module_forward.3} parent=0 // pred_check_branch
    %9 = sbr.rel (0) target = $region5
  $region4: #{refine_module_forward.3} parent=0 // pred_region
    _
  $region5: #{refine_module_forward.3} parent=0 // pred_fallthru
    _
  // Predicated region
  $region6: #{refine_module_forward.3} parent=0 // pred_check
    _
  $region7: #{refine_module_forward.3} parent=0 // pred_check_branch
    %11 = sbr.rel (0) target = $region9
  $region8: #{refine_module_forward.3} parent=0 // pred_region
    _
  $region9: #{refine_module_forward.3} parent=0 // pred_fallthru
    _
  // Predicated region
  $region10: #{refine_module_forward.3} parent=0 // pred_check
    _
  $region11: #{refine_module_forward.3} parent=0 // pred_check_branch
    %13 = sbr.rel (0) target = $region13
  $region12: #{refine_module_forward.3} parent=0 // pred_region
    _
  $region13: #{refine_module_forward.3} parent=0 // pred_fallthru
    _
  %v16 = vld [vmem:[%s2] sm:$0xf]
  %vm17 = vnez %v16
  %v18 = vld [vmem:[%s1] sm:$0xff]
  %v19 = vld [vmem:[%s0] sm:$0xff]
  %v20 = vsel %vm17, 16843009, 0
  %v21 = vunpack.c.0.s8 %v20
  %v22 = vunpack.c.1.s8 %v20
  %vm23 = vcmp.ne.s32.totalorder %v21, 0
  %vm24 = vcmp.ne.s32.totalorder %v22, 0
  %v25 = vsel %vm23, 1, 0
  %v26 = vsel %vm24, 1, 0
  %v28 = vunpack.c.l.s4 1983009808
  %v29 = vunpack.c.0.s8 %v28
  %v30 = vlaneseq
  %v31 = vshrl.u32 %v30, 7
  %v32 = vsub.s32 %v29, %v31
  %v33 = vrot.slane %v25, %v32
  %v35 = vunpack.c.l.s4 1983009808
  %v36 = vunpack.c.0.s8 %v35
  %v37 = vlaneseq
  %v38 = vshrl.u32 %v37, 7
  %v39 = vsub.s32 %v36, %v38
  %v40 = vrot.slane %v26, %v39
  %v41 = vcombine.low %v33, %v40
  %vm42 = vcmp.ne.s32.totalorder %v41, 0
  %v43 = vsel %vm42, %v18, %v19
  %44 = vst [vmem:[%s3] sm:$0xff] %v43
  // Predicated region
  $region14: #{refine_module_forward.3} parent=0 // pred_check
    _
  $region15: #{refine_module_forward.3} parent=0 // pred_check_branch
    %46 = sbr.rel (0) target = $region17
  $region16: #{refine_module_forward.3} parent=0 // pred_region
    _
  $region17: #{refine_module_forward.3} parent=0 // pred_fallthru
    _
  // Predicated region
  $region18: #{refine_module_forward.3} parent=0 // pred_check
    _
  $region19: #{refine_module_forward.3} parent=0 // pred_check_branch
    %48 = sbr.rel (0) target = $region21
  $region20: #{refine_module_forward.3} parent=0 // pred_region
    _
  $region21: #{refine_module_forward.3} parent=0 // pred_fallthru
    _

// kernel: refine_module_forward.2
$region0: #{refine_module_forward.2}
  #allocation0 [shape = 'u32[]', space=smem, size = 0x4, offset = 0x4, fixed_abs, tag = 'smem constant byte address 0x4 - core index']
  #allocation1 [shape = 'u32[144,128]{1,0:T(1,128)}', space=vmem, size = 0x12000, scoped, tag = 'internal scratch']
  #allocation2 [shape = 'bf16[8,640]{1,0:T(8,128)(2,1)}', space=vmem, size = 0x2800, scoped, tag = 'scratch operand']
  #allocation3 [shape = 'bf16[8,640]{1,0:T(8,128)(2,1)}', space=vmem, size = 0x2800, scoped, tag = 'scratch operand']
  %s0 = inlined_call_operand.hbm [shape: bf16[2,8,640], index: 0, kind: input, shape index: {}]
  %s1 = inlined_call_operand.hbm [shape: bf16[9,8,8], index: 1, kind: input, shape index: {}]
  %s2 = inlined_call_operand.hbm [shape: f32[8,1], index: 2, kind: input, shape index: {}]
  %s3 = inlined_call_operand.hbm [shape: bf16[9,8,8], index: 3, kind: input, shape index: {}]
  %s4 = inlined_call_operand.hbm [shape: f32[8,1], index: 4, kind: input, shape index: {}]
  %s5 = inlined_call_operand.hbm [shape: bf16[9,8,8], index: 5, kind: input, shape index: {}]
  %s6 = inlined_call_operand.hbm [shape: f32[8,1], index: 6, kind: input, shape index: {}]
  %s7 = inlined_call_operand.hbm [shape: bf16[9,8,8], index: 7, kind: input, shape index: {}]
  %s8 = inlined_call_operand.hbm [shape: f32[8,1], index: 8, kind: input, shape index: {}]
  %s9 = inlined_call_operand.hbm [shape: f32[1,384], index: 9, kind: input, shape index: {}]
  %s10 = inlined_call_operand.hbm [shape: f32[2,8,384], index: 10, kind: output, shape index: {}]
  %s11 = sld [smem:[#allocation0]]
  $region113: #{refine_module_forward.2} parent=0
    _
  %s13 = ssub.s32 1, %s11
  %s14 = scalar_select 0, %s13, %s11
  $region1: #{refine_module_forward.2} parent=0
    #allocation4 [shape = 'u8[20480]{0}', space=vmem, size = 0x5000, scoped, tag = 'input window, operand 0']
    #allocation5 [shape = 's32[2]{0}', space=sflag, size = 0x8, scoped, tag = 'scoped memory for refine_module_forward.2']
    #allocation6 [shape = 's32[2]{0}', space=sflag, size = 0x8, scoped, tag = 'scoped memory for refine_module_forward.2']
    #allocation7 [shape = 'u8[18432]{0}', space=vmem, size = 0x4800, scoped, tag = 'input window, operand 1, single buffered']
    #allocation8 [shape = 's32[1]{0}', space=sflag, size = 0x4, scoped, tag = 'scoped memory for refine_module_forward.2']
    #allocation9 [shape = 'u8[4096]{0}', space=vmem, size = 0x1000, scoped, tag = 'input window, operand 2, single buffered']
    #allocation10 [shape = 'u8[18432]{0}', space=vmem, size = 0x4800, scoped, tag = 'input window, operand 3, single buffered']
    #allocation11 [shape = 's32[1]{0}', space=sflag, size = 0x4, scoped, tag = 'scoped memory for refine_module_forward.2']
    #allocation12 [shape = 'u8[4096]{0}', space=vmem, size = 0x1000, scoped, tag = 'input window, operand 4, single buffered']
    #allocation13 [shape = 'u8[18432]{0}', space=vmem, size = 0x4800, scoped, tag = 'input window, operand 5, single buffered']
    #allocation14 [shape = 's32[1]{0}', space=sflag, size = 0x4, scoped, tag = 'scoped memory for refine_module_forward.2']
    #allocation15 [shape = 'u8[4096]{0}', space=vmem, size = 0x1000, scoped, tag = 'input window, operand 6, single buffered']
    #allocation16 [shape = 'u8[18432]{0}', space=vmem, size = 0x4800, scoped, tag = 'input window, operand 7, single buffered']
    #allocation17 [shape = 's32[1]{0}', space=sflag, size = 0x4, scoped, tag = 'scoped memory for refine_module_forward.2']
    #allocation18 [shape = 'u8[4096]{0}', space=vmem, size = 0x1000, scoped, tag = 'input window, operand 8, single buffered']
    #allocation19 [shape = 'u8[1536]{0}', space=vmem, size = 0x800, scoped, tag = 'input window, operand 9, single buffered']
    #allocation20 [shape = 's32[1]{0}', space=sflag, size = 0x4, scoped, tag = 'scoped memory for refine_module_forward.2']
    #allocation21 [shape = 'u8[24576]{0}', space=vmem, size = 0x6000, scoped, tag = 'output window, operand 0']
    %15 = vsyncpa [#allocation5], 0
    %s16 = scalar_lea.sflag [#allocation5], 1
    %17 = vsyncpa %s16, 0
    %18 = vsyncpa [#allocation8], 0
    %19 = vsyncpa [#allocation11], 0
    %20 = vsyncpa [#allocation14], 0
    %21 = vsyncpa [#allocation17], 0
    %22 = vsyncpa [#allocation20], 0
    %23 = vsyncpa [#allocation6], 0
    %s24 = scalar_lea.sflag [#allocation6], 1
    %25 = vsyncpa %s24, 0
    loop: start=0, step=1, limit=4
    $region2: #{refine_module_forward.2} parent=1 // loop_pre_header
      _
    $region3: #{refine_module_forward.2} parent=1 // loop_header
      %s27 = sphi 0, %s31
      %p28 = scmp.ge.s32.totalorder %s27, 4
      %s37 = sphi 0, %s39
      %s40 = sphi 0, %s37
      %s41 = sphi 0, %s40
      %s57 = sphi 0, %s41
      %s61 = sphi 0, %s61
      %s63 = sphi 0, %s61
      %s64 = sphi 0, %s63
      %s78 = sphi 0, %s64
      %s82 = sphi 0, %s82
      %s84 = sphi 0, %s82
      %s85 = sphi 0, %s84
      %s99 = sphi 0, %s85
      %s103 = sphi 0, %s103
      %s105 = sphi 0, %s103
      %s106 = sphi 0, %s105
      %s120 = sphi 0, %s106
      %s124 = sphi 0, %s124
      %s126 = sphi 0, %s124
      %s127 = sphi 0, %s126
      %s141 = sphi 0, %s127
      %s145 = sphi 0, %s145
      %s147 = sphi 0, %s145
      %s148 = sphi 0, %s147
      %s162 = sphi 0, %s148
      %s166 = sphi 0, %s166
      %s168 = sphi 0, %s166
      %s169 = sphi 0, %s168
      %s183 = sphi 0, %s169
      %s187 = sphi 0, %s187
      %s189 = sphi 0, %s187
      %s190 = sphi 0, %s189
      %s204 = sphi 0, %s190
      %s208 = sphi 0, %s208
      %s210 = sphi 0, %s208
      %s211 = sphi 0, %s210
      %s225 = sphi 0, %s211
      %s229 = sphi 0, %s229
      %s231 = sphi 0, %s229
      %s232 = sphi 0, %s231
      %s246 = sphi 0, %s232
      %s252 = sphi 0, %s254
      %s255 = sphi 0, %s252
      %s256 = sphi 0, %s255
      %s272 = sphi 0, %s256
    $region4: #{refine_module_forward.2} parent=1 // loop_header_branch
      %30 = sbr.rel (%p28) target = $region8
    $region5: #{refine_module_forward.2} parent=1 // loop_body
      %s32 = ssub.s32 %s27, 1
      %s33 = ssub.s32 %s27, 2
      %s34 = sadd.s32 %s27, 1
      %s35 = ssub.s32 %s27, %s34
      %p36 = scmp.eq.s32.totalorder %s35, 0
      %s38 = sadd.s32 %s37, 1
      %s39 = scalar_select %p36, %s37, %s38
      %p42 = pneg %p36
      %p43 = scmp.eq.s32.totalorder %s27, 1
      %p44 = por %p42, %p43
      %p45 = scmp.ne.s32.totalorder %s37, %s40
      %p46 = scmp.eq.s32.totalorder %s27, 0
      %p47 = por %p45, %p46
      %p48 = scmp.ne.s32.totalorder %s37, %s40
      %p49 = scmp.eq.s32.totalorder %s32, 1
      %p50 = por %p48, %p49
      %p51 = scmp.ne.s32.totalorder %s40, %s41
      %p52 = scmp.eq.s32.totalorder %s32, 0
      %p53 = por %p51, %p52
      %p54 = scmp.ne.s32.totalorder %s40, %s41
      %p55 = scmp.eq.s32.totalorder %s33, 1
      %p56 = por %p54, %p55
      %p58 = scmp.ne.s32.totalorder %s41, %s57
      %p59 = scmp.eq.s32.totalorder %s33, 0
      %p60 = por %p58, %p59
      %s62 = sadd.s32 %s61, 1
      %p65 = scmp.eq.s32.totalorder %s27, 1
      %p66 = scmp.ne.s32.totalorder %s61, %s63
      %p67 = scmp.eq.s32.totalorder %s27, 0
      %p68 = por %p66, %p67
      %p69 = scmp.ne.s32.totalorder %s61, %s63
      %p70 = scmp.eq.s32.totalorder %s32, 1
      %p71 = por %p69, %p70
      %p72 = scmp.ne.s32.totalorder %s63, %s64
      %p73 = scmp.eq.s32.totalorder %s32, 0
      %p74 = por %p72, %p73
      %p75 = scmp.ne.s32.totalorder %s63, %s64
      %p76 = scmp.eq.s32.totalorder %s33, 1
      %p77 = por %p75, %p76
      %p79 = scmp.ne.s32.totalorder %s64, %s78
      %p80 = scmp.eq.s32.totalorder %s33, 0
      %p81 = por %p79, %p80
      %s83 = sadd.s32 %s82, 1
      %p86 = scmp.eq.s32.totalorder %s27, 1
      %p87 = scmp.ne.s32.totalorder %s82, %s84
      %p88 = scmp.eq.s32.totalorder %s27, 0
      %p89 = por %p87, %p88
      %p90 = scmp.ne.s32.totalorder %s82, %s84
      %p91 = scmp.eq.s32.totalorder %s32, 1
      %p92 = por %p90, %p91
      %p93 = scmp.ne.s32.totalorder %s84, %s85
      %p94 = scmp.eq.s32.totalorder %s32, 0
      %p95 = por %p93, %p94
      %p96 = scmp.ne.s32.totalorder %s84, %s85
      %p97 = scmp.eq.s32.totalorder %s33, 1
      %p98 = por %p96, %p97
      %p100 = scmp.ne.s32.totalorder %s85, %s99
      %p101 = scmp.eq.s32.totalorder %s33, 0
      %p102 = por %p100, %p101
      %s104 = sadd.s32 %s103, 1
      %p107 = scmp.eq.s32.totalorder %s27, 1
      %p108 = scmp.ne.s32.totalorder %s103, %s105
      %p109 = scmp.eq.s32.totalorder %s27, 0
      %p110 = por %p108, %p109
      %p111 = scmp.ne.s32.totalorder %s103, %s105
      %p112 = scmp.eq.s32.totalorder %s32, 1
      %p113 = por %p111, %p112
      %p114 = scmp.ne.s32.totalorder %s105, %s106
      %p115 = scmp.eq.s32.totalorder %s32, 0
      %p116 = por %p114, %p115
      %p117 = scmp.ne.s32.totalorder %s105, %s106
      %p118 = scmp.eq.s32.totalorder %s33, 1
      %p119 = por %p117, %p118
      %p121 = scmp.ne.s32.totalorder %s106, %s120
      %p122 = scmp.eq.s32.totalorder %s33, 0
      %p123 = por %p121, %p122
      %s125 = sadd.s32 %s124, 1
      %p128 = scmp.eq.s32.totalorder %s27, 1
      %p129 = scmp.ne.s32.totalorder %s124, %s126
      %p130 = scmp.eq.s32.totalorder %s27, 0
      %p131 = por %p129, %p130
      %p132 = scmp.ne.s32.totalorder %s124, %s126
      %p133 = scmp.eq.s32.totalorder %s32, 1
      %p134 = por %p132, %p133
      %p135 = scmp.ne.s32.totalorder %s126, %s127
      %p136 = scmp.eq.s32.totalorder %s32, 0
      %p137 = por %p135, %p136
      %p138 = scmp.ne.s32.totalorder %s126, %s127
      %p139 = scmp.eq.s32.totalorder %s33, 1
      %p140 = por %p138, %p139
      %p142 = scmp.ne.s32.totalorder %s127, %s141
      %p143 = scmp.eq.s32.totalorder %s33, 0
      %p144 = por %p142, %p143
      %s146 = sadd.s32 %s145, 1
      %p149 = scmp.eq.s32.totalorder %s27, 1
      %p150 = scmp.ne.s32.totalorder %s145, %s147
      %p151 = scmp.eq.s32.totalorder %s27, 0
      %p152 = por %p150, %p151
      %p153 = scmp.ne.s32.totalorder %s145, %s147
      %p154 = scmp.eq.s32.totalorder %s32, 1
      %p155 = por %p153, %p154
      %p156 = scmp.ne.s32.totalorder %s147, %s148
      %p157 = scmp.eq.s32.totalorder %s32, 0
      %p158 = por %p156, %p157
      %p159 = scmp.ne.s32.totalorder %s147, %s148
      %p160 = scmp.eq.s32.totalorder %s33, 1
      %p161 = por %p159, %p160
      %p163 = scmp.ne.s32.totalorder %s148, %s162
      %p164 = scmp.eq.s32.totalorder %s33, 0
      %p165 = por %p163, %p164
      %s167 = sadd.s32 %s166, 1
      %p170 = scmp.eq.s32.totalorder %s27, 1
      %p171 = scmp.ne.s32.totalorder %s166, %s168
      %p172 = scmp.eq.s32.totalorder %s27, 0
      %p173 = por %p171, %p172
      %p174 = scmp.ne.s32.totalorder %s166, %s168
      %p175 = scmp.eq.s32.totalorder %s32, 1
      %p176 = por %p174, %p175
      %p177 = scmp.ne.s32.totalorder %s168, %s169
      %p178 = scmp.eq.s32.totalorder %s32, 0
      %p179 = por %p177, %p178
      %p180 = scmp.ne.s32.totalorder %s168, %s169
      %p181 = scmp.eq.s32.totalorder %s33, 1
      %p182 = por %p180, %p181
      %p184 = scmp.ne.s32.totalorder %s169, %s183
      %p185 = scmp.eq.s32.totalorder %s33, 0
      %p186 = por %p184, %p185
      %s188 = sadd.s32 %s187, 1
      %p191 = scmp.eq.s32.totalorder %s27, 1
      %p192 = scmp.ne.s32.totalorder %s187, %s189
      %p193 = scmp.eq.s32.totalorder %s27, 0
      %p194 = por %p192, %p193
      %p195 = scmp.ne.s32.totalorder %s187, %s189
      %p196 = scmp.eq.s32.totalorder %s32, 1
      %p197 = por %p195, %p196
      %p198 = scmp.ne.s32.totalorder %s189, %s190
      %p199 = scmp.eq.s32.totalorder %s32, 0
      %p200 = por %p198, %p199
      %p201 = scmp.ne.s32.totalorder %s189, %s190
      %p202 = scmp.eq.s32.totalorder %s33, 1
      %p203 = por %p201, %p202
      %p205 = scmp.ne.s32.totalorder %s190, %s204
      %p206 = scmp.eq.s32.totalorder %s33, 0
      %p207 = por %p205, %p206
      %s209 = sadd.s32 %s208, 1
      %p212 = scmp.eq.s32.totalorder %s27, 1
      %p213 = scmp.ne.s32.totalorder %s208, %s210
      %p214 = scmp.eq.s32.totalorder %s27, 0
      %p215 = por %p213, %p214
      %p216 = scmp.ne.s32.totalorder %s208, %s210
      %p217 = scmp.eq.s32.totalorder %s32, 1
      %p218 = por %p216, %p217
      %p219 = scmp.ne.s32.totalorder %s210, %s211
      %p220 = scmp.eq.s32.totalorder %s32, 0
      %p221 = por %p219, %p220
      %p222 = scmp.ne.s32.totalorder %s210, %s211
      %p223 = scmp.eq.s32.totalorder %s33, 1
      %p224 = por %p222, %p223
      %p226 = scmp.ne.s32.totalorder %s211, %s225
      %p227 = scmp.eq.s32.totalorder %s33, 0
      %p228 = por %p226, %p227
      %s230 = sadd.s32 %s229, 1
      %p233 = scmp.eq.s32.totalorder %s27, 1
      %p234 = scmp.ne.s32.totalorder %s229, %s231
      %p235 = scmp.eq.s32.totalorder %s27, 0
      %p236 = por %p234, %p235
      %p237 = scmp.ne.s32.totalorder %s229, %s231
      %p238 = scmp.eq.s32.totalorder %s32, 1
      %p239 = por %p237, %p238
      %p240 = scmp.ne.s32.totalorder %s231, %s232
      %p241 = scmp.eq.s32.totalorder %s32, 0
      %p242 = por %p240, %p241
      %p243 = scmp.ne.s32.totalorder %s231, %s232
      %p244 = scmp.eq.s32.totalorder %s33, 1
      %p245 = por %p243, %p244
      %p247 = scmp.ne.s32.totalorder %s232, %s246
      %p248 = scmp.eq.s32.totalorder %s33, 0
      %p249 = por %p247, %p248
      %s250 = ssub.s32 %s27, %s34
      %p251 = scmp.eq.s32.totalorder %s250, 0
      %s253 = sadd.s32 %s252, 1
      %s254 = scalar_select %p251, %s252, %s253
      %p257 = pneg %p251
      %p258 = scmp.eq.s32.totalorder %s27, 1
      %p259 = por %p257, %p258
      %p260 = scmp.ne.s32.totalorder %s252, %s255
      %p261 = scmp.eq.s32.totalorder %s27, 0
      %p262 = por %p260, %p261
      %p263 = scmp.ne.s32.totalorder %s252, %s255
      %p264 = scmp.eq.s32.totalorder %s32, 1
      %p265 = por %p263, %p264
      %p266 = scmp.ne.s32.totalorder %s255, %s256
      %p267 = scmp.eq.s32.totalorder %s32, 0
      %p268 = por %p266, %p267
      %p269 = scmp.ne.s32.totalorder %s255, %s256
      %p270 = scmp.eq.s32.totalorder %s33, 1
      %p271 = por %p269, %p270
      %p273 = scmp.ne.s32.totalorder %s256, %s272
      %p274 = scmp.eq.s32.totalorder %s33, 0
      %p275 = por %p273, %p274
      %p276 = scmp.le.s32.totalorder 1, %s27
      %p277 = scmp.lt.s32.totalorder %s27, 3
      %p278 = pnand %p276, %p277
      %p279 = pneg %p278
      // Predicated region
      $region9: #{refine_module_forward.2} parent=5 // pred_check
        _
      $region10: #{refine_module_forward.2} parent=5 // pred_check_branch
        %281 = sbr.rel (%p278) target = $region12
      $region11: #{refine_module_forward.2} parent=5 // pred_region
        %s282 = ssub.s32 %s27, 1
        // Predicated region
        $region13: #{refine_module_forward.2} parent=11 // pred_check
          %p283 = pneg %p74
        $region14: #{refine_module_forward.2} parent=11 // pred_check_branch
          %285 = sbr.rel (%p283) target = $region16
        $region15: #{refine_module_forward.2} parent=11 // pred_region
          %s287 = ssub.s32 576, 576
          %288 = vsyncadd [#allocation8], %s287
          %s289 = sshll.u32 [#allocation7], 4
          %s290 = int_to_ptr.vmem [resolvable:$true] %s289
          %295 = dma.hbm_to_vmem [thread:$0]  %s1, 576, %s290, [#allocation8], 64, 64, 4
        $region16: #{refine_module_forward.2} parent=11 // pred_fallthru
          _
        // Predicated region
        $region17: #{refine_module_forward.2} parent=11 // pred_check
          %p296 = pneg %p95
        $region18: #{refine_module_forward.2} parent=11 // pred_check_branch
          %298 = sbr.rel (%p296) target = $region20
        $region19: #{refine_module_forward.2} parent=11 // pred_region
          %s300 = ssub.s32 128, 128
          %301 = vsyncadd [#allocation8], %s300
          %s303 = sshll.u32 [#allocation9], 4
          %s304 = int_to_ptr.vmem [resolvable:$true] %s303
          %306 = dma.hbm_to_vmem [thread:$0]  %s2, 128, %s304, [#allocation8]
        $region20: #{refine_module_forward.2} parent=11 // pred_fallthru
          _
        // Predicated region
        $region21: #{refine_module_forward.2} parent=11 // pred_check
          %p307 = pneg %p116
        $region22: #{refine_module_forward.2} parent=11 // pred_check_branch
          %309 = sbr.rel (%p307) target = $region24
        $region23: #{refine_module_forward.2} parent=11 // pred_region
          %s311 = ssub.s32 576, 576
          %312 = vsyncadd [#allocation11], %s311
          %s313 = sshll.u32 [#allocation10], 4
          %s314 = int_to_ptr.vmem [resolvable:$true] %s313
          %319 = dma.hbm_to_vmem [thread:$0]  %s3, 576, %s314, [#allocation11], 64, 64, 4
        $region24: #{refine_module_forward.2} parent=11 // pred_fallthru
          _
        // Predicated region
        $region25: #{refine_module_forward.2} parent=11 // pred_check
          %p320 = pneg %p137
        $region26: #{refine_module_forward.2} parent=11 // pred_check_branch
          %322 = sbr.rel (%p320) target = $region28
        $region27: #{refine_module_forward.2} parent=11 // pred_region
          %s324 = ssub.s32 128, 128
          %325 = vsyncadd [#allocation11], %s324
          %s327 = sshll.u32 [#allocation12], 4
          %s328 = int_to_ptr.vmem [resolvable:$true] %s327
          %330 = dma.hbm_to_vmem [thread:$0]  %s4, 128, %s328, [#allocation11]
        $region28: #{refine_module_forward.2} parent=11 // pred_fallthru
          _
        // Predicated region
        $region29: #{refine_module_forward.2} parent=11 // pred_check
          %p331 = pneg %p158
        $region30: #{refine_module_forward.2} parent=11 // pred_check_branch
          %333 = sbr.rel (%p331) target = $region32
        $region31: #{refine_module_forward.2} parent=11 // pred_region
          %s335 = ssub.s32 576, 576
          %336 = vsyncadd [#allocation14], %s335
          %s337 = sshll.u32 [#allocation13], 4
          %s338 = int_to_ptr.vmem [resolvable:$true] %s337
          %343 = dma.hbm_to_vmem [thread:$0]  %s5, 576, %s338, [#allocation14], 64, 64, 4
        $region32: #{refine_module_forward.2} parent=11 // pred_fallthru
          _
        // Predicated region
        $region33: #{refine_module_forward.2} parent=11 // pred_check
          %p344 = pneg %p179
        $region34: #{refine_module_forward.2} parent=11 // pred_check_branch
          %346 = sbr.rel (%p344) target = $region36
        $region35: #{refine_module_forward.2} parent=11 // pred_region
          %s348 = ssub.s32 128, 128
          %349 = vsyncadd [#allocation14], %s348
          %s351 = sshll.u32 [#allocation15], 4
          %s352 = int_to_ptr.vmem [resolvable:$true] %s351
          %354 = dma.hbm_to_vmem [thread:$0]  %s6, 128, %s352, [#allocation14]
        $region36: #{refine_module_forward.2} parent=11 // pred_fallthru
          _
        // Predicated region
        $region37: #{refine_module_forward.2} parent=11 // pred_check
          %p355 = pneg %p200
        $region38: #{refine_module_forward.2} parent=11 // pred_check_branch
          %357 = sbr.rel (%p355) target = $region40
        $region39: #{refine_module_forward.2} parent=11 // pred_region
          %s359 = ssub.s32 576, 576
          %360 = vsyncadd [#allocation17], %s359
          %s361 = sshll.u32 [#allocation16], 4
          %s362 = int_to_ptr.vmem [resolvable:$true] %s361
          %367 = dma.hbm_to_vmem [thread:$0]  %s7, 576, %s362, [#allocation17], 64, 64, 4
        $region40: #{refine_module_forward.2} parent=11 // pred_fallthru
          _
        // Predicated region
        $region41: #{refine_module_forward.2} parent=11 // pred_check
          %p368 = pneg %p221
        $region42: #{refine_module_forward.2} parent=11 // pred_check_branch
          %370 = sbr.rel (%p368) target = $region44
        $region43: #{refine_module_forward.2} parent=11 // pred_region
          %s372 = ssub.s32 128, 128
          %373 = vsyncadd [#allocation17], %s372
          %s375 = sshll.u32 [#allocation18], 4
          %s376 = int_to_ptr.vmem [resolvable:$true] %s375
          %378 = dma.hbm_to_vmem [thread:$0]  %s8, 128, %s376, [#allocation17]
        $region44: #{refine_module_forward.2} parent=11 // pred_fallthru
          _
        // Predicated region
        $region45: #{refine_module_forward.2} parent=11 // pred_check
          %p379 = pneg %p242
        $region46: #{refine_module_forward.2} parent=11 // pred_check_branch
          %381 = sbr.rel (%p379) target = $region48
        $region47: #{refine_module_forward.2} parent=11 // pred_region
          %s383 = ssub.s32 48, 48
          %384 = vsyncadd [#allocation20], %s383
          %s386 = sshll.u32 [#allocation19], 4
          %s387 = int_to_ptr.vmem [resolvable:$true] %s386
          %389 = dma.hbm_to_vmem [thread:$0]  %s9, 48, %s387, [#allocation20]
        $region48: #{refine_module_forward.2} parent=11 // pred_fallthru
          _
      $region12: #{refine_module_forward.2} parent=5 // pred_fallthru
        _
      %p390 = scmp.lt.s32.totalorder %s27, 2
      // Predicated region
      $region49: #{refine_module_forward.2} parent=5 // pred_check
        %p391 = pneg %p390
      $region50: #{refine_module_forward.2} parent=5 // pred_check_branch
        %393 = sbr.rel (%p391) target = $region52
      $region51: #{refine_module_forward.2} parent=5 // pred_region
        // Predicated region
        $region53: #{refine_module_forward.2} parent=51 // pred_check
          %p394 = pneg %p47
        $region54: #{refine_module_forward.2} parent=51 // pred_check_branch
          %396 = sbr.rel (%p394) target = $region56
        $region55: #{refine_module_forward.2} parent=51 // pred_region
          %s397 = sand.u32 %s37, 1
          %s398 = scalar_lea.sflag [#allocation5], %s397
          %s399 = sand.u32 %s37, 1
          %s400 = smul.addr %s399, 20
          %s401 = scalar_lea.vmem [#allocation4], %s400
          %s403 = ssub.s32 320, 320
          %404 = vsyncadd %s398, %s403
          %s405 = smul.addr %s27, 5
          %s406 = smul.addr %s405, 64
          %s407 = scalar_lea.hbm %s0, %s406
          %s409 = sshll.u32 %s401, 4
          %s410 = int_to_ptr.vmem [resolvable:$true] %s409
          %412 = dma.hbm_to_vmem [thread:$0]  %s407, 320, %s410, %s398
        $region56: #{refine_module_forward.2} parent=51 // pred_fallthru
          _
      $region52: #{refine_module_forward.2} parent=5 // pred_fallthru
        _
      %p413 = scmp.le.s32.totalorder 1, %s27
      %p414 = scmp.lt.s32.totalorder %s27, 3
      %p415 = pnand %p413, %p414
      %p416 = pneg %p415
      // Predicated region
      $region57: #{refine_module_forward.2} parent=5 // pred_check
        _
      $region58: #{refine_module_forward.2} parent=5 // pred_check_branch
        %418 = sbr.rel (%p415) target = $region60
      $region59: #{refine_module_forward.2} parent=5 // pred_region
        %s419 = ssub.s32 %s27, 1
        %s420 = sand.u32 %s40, 1
        %s421 = scalar_lea.sflag [#allocation5], %s420
        %s422 = sand.u32 %s40, 1
        %s423 = smul.addr %s422, 20
        %s424 = scalar_lea.vmem [#allocation4], %s423
        // Predicated region
        $region61: #{refine_module_forward.2} parent=59 // pred_check
          %p425 = pneg %p53
        $region62: #{refine_module_forward.2} parent=59 // pred_check_branch
          %427 = sbr.rel (%p425) target = $region64
        $region63: #{refine_module_forward.2} parent=59 // pred_region
          %428 = dma.done %s421, 320
        $region64: #{refine_module_forward.2} parent=59 // pred_fallthru
          _
        // Predicated region
        $region65: #{refine_module_forward.2} parent=59 // pred_check
          %p429 = pneg %p74
        $region66: #{refine_module_forward.2} parent=59 // pred_check_branch
          %431 = sbr.rel (%p429) target = $region68
        $region67: #{refine_module_forward.2} parent=59 // pred_region
          %432 = dma.done [#allocation8], 576
        $region68: #{refine_module_forward.2} parent=59 // pred_fallthru
          _
        // Predicated region
        $region69: #{refine_module_forward.2} parent=59 // pred_check
          %p433 = pneg %p95
        $region70: #{refine_module_forward.2} parent=59 // pred_check_branch
          %435 = sbr.rel (%p433) target = $region72
        $region71: #{refine_module_forward.2} parent=59 // pred_region
          %436 = dma.done [#allocation8], 128
        $region72: #{refine_module_forward.2} parent=59 // pred_fallthru
          _
        // Predicated region
        $region73: #{refine_module_forward.2} parent=59 // pred_check
          %p437 = pneg %p116
        $region74: #{refine_module_forward.2} parent=59 // pred_check_branch
          %439 = sbr.rel (%p437) target = $region76
        $region75: #{refine_module_forward.2} parent=59 // pred_region
          %440 = dma.done [#allocation11], 576
        $region76: #{refine_module_forward.2} parent=59 // pred_fallthru
          _
        // Predicated region
        $region77: #{refine_module_forward.2} parent=59 // pred_check
          %p441 = pneg %p137
        $region78: #{refine_module_forward.2} parent=59 // pred_check_branch
          %443 = sbr.rel (%p441) target = $region80
        $region79: #{refine_module_forward.2} parent=59 // pred_region
          %444 = dma.done [#allocation11], 128
        $region80: #{refine_module_forward.2} parent=59 // pred_fallthru
          _
        // Predicated region
        $region81: #{refine_module_forward.2} parent=59 // pred_check
          %p445 = pneg %p158
        $region82: #{refine_module_forward.2} parent=59 // pred_check_branch
          %447 = sbr.rel (%p445) target = $region84
        $region83: #{refine_module_forward.2} parent=59 // pred_region
          %448 = dma.done [#allocation14], 576
        $region84: #{refine_module_forward.2} parent=59 // pred_fallthru
          _
        // Predicated region
        $region85: #{refine_module_forward.2} parent=59 // pred_check
          %p449 = pneg %p179
        $region86: #{refine_module_forward.2} parent=59 // pred_check_branch
          %451 = sbr.rel (%p449) target = $region88
        $region87: #{refine_module_forward.2} parent=59 // pred_region
          %452 = dma.done [#allocation14], 128
        $region88: #{refine_module_forward.2} parent=59 // pred_fallthru
          _
        // Predicated region
        $region89: #{refine_module_forward.2} parent=59 // pred_check
          %p453 = pneg %p200
        $region90: #{refine_module_forward.2} parent=59 // pred_check_branch
          %455 = sbr.rel (%p453) target = $region92
        $region91: #{refine_module_forward.2} parent=59 // pred_region
          %456 = dma.done [#allocation17], 576
        $region92: #{refine_module_forward.2} parent=59 // pred_fallthru
          _
        // Predicated region
        $region93: #{refine_module_forward.2} parent=59 // pred_check
          %p457 = pneg %p221
        $region94: #{refine_module_forward.2} parent=59 // pred_check_branch
          %459 = sbr.rel (%p457) target = $region96
        $region95: #{refine_module_forward.2} parent=59 // pred_region
          %460 = dma.done [#allocation17], 128
        $region96: #{refine_module_forward.2} parent=59 // pred_fallthru
          _
        // Predicated region
        $region97: #{refine_module_forward.2} parent=59 // pred_check
          %p461 = pneg %p242
        $region98: #{refine_module_forward.2} parent=59 // pred_check_branch
          %463 = sbr.rel (%p461) target = $region100
        $region99: #{refine_module_forward.2} parent=59 // pred_region
          %464 = dma.done [#allocation20], 48
        $region100: #{refine_module_forward.2} parent=59 // pred_fallthru
          _
        %s465 = sand.u32 %s40, 1
        %s466 = scalar_lea.sflag [#allocation5], %s465
        %s467 = sand.u32 %s40, 1
        %s468 = smul.addr %s467, 20
        %s469 = scalar_lea.vmem [#allocation4], %s468
        %p470 = pneg %p53
        %p471 = pneg %p50
        %p472 = pneg %p74
        %p473 = pneg %p71
        %p474 = pneg %p95
        %p475 = pneg %p92
        %p476 = pneg %p116
        %p477 = pneg %p113
        %p478 = pneg %p137
        %p479 = pneg %p134
        %p480 = pneg %p158
        %p481 = pneg %p155
        %p482 = pneg %p179
        %p483 = pneg %p176
        %p484 = pneg %p200
        %p485 = pneg %p197
        %p486 = pneg %p221
        %p487 = pneg %p218
        %p488 = pneg %p242
        %p489 = pneg %p239
        %p490 = pneg %p268
        %p491 = pneg %p265
        %s492 = sand.u32 %s255, 1
        %s493 = scalar_lea.sflag [#allocation6], %s492
        %s494 = sand.u32 %s255, 1
        %s495 = smul.addr %s494, 24
        %s496 = scalar_lea.vmem [#allocation21], %s495
        %498 = vst [vmem:[#allocation2] sm:$0xf] 0
        %499 = vst [vmem:[#allocation2 + $0x10] sm:$0xf] 0
        %500 = vst [vmem:[#allocation3] sm:$0xf] 0
        %501 = vst [vmem:[#allocation3 + $0x10] sm:$0xf] 0
        %v502 = vld [vmem:[#allocation19] sm:$0x7]
        %v504 = vlaneseq
        %v505 = vshrl.u32 %v504, 7
        %v506 = vsub.s32 0, %v505
        %v507 = vrot.slane %v502, %v506
        %v508 = vlaneseq
        %v509 = vshrl.u32 %v508, 7
        %v510 = vsub.s32 1, %v509
        %v511 = vrot.slane %v502, %v510
        %v512 = vlaneseq
        %v513 = vshrl.u32 %v512, 7
        %v514 = vsub.s32 2, %v513
        %v515 = vrot.slane %v502, %v514
        %v519 = vld [vmem:[%s424] sm:$0xff]
        %v520 = vld [vmem:[%s424 + $0x8] sm:$0xff]
        %v521 = vld [vmem:[#allocation7] sm:$0xf]
        %s522 = scalar_lea.vmem [#allocation7], 4
        %v523 = vld [vmem:[%s522] sm:$0xf]
        %v526 = vunpack.c.l.b16 %v519
        %v527 = vunpack.c.h.b16 %v519
        %v528 = vunpack.c.l.b16 %v520
        %v529 = vunpack.c.h.b16 %v520
        %v530 = vpack.c.b16 %v526, %v526
        %v531 = vpack.c.b16 %v527, %v527
        %v532 = vpack.c.b16 %v528, %v528
        %v533 = vpack.c.b16 %v529, %v529
        %534 = vrot.lane.b32.xlu0 %v530, 18
        %v535 = vpop.permute.xlu0 %534
        %536 = vrot.lane.b32.xlu0 %v531, 18
        %v537 = vpop.permute.xlu0 %536
        %538 = vrot.lane.b32.xlu0 %v532, 18
        %v539 = vpop.permute.xlu0 %538
        %540 = vrot.lane.b32.xlu0 %v533, 18
        %v541 = vpop.permute.xlu0 %540
        %vm542 = vcmask 146432
        %v543 = vsel %vm542, %v535, %v537
        %v544 = vsel %vm542, %v537, %v539
        %v545 = vsel %vm542, %v539, %v541
        %vm546 = vcmask 64512
        %v548 = vsel %vm546, %v523, 0
        %vm550 = vcmask 1043456
        %v552 = vsel %vm550, %v543, 0
        %v555 = vsel %vm550, %v544, 0
        %v558 = vsel %vm550, %v545, 0
        %560 = vmatprep.subr.bf16.mxu0 %v555
        %561 = vmatpush1.bf16.msra.mxu0 %v552
        %562 = vmatprep.subr.bf16.mxu0 0
        %563 = vmatpush1.bf16.msra.mxu0 0
        %564 = vmatprep.subr.bf16.mxu0 0
        %565 = vmatpush1.bf16.msra.mxu0 0
        %566 = vmatprep.subr.bf16.mxu0 0
        %567 = vmatpush1.bf16.msra.mxu0 0
        %568 = vmatprep.subr.bf16.mxu0 0
        %569 = vmatpush1.bf16.msra.mxu0 0
        %570 = vmatprep.subr.bf16.mxu0 0
        %571 = vmatpush1.bf16.msra.mxu0 0
        %572 = vmatprep.subr.bf16.mxu0 0
        %573 = vmatpush1.bf16.msra.mxu0 0
        %574 = vmatprep.subr.bf16.mxu0 0
        %575 = vmatpush1.bf16.msra.mxu0 0
        %576 = vmatprep.subr.bf16.mxu0 0
        %577 = vmatpush1.bf16.msra.mxu0 0
        %578 = vmatprep.subr.bf16.mxu0 0
        %579 = vmatpush1.bf16.msra.mxu0 0
        %580 = vmatprep.subr.bf16.mxu0 0
        %581 = vmatpush1.bf16.msra.mxu0 0
        %582 = vmatprep.subr.bf16.mxu0 0
        %583 = vmatpush1.bf16.msra.mxu0 0
        %584 = vmatprep.subr.bf16.mxu0 0
        %585 = vmatpush1.bf16.msra.mxu0 0
        %586 = vmatprep.subr.bf16.mxu0 0
        %587 = vmatpush1.bf16.msra.mxu0 0
        %588 = vmatprep.subr.bf16.mxu0 0
        %589 = vmatpush1.bf16.msra.mxu0 0
        %590 = vmatprep.subr.bf16.mxu0 0
        %591 = vmatpush1.bf16.msra.mxu0 0
        %592 = vmatprep.mubr.bf16.mxu0 0
        %593 = vmatmul.mubr.bf16.gmra.mrb[0].mxu0 %v548
        %v594 = vpop.f32.mrb[0].mxu0
        %v595 = vadd.f32 0.0, %v594
        %v596 = vpop.f32.mrb[0].mxu0
        %v597 = vadd.f32 0.0, %v596
        %v598 = vpop.f32.mrb[0].mxu0
        %v599 = vpop.f32.mrb[0].mxu0
        %600 = vdwg.mxu0
        %601 = vmatprep.subr.bf16.mxu0 0
        %602 = vmatpush1.bf16.msra.mxu0 %v558
        %603 = vmatprep.subr.bf16.mxu0 0
        %604 = vmatpush1.bf16.msra.mxu0 0
        %605 = vmatprep.subr.bf16.mxu0 0
        %606 = vmatpush1.bf16.msra.mxu0 0
        %607 = vmatprep.subr.bf16.mxu0 0
        %608 = vmatpush1.bf16.msra.mxu0 0
        %609 = vmatprep.subr.bf16.mxu0 0
        %610 = vmatpush1.bf16.msra.mxu0 0
        %611 = vmatprep.subr.bf16.mxu0 0
        %612 = vmatpush1.bf16.msra.mxu0 0
        %613 = vmatprep.subr.bf16.mxu0 0
        %614 = vmatpush1.bf16.msra.mxu0 0
        %615 = vmatprep.subr.bf16.mxu0 0
        %616 = vmatpush1.bf16.msra.mxu0 0
        %617 = vmatprep.subr.bf16.mxu0 0
        %618 = vmatpush1.bf16.msra.mxu0 0
        %619 = vmatprep.subr.bf16.mxu0 0
        %620 = vmatpush1.bf16.msra.mxu0 0
        %621 = vmatprep.subr.bf16.mxu0 0
        %622 = vmatpush1.bf16.msra.mxu0 0
        %623 = vmatprep.subr.bf16.mxu0 0
        %624 = vmatpush1.bf16.msra.mxu0 0
        %625 = vmatprep.subr.bf16.mxu0 0
        %626 = vmatpush1.bf16.msra.mxu0 0
        %627 = vmatprep.subr.bf16.mxu0 0
        %628 = vmatpush1.bf16.msra.mxu0 0
        %629 = vmatprep.subr.bf16.mxu0 0
        %630 = vmatpush1.bf16.msra.mxu0 0
        %631 = vmatprep.subr.bf16.mxu0 0
        %632 = vmatpush1.bf16.msra.mxu0 0
        %633 = vmatprep.mubr.bf16.mxu0 0
        %634 = vmatmul.mubr.bf16.gmra.mrb[0].mxu0 %v548
        %v635 = vpop.f32.mrb[0].mxu0
        %v636 = vadd.f32 0.0, %v635
        %v637 = vpop.f32.mrb[0].mxu0
        %v638 = vpop.f32.mrb[0].mxu0
        %v639 = vpop.f32.mrb[0].mxu0
        %640 = vdwg.mxu0
        %641 = vrot.lane.b32.xlu0 %v530, 19
        %v642 = vpop.permute.xlu0 %641
        %643 = vrot.lane.b32.xlu0 %v531, 19
        %v644 = vpop.permute.xlu0 %643
        %645 = vrot.lane.b32.xlu0 %v532, 19
        %v646 = vpop.permute.xlu0 %645
        %647 = vrot.lane.b32.xlu0 %v533, 19
        %v648 = vpop.permute.xlu0 %647
        %vm649 = vcmask 154624
        %v650 = vsel %vm649, %v642, %v644
        %v651 = vsel %vm649, %v644, %v646
        %v652 = vsel %vm649, %v646, %v648
        %v654 = vsel %vm546, %v521, 0
        %v657 = vsel %vm550, %v650, 0
        %v660 = vsel %vm550, %v651, 0
        %v663 = vsel %vm550, %v652, 0
        %665 = vmatprep.subr.bf16.mxu0 %v660
        %666 = vmatpush1.bf16.msra.mxu0 %v657
        %667 = vmatprep.subr.bf16.mxu0 0
        %668 = vmatpush1.bf16.msra.mxu0 0
        %669 = vmatprep.subr.bf16.mxu0 0
        %670 = vmatpush1.bf16.msra.mxu0 0
        %671 = vmatprep.subr.bf16.mxu0 0
        %672 = vmatpush1.bf16.msra.mxu0 0
        %673 = vmatprep.subr.bf16.mxu0 0
        %674 = vmatpush1.bf16.msra.mxu0 0
        %675 = vmatprep.subr.bf16.mxu0 0
        %676 = vmatpush1.bf16.msra.mxu0 0
        %677 = vmatprep.subr.bf16.mxu0 0
        %678 = vmatpush1.bf16.msra.mxu0 0
        %679 = vmatprep.subr.bf16.mxu0 0
        %680 = vmatpush1.bf16.msra.mxu0 0
        %681 = vmatprep.subr.bf16.mxu0 0
        %682 = vmatpush1.bf16.msra.mxu0 0
        %683 = vmatprep.subr.bf16.mxu0 0
        %684 = vmatpush1.bf16.msra.mxu0 0
        %685 = vmatprep.subr.bf16.mxu0 0
        %686 = vmatpush1.bf16.msra.mxu0 0
        %687 = vmatprep.subr.bf16.mxu0 0
        %688 = vmatpush1.bf16.msra.mxu0 0
        %689 = vmatprep.subr.bf16.mxu0 0
        %690 = vmatpush1.bf16.msra.mxu0 0
        %691 = vmatprep.subr.bf16.mxu0 0
        %692 = vmatpush1.bf16.msra.mxu0 0
        %693 = vmatprep.subr.bf16.mxu0 0
        %694 = vmatpush1.bf16.msra.mxu0 0
        %695 = vmatprep.subr.bf16.mxu0 0
        %696 = vmatpush1.bf16.msra.mxu0 0
        %697 = vmatprep.mubr.bf16.mxu0 0
        %698 = vmatmul.mubr.bf16.gmra.mrb[0].mxu0 %v654
        %v699 = vpop.f32.mrb[0].mxu0
        %v700 = vadd.f32 %v595, %v699
        %v701 = vpop.f32.mrb[0].mxu0
        %v702 = vadd.f32 %v597, %v701
        %v703 = vpop.f32.mrb[0].mxu0
        %v704 = vpop.f32.mrb[0].mxu0
        %705 = vdwg.mxu0
        %706 = vmatprep.subr.bf16.mxu0 0
        %707 = vmatpush1.bf16.msra.mxu0 %v663
        %708 = vmatprep.subr.bf16.mxu0 0
        %709 = vmatpush1.bf16.msra.mxu0 0
        %710 = vmatprep.subr.bf16.mxu0 0
        %711 = vmatpush1.bf16.msra.mxu0 0
        %712 = vmatprep.subr.bf16.mxu0 0
        %713 = vmatpush1.bf16.msra.mxu0 0
        %714 = vmatprep.subr.bf16.mxu0 0
        %715 = vmatpush1.bf16.msra.mxu0 0
        %716 = vmatprep.subr.bf16.mxu0 0
        %717 = vmatpush1.bf16.msra.mxu0 0
        %718 = vmatprep.subr.bf16.mxu0 0
        %719 = vmatpush1.bf16.msra.mxu0 0
        %720 = vmatprep.subr.bf16.mxu0 0
        %721 = vmatpush1.bf16.msra.mxu0 0
        %722 = vmatprep.subr.bf16.mxu0 0
        %723 = vmatpush1.bf16.msra.mxu0 0
        %724 = vmatprep.subr.bf16.mxu0 0
        %725 = vmatpush1.bf16.msra.mxu0 0
        %726 = vmatprep.subr.bf16.mxu0 0
        %727 = vmatpush1.bf16.msra.mxu0 0
        %728 = vmatprep.subr.bf16.mxu0 0
        %729 = vmatpush1.bf16.msra.mxu0 0
        %730 = vmatprep.subr.bf16.mxu0 0
        %731 = vmatpush1.bf16.msra.mxu0 0
        %732 = vmatprep.subr.bf16.mxu0 0
        %733 = vmatpush1.bf16.msra.mxu0 0
        %734 = vmatprep.subr.bf16.mxu0 0
        %735 = vmatpush1.bf16.msra.mxu0 0
        %736 = vmatprep.subr.bf16.mxu0 0
        %737 = vmatpush1.bf16.msra.mxu0 0
        %738 = vmatprep.mubr.bf16.mxu0 0
        %739 = vmatmul.mubr.bf16.gmra.mrb[0].mxu0 %v654
        %v740 = vpop.f32.mrb[0].mxu0
        %v741 = vadd.f32 %v636, %v740
        %v742 = vpop.f32.mrb[0].mxu0
        %v743 = vpop.f32.mrb[0].mxu0
        %v744 = vpop.f32.mrb[0].mxu0
        %745 = vdwg.mxu0
        %s746 = scalar_lea.vmem [#allocation7], 8
        %v747 = vld [vmem:[%s746] sm:$0xf]
        %748 = vrot.lane.b32.xlu0 %v530, 17
        %v749 = vpop.permute.xlu0 %748
        %750 = vrot.lane.b32.xlu0 %v531, 17
        %v751 = vpop.permute.xlu0 %750
        %752 = vrot.lane.b32.xlu0 %v532, 17
        %v753 = vpop.permute.xlu0 %752
        %754 = vrot.lane.b32.xlu0 %v533, 17
        %v755 = vpop.permute.xlu0 %754
        %vm756 = vcmask 138240
        %v757 = vsel %vm756, %v749, %v751
        %v758 = vsel %vm756, %v751, %v753
        %v759 = vsel %vm756, %v753, %v755
        %v761 = vsel %vm546, %v747, 0
        %v764 = vsel %vm550, %v757, 0
        %v767 = vsel %vm550, %v758, 0
        %v770 = vsel %vm550, %v759, 0
        %772 = vmatprep.subr.bf16.mxu0 %v767
        %773 = vmatpush1.bf16.msra.mxu0 %v764
        %774 = vmatprep.subr.bf16.mxu0 0
        %775 = vmatpush1.bf16.msra.mxu0 0
        %776 = vmatprep.subr.bf16.mxu0 0
        %777 = vmatpush1.bf16.msra.mxu0 0
        %778 = vmatprep.subr.bf16.mxu0 0
        %779 = vmatpush1.bf16.msra.mxu0 0
        %780 = vmatprep.subr.bf16.mxu0 0
        %781 = vmatpush1.bf16.msra.mxu0 0
        %782 = vmatprep.subr.bf16.mxu0 0
        %783 = vmatpush1.bf16.msra.mxu0 0
        %784 = vmatprep.subr.bf16.mxu0 0
        %785 = vmatpush1.bf16.msra.mxu0 0
        %786 = vmatprep.subr.bf16.mxu0 0
        %787 = vmatpush1.bf16.msra.mxu0 0
        %788 = vmatprep.subr.bf16.mxu0 0
        %789 = vmatpush1.bf16.msra.mxu0 0
        %790 = vmatprep.subr.bf16.mxu0 0
        %791 = vmatpush1.bf16.msra.mxu0 0
        %792 = vmatprep.subr.bf16.mxu0 0
        %793 = vmatpush1.bf16.msra.mxu0 0
        %794 = vmatprep.subr.bf16.mxu0 0
        %795 = vmatpush1.bf16.msra.mxu0 0
        %796 = vmatprep.subr.bf16.mxu0 0
        %797 = vmatpush1.bf16.msra.mxu0 0
        %798 = vmatprep.subr.bf16.mxu0 0
        %799 = vmatpush1.bf16.msra.mxu0 0
        %800 = vmatprep.subr.bf16.mxu0 0
        %801 = vmatpush1.bf16.msra.mxu0 0
        %802 = vmatprep.subr.bf16.mxu0 0
        %803 = vmatpush1.bf16.msra.mxu0 0
        %804 = vmatprep.mubr.bf16.mxu0 0
        %805 = vmatmul.mubr.bf16.gmra.mrb[0].mxu0 %v761
        %v806 = vpop.f32.mrb[0].mxu0
        %v807 = vadd.f32 0.0, %v806
        %v808 = vpop.f32.mrb[0].mxu0
        %v809 = vadd.f32 0.0, %v808
        %v810 = vpop.f32.mrb[0].mxu0
        %v811 = vpop.f32.mrb[0].mxu0
        %812 = vdwg.mxu0
        %813 = vmatprep.subr.bf16.mxu0 0
        %814 = vmatpush1.bf16.msra.mxu0 %v770
        %815 = vmatprep.subr.bf16.mxu0 0
        %816 = vmatpush1.bf16.msra.mxu0 0
        %817 = vmatprep.subr.bf16.mxu0 0
        %818 = vmatpush1.bf16.msra.mxu0 0
        %819 = vmatprep.subr.bf16.mxu0 0
        %820 = vmatpush1.bf16.msra.mxu0 0
        %821 = vmatprep.subr.bf16.mxu0 0
        %822 = vmatpush1.bf16.msra.mxu0 0
        %823 = vmatprep.subr.bf16.mxu0 0
        %824 = vmatpush1.bf16.msra.mxu0 0
        %825 = vmatprep.subr.bf16.mxu0 0
        %826 = vmatpush1.bf16.msra.mxu0 0
        %827 = vmatprep.subr.bf16.mxu0 0
        %828 = vmatpush1.bf16.msra.mxu0 0
        %829 = vmatprep.subr.bf16.mxu0 0
        %830 = vmatpush1.bf16.msra.mxu0 0
        %831 = vmatprep.subr.bf16.mxu0 0
        %832 = vmatpush1.bf16.msra.mxu0 0
        %833 = vmatprep.subr.bf16.mxu0 0
        %834 = vmatpush1.bf16.msra.mxu0 0
        %835 = vmatprep.subr.bf16.mxu0 0
        %836 = vmatpush1.bf16.msra.mxu0 0
        %837 = vmatprep.subr.bf16.mxu0 0
        %838 = vmatpush1.bf16.msra.mxu0 0
        %839 = vmatprep.subr.bf16.mxu0 0
        %840 = vmatpush1.bf16.msra.mxu0 0
        %841 = vmatprep.subr.bf16.mxu0 0
        %842 = vmatpush1.bf16.msra.mxu0 0
        %843 = vmatprep.subr.bf16.mxu0 0
        %844 = vmatpush1.bf16.msra.mxu0 0
        %845 = vmatprep.mubr.bf16.mxu0 0
        %846 = vmatmul.mubr.bf16.gmra.mrb[0].mxu0 %v761
        %v847 = vpop.f32.mrb[0].mxu0
        %v848 = vadd.f32 0.0, %v847
        %v849 = vpop.f32.mrb[0].mxu0
        %v850 = vpop.f32.mrb[0].mxu0
        %v851 = vpop.f32.mrb[0].mxu0
        %852 = vdwg.mxu0
        %v853 = vadd.f32 %v700, %v807
        %v854 = vadd.f32 %v702, %v809
        %v855 = vadd.f32 %v741, %v848
        %s856 = scalar_lea.vmem [#allocation7], 12
        %v857 = vld [vmem:[%s856] sm:$0xf]
        %858 = vrot.lane.b32.xlu0 %v530, 1
        %v859 = vpop.permute.xlu0 %858
        %860 = vrot.lane.b32.xlu0 %v531, 1
        %v861 = vpop.permute.xlu0 %860
        %862 = vrot.lane.b32.xlu0 %v532, 1
        %v863 = vpop.permute.xlu0 %862
        %864 = vrot.lane.b32.xlu0 %v533, 1
        %v865 = vpop.permute.xlu0 %864
        %vm866 = vcmask 7168
        %v867 = vsel %vm866, %v859, %v861
        %v868 = vsel %vm866, %v861, %v863
        %v869 = vsel %vm866, %v863, %v865
        %v871 = vsel %vm546, %v857, 0
        %v874 = vsel %vm550, %v867, 0
        %v877 = vsel %vm550, %v868, 0
        %v880 = vsel %vm550, %v869, 0
        %882 = vmatprep.subr.bf16.mxu0 %v877
        %883 = vmatpush1.bf16.msra.mxu0 %v874
        %884 = vmatprep.subr.bf16.mxu0 0
        %885 = vmatpush1.bf16.msra.mxu0 0
        %886 = vmatprep.subr.bf16.mxu0 0
        %887 = vmatpush1.bf16.msra.mxu0 0
        %888 = vmatprep.subr.bf16.mxu0 0
        %889 = vmatpush1.bf16.msra.mxu0 0
        %890 = vmatprep.subr.bf16.mxu0 0
        %891 = vmatpush1.bf16.msra.mxu0 0
        %892 = vmatprep.subr.bf16.mxu0 0
        %893 = vmatpush1.bf16.msra.mxu0 0
        %894 = vmatprep.subr.bf16.mxu0 0
        %895 = vmatpush1.bf16.msra.mxu0 0
        %896 = vmatprep.subr.bf16.mxu0 0
        %897 = vmatpush1.bf16.msra.mxu0 0
        %898 = vmatprep.subr.bf16.mxu0 0
        %899 = vmatpush1.bf16.msra.mxu0 0
        %900 = vmatprep.subr.bf16.mxu0 0
        %901 = vmatpush1.bf16.msra.mxu0 0
        %902 = vmatprep.subr.bf16.mxu0 0
        %903 = vmatpush1.bf16.msra.mxu0 0
        %904 = vmatprep.subr.bf16.mxu0 0
        %905 = vmatpush1.bf16.msra.mxu0 0
        %906 = vmatprep.subr.bf16.mxu0 0
        %907 = vmatpush1.bf16.msra.mxu0 0
        %908 = vmatprep.subr.bf16.mxu0 0
        %909 = vmatpush1.bf16.msra.mxu0 0
        %910 = vmatprep.subr.bf16.mxu0 0
        %911 = vmatpush1.bf16.msra.mxu0 0
        %912 = vmatprep.subr.bf16.mxu0 0
        %913 = vmatpush1.bf16.msra.mxu0 0
        %914 = vmatprep.mubr.bf16.mxu0 0
        %915 = vmatmul.mubr.bf16.gmra.mrb[0].mxu0 %v871
        %v916 = vpop.f32.mrb[0].mxu0
        %v917 = vadd.f32 0.0, %v916
        %v918 = vpop.f32.mrb[0].mxu0
        %v919 = vadd.f32 0.0, %v918
        %v920 = vpop.f32.mrb[0].mxu0
        %v921 = vpop.f32.mrb[0].mxu0
        %922 = vdwg.mxu0
        %923 = vmatprep.subr.bf16.mxu0 0
        %924 = vmatpush1.bf16.msra.mxu0 %v880
        %925 = vmatprep.subr.bf16.mxu0 0
        %926 = vmatpush1.bf16.msra.mxu0 0
        %927 = vmatprep.subr.bf16.mxu0 0
        %928 = vmatpush1.bf16.msra.mxu0 0
        %929 = vmatprep.subr.bf16.mxu0 0
        %930 = vmatpush1.bf16.msra.mxu0 0
        %931 = vmatprep.subr.bf16.mxu0 0
        %932 = vmatpush1.bf16.msra.mxu0 0
        %933 = vmatprep.subr.bf16.mxu0 0
        %934 = vmatpush1.bf16.msra.mxu0 0
        %935 = vmatprep.subr.bf16.mxu0 0
        %936 = vmatpush1.bf16.msra.mxu0 0
        %937 = vmatprep.subr.bf16.mxu0 0
        %938 = vmatpush1.bf16.msra.mxu0 0
        %939 = vmatprep.subr.bf16.mxu0 0
        %940 = vmatpush1.bf16.msra.mxu0 0
        %941 = vmatprep.subr.bf16.mxu0 0
        %942 = vmatpush1.bf16.msra.mxu0 0
        %943 = vmatprep.subr.bf16.mxu0 0
        %944 = vmatpush1.bf16.msra.mxu0 0
        %945 = vmatprep.subr.bf16.mxu0 0
        %946 = vmatpush1.bf16.msra.mxu0 0
        %947 = vmatprep.subr.bf16.mxu0 0
        %948 = vmatpush1.bf16.msra.mxu0 0
        %949 = vmatprep.subr.bf16.mxu0 0
        %950 = vmatpush1.bf16.msra.mxu0 0
        %951 = vmatprep.subr.bf16.mxu0 0
        %952 = vmatpush1.bf16.msra.mxu0 0
        %953 = vmatprep.subr.bf16.mxu0 0
        %954 = vmatpush1.bf16.msra.mxu0 0
        %955 = vmatprep.mubr.bf16.mxu0 0
        %956 = vmatmul.mubr.bf16.gmra.mrb[0].mxu0 %v871
        %v957 = vpop.f32.mrb[0].mxu0
        %v958 = vadd.f32 0.0, %v957
        %v959 = vpop.f32.mrb[0].mxu0
        %v960 = vpop.f32.mrb[0].mxu0
        %v961 = vpop.f32.mrb[0].mxu0
        %962 = vdwg.mxu0
        %v963 = vadd.f32 %v853, %v917
        %v964 = vadd.f32 %v854, %v919
        %v965 = vadd.f32 %v855, %v958
        %v966 = vld [vmem:[%s424 + $0x4] sm:$0xff]
        %v967 = vld [vmem:[%s424 + $0xc] sm:$0xf]
        %s968 = scalar_lea.vmem [#allocation7], 16
        %v969 = vld [vmem:[%s968] sm:$0xf]
        %v972 = vunpack.c.l.b16 %v966
        %v973 = vunpack.c.h.b16 %v966
        %v974 = vunpack.c.l.b16 %v967
        %v975 = vpack.c.b16 %v972, %v972
        %v976 = vpack.c.b16 %v973, %v973
        %v977 = vpack.c.b16 %v974, %v974
        %v979 = vsel %vm546, %v969, 0
        %v982 = vsel %vm550, %v975, 0
        %v985 = vsel %vm550, %v976, 0
        %v988 = vsel %vm550, %v977, 0
        %990 = vmatprep.subr.bf16.mxu0 %v985
        %991 = vmatpush1.bf16.msra.mxu0 %v982
        %992 = vmatprep.subr.bf16.mxu0 0
        %993 = vmatpush1.bf16.msra.mxu0 0
        %994 = vmatprep.subr.bf16.mxu0 0
        %995 = vmatpush1.bf16.msra.mxu0 0
        %996 = vmatprep.subr.bf16.mxu0 0
        %997 = vmatpush1.bf16.msra.mxu0 0
        %998 = vmatprep.subr.bf16.mxu0 0
        %999 = vmatpush1.bf16.msra.mxu0 0
        %1000 = vmatprep.subr.bf16.mxu0 0
        %1001 = vmatpush1.bf16.msra.mxu0 0
        %1002 = vmatprep.subr.bf16.mxu0 0
        %1003 = vmatpush1.bf16.msra.mxu0 0
        %1004 = vmatprep.subr.bf16.mxu0 0
        %1005 = vmatpush1.bf16.msra.mxu0 0
        %1006 = vmatprep.subr.bf16.mxu0 0
        %1007 = vmatpush1.bf16.msra.mxu0 0
        %1008 = vmatprep.subr.bf16.mxu0 0
        %1009 = vmatpush1.bf16.msra.mxu0 0
        %1010 = vmatprep.subr.bf16.mxu0 0
        %1011 = vmatpush1.bf16.msra.mxu0 0
        %1012 = vmatprep.subr.bf16.mxu0 0
        %1013 = vmatpush1.bf16.msra.mxu0 0
        %1014 = vmatprep.subr.bf16.mxu0 0
        %1015 = vmatpush1.bf16.msra.mxu0 0
        %1016 = vmatprep.subr.bf16.mxu0 0
        %1017 = vmatpush1.bf16.msra.mxu0 0
        %1018 = vmatprep.subr.bf16.mxu0 0
        %1019 = vmatpush1.bf16.msra.mxu0 0
        %1020 = vmatprep.subr.bf16.mxu0 0
        %1021 = vmatpush1.bf16.msra.mxu0 0
        %1022 = vmatprep.mubr.bf16.mxu0 0
        %1023 = vmatmul.mubr.bf16.gmra.mrb[0].mxu0 %v979
        %v1024 = vpop.f32.mrb[0].mxu0
        %v1025 = vadd.f32 0.0, %v1024
        %v1026 = vpop.f32.mrb[0].mxu0
        %v1027 = vadd.f32 0.0, %v1026
        %v1028 = vpop.f32.mrb[0].mxu0
        %v1029 = vpop.f32.mrb[0].mxu0
        %1030 = vdwg.mxu0
        %1031 = vmatprep.subr.bf16.mxu0 0
        %1032 = vmatpush1.bf16.msra.mxu0 %v988
        %1033 = vmatprep.subr.bf16.mxu0 0
        %1034 = vmatpush1.bf16.msra.mxu0 0
        %1035 = vmatprep.subr.bf16.mxu0 0
        %1036 = vmatpush1.bf16.msra.mxu0 0
        %1037 = vmatprep.subr.bf16.mxu0 0
        %1038 = vmatpush1.bf16.msra.mxu0 0
        %1039 = vmatprep.subr.bf16.mxu0 0
        %1040 = vmatpush1.bf16.msra.mxu0 0
        %1041 = vmatprep.subr.bf16.mxu0 0
        %1042 = vmatpush1.bf16.msra.mxu0 0
        %1043 = vmatprep.subr.bf16.mxu0 0
        %1044 = vmatpush1.bf16.msra.mxu0 0
        %1045 = vmatprep.subr.bf16.mxu0 0
        %1046 = vmatpush1.bf16.msra.mxu0 0
        %1047 = vmatprep.subr.bf16.mxu0 0
        %1048 = vmatpush1.bf16.msra.mxu0 0
        %1049 = vmatprep.subr.bf16.mxu0 0
        %1050 = vmatpush1.bf16.msra.mxu0 0
        %1051 = vmatprep.subr.bf16.mxu0 0
        %1052 = vmatpush1.bf16.msra.mxu0 0
        %1053 = vmatprep.subr.bf16.mxu0 0
        %1054 = vmatpush1.bf16.msra.mxu0 0
        %1055 = vmatprep.subr.bf16.mxu0 0
        %1056 = vmatpush1.bf16.msra.mxu0 0
        %1057 = vmatprep.subr.bf16.mxu0 0
        %1058 = vmatpush1.bf16.msra.mxu0 0
        %1059 = vmatprep.subr.bf16.mxu0 0
        %1060 = vmatpush1.bf16.msra.mxu0 0
        %1061 = vmatprep.subr.bf16.mxu0 0
        %1062 = vmatpush1.bf16.msra.mxu0 0
        %1063 = vmatprep.mubr.bf16.mxu0 0
        %1064 = vmatmul.mubr.bf16.gmra.mrb[0].mxu0 %v979
        %v1065 = vpop.f32.mrb[0].mxu0
        %v1066 = vadd.f32 0.0, %v1065
        %v1067 = vpop.f32.mrb[0].mxu0
        %v1068 = vpop.f32.mrb[0].mxu0
        %v1069 = vpop.f32.mrb[0].mxu0
        %1070 = vdwg.mxu0
        %v1071 = vadd.f32 %v963, %v1025
        %v1072 = vadd.f32 %v964, %v1027
        %v1073 = vadd.f32 %v965, %v1066
        %v1074 = vld [vmem:[%s424 + $0x4] sm:$0xff]
        %v1075 = vld [vmem:[%s424 + $0xc] sm:$0xff]
        %s1076 = scalar_lea.vmem [#allocation7], 20
        %v1077 = vld [vmem:[%s1076] sm:$0xf]
        %v1080 = vunpack.c.l.b16 %v1074
        %v1081 = vunpack.c.h.b16 %v1074
        %v1082 = vunpack.c.l.b16 %v1075
        %v1083 = vunpack.c.h.b16 %v1075
        %v1084 = vpack.c.b16 %v1080, %v1080
        %v1085 = vpack.c.b16 %v1081, %v1081
        %v1086 = vpack.c.b16 %v1082, %v1082
        %v1087 = vpack.c.b16 %v1083, %v1083
        %1088 = vrot.lane.b32.xlu0 %v1084, 127
        %v1089 = vpop.permute.xlu0 %1088
        %1090 = vrot.lane.b32.xlu0 %v1085, 127
        %v1091 = vpop.permute.xlu0 %1090
        %1092 = vrot.lane.b32.xlu0 %v1086, 127
        %v1093 = vpop.permute.xlu0 %1092
        %1094 = vrot.lane.b32.xlu0 %v1087, 127
        %v1095 = vpop.permute.xlu0 %1094
        %vm1096 = vcmask 1039360
        %v1097 = vsel %vm1096, %v1089, %v1091
        %v1098 = vsel %vm1096, %v1091, %v1093
        %v1099 = vsel %vm1096, %v1093, %v1095
        %v1101 = vsel %vm546, %v1077, 0
        %v1104 = vsel %vm550, %v1097, 0
        %v1107 = vsel %vm550, %v1098, 0
        %v1110 = vsel %vm550, %v1099, 0
        %1112 = vmatprep.subr.bf16.mxu0 %v1107
        %1113 = vmatpush1.bf16.msra.mxu0 %v1104
        %1114 = vmatprep.subr.bf16.mxu0 0
        %1115 = vmatpush1.bf16.msra.mxu0 0
        %1116 = vmatprep.subr.bf16.mxu0 0
        %1117 = vmatpush1.bf16.msra.mxu0 0
        %1118 = vmatprep.subr.bf16.mxu0 0
        %1119 = vmatpush1.bf16.msra.mxu0 0
        %1120 = vmatprep.subr.bf16.mxu0 0
        %1121 = vmatpush1.bf16.msra.mxu0 0
        %1122 = vmatprep.subr.bf16.mxu0 0
        %1123 = vmatpush1.bf16.msra.mxu0 0
        %1124 = vmatprep.subr.bf16.mxu0 0
        %1125 = vmatpush1.bf16.msra.mxu0 0
        %1126 = vmatprep.subr.bf16.mxu0 0
        %1127 = vmatpush1.bf16.msra.mxu0 0
        %1128 = vmatprep.subr.bf16.mxu0 0
        %1129 = vmatpush1.bf16.msra.mxu0 0
        %1130 = vmatprep.subr.bf16.mxu0 0
        %1131 = vmatpush1.bf16.msra.mxu0 0
        %1132 = vmatprep.subr.bf16.mxu0 0
        %1133 = vmatpush1.bf16.msra.mxu0 0
        %1134 = vmatprep.subr.bf16.mxu0 0
        %1135 = vmatpush1.bf16.msra.mxu0 0
        %1136 = vmatprep.subr.bf16.mxu0 0
        %1137 = vmatpush1.bf16.msra.mxu0 0
        %1138 = vmatprep.subr.bf16.mxu0 0
        %1139 = vmatpush1.bf16.msra.mxu0 0
        %1140 = vmatprep.subr.bf16.mxu0 0
        %1141 = vmatpush1.bf16.msra.mxu0 0
        %1142 = vmatprep.subr.bf16.mxu0 0
        %1143 = vmatpush1.bf16.msra.mxu0 0
        %1144 = vmatprep.mubr.bf16.mxu0 0
        %1145 = vmatmul.mubr.bf16.gmra.mrb[0].mxu0 %v1101
        %v1146 = vpop.f32.mrb[0].mxu0
        %v1147 = vadd.f32 0.0, %v1146
        %v1148 = vpop.f32.mrb[0].mxu0
        %v1149 = vadd.f32 0.0, %v1148
        %v1150 = vpop.f32.mrb[0].mxu0
        %v1151 = vpop.f32.mrb[0].mxu0
        %1152 = vdwg.mxu0
        %1153 = vmatprep.subr.bf16.mxu0 0
        %1154 = vmatpush1.bf16.msra.mxu0 %v1110
        %1155 = vmatprep.subr.bf16.mxu0 0
        %1156 = vmatpush1.bf16.msra.mxu0 0
        %1157 = vmatprep.subr.bf16.mxu0 0
        %1158 = vmatpush1.bf16.msra.mxu0 0
        %1159 = vmatprep.subr.bf16.mxu0 0
        %1160 = vmatpush1.bf16.msra.mxu0 0
        %1161 = vmatprep.subr.bf16.mxu0 0
        %1162 = vmatpush1.bf16.msra.mxu0 0
        %1163 = vmatprep.subr.bf16.mxu0 0
        %1164 = vmatpush1.bf16.msra.mxu0 0
        %1165 = vmatprep.subr.bf16.mxu0 0
        %1166 = vmatpush1.bf16.msra.mxu0 0
        %1167 = vmatprep.subr.bf16.mxu0 0
        %1168 = vmatpush1.bf16.msra.mxu0 0
        %1169 = vmatprep.subr.bf16.mxu0 0
        %1170 = vmatpush1.bf16.msra.mxu0 0
        %1171 = vmatprep.subr.bf16.mxu0 0
        %1172 = vmatpush1.bf16.msra.mxu0 0
        %1173 = vmatprep.subr.bf16.mxu0 0
        %1174 = vmatpush1.bf16.msra.mxu0 0
        %1175 = vmatprep.subr.bf16.mxu0 0
        %1176 = vmatpush1.bf16.msra.mxu0 0
        %1177 = vmatprep.subr.bf16.mxu0 0
        %1178 = vmatpush1.bf16.msra.mxu0 0
        %1179 = vmatprep.subr.bf16.mxu0 0
        %1180 = vmatpush1.bf16.msra.mxu0 0
        %1181 = vmatprep.subr.bf16.mxu0 0
        %1182 = vmatpush1.bf16.msra.mxu0 0
        %1183 = vmatprep.subr.bf16.mxu0 0
        %1184 = vmatpush1.bf16.msra.mxu0 0
        %1185 = vmatprep.mubr.bf16.mxu0 0
        %1186 = vmatmul.mubr.bf16.gmra.mrb[0].mxu0 %v1101
        %v1187 = vpop.f32.mrb[0].mxu0
        %v1188 = vadd.f32 0.0, %v1187
        %v1189 = vpop.f32.mrb[0].mxu0
        %v1190 = vpop.f32.mrb[0].mxu0
        %v1191 = vpop.f32.mrb[0].mxu0
        %1192 = vdwg.mxu0
        %v1193 = vadd.f32 %v1071, %v1147
        %v1194 = vadd.f32 %v1072, %v1149
        %v1195 = vadd.f32 %v1073, %v1188
        %s1196 = scalar_lea.vmem [#allocation7], 24
        %v1197 = vld [vmem:[%s1196] sm:$0xf]
        %1198 = vrot.lane.b32.xlu0 %v1084, 111
        %v1199 = vpop.permute.xlu0 %1198
        %1200 = vrot.lane.b32.xlu0 %v1085, 111
        %v1201 = vpop.permute.xlu0 %1200
        %1202 = vrot.lane.b32.xlu0 %v1086, 111
        %v1203 = vpop.permute.xlu0 %1202
        %1204 = vrot.lane.b32.xlu0 %v1087, 111
        %v1205 = vpop.permute.xlu0 %1204
        %vm1206 = vcmask 908288
        %v1207 = vsel %vm1206, %v1199, %v1201
        %v1208 = vsel %vm1206, %v1201, %v1203
        %v1209 = vsel %vm1206, %v1203, %v1205
        %v1211 = vsel %vm546, %v1197, 0
        %v1214 = vsel %vm550, %v1207, 0
        %v1217 = vsel %vm550, %v1208, 0
        %v1220 = vsel %vm550, %v1209, 0
        %1222 = vmatprep.subr.bf16.mxu0 %v1217
        %1223 = vmatpush1.bf16.msra.mxu0 %v1214
        %1224 = vmatprep.subr.bf16.mxu0 0
        %1225 = vmatpush1.bf16.msra.mxu0 0
        %1226 = vmatprep.subr.bf16.mxu0 0
        %1227 = vmatpush1.bf16.msra.mxu0 0
        %1228 = vmatprep.subr.bf16.mxu0 0
        %1229 = vmatpush1.bf16.msra.mxu0 0
        %1230 = vmatprep.subr.bf16.mxu0 0
        %1231 = vmatpush1.bf16.msra.mxu0 0
        %1232 = vmatprep.subr.bf16.mxu0 0
        %1233 = vmatpush1.bf16.msra.mxu0 0
        %1234 = vmatprep.subr.bf16.mxu0 0
        %1235 = vmatpush1.bf16.msra.mxu0 0
        %1236 = vmatprep.subr.bf16.mxu0 0
        %1237 = vmatpush1.bf16.msra.mxu0 0
        %1238 = vmatprep.subr.bf16.mxu0 0
        %1239 = vmatpush1.bf16.msra.mxu0 0
        %1240 = vmatprep.subr.bf16.mxu0 0
        %1241 = vmatpush1.bf16.msra.mxu0 0
        %1242 = vmatprep.subr.bf16.mxu0 0
        %1243 = vmatpush1.bf16.msra.mxu0 0
        %1244 = vmatprep.subr.bf16.mxu0 0
        %1245 = vmatpush1.bf16.msra.mxu0 0
        %1246 = vmatprep.subr.bf16.mxu0 0
        %1247 = vmatpush1.bf16.msra.mxu0 0
        %1248 = vmatprep.subr.bf16.mxu0 0
        %1249 = vmatpush1.bf16.msra.mxu0 0
        %1250 = vmatprep.subr.bf16.mxu0 0
        %1251 = vmatpush1.bf16.msra.mxu0 0
        %1252 = vmatprep.subr.bf16.mxu0 0
        %1253 = vmatpush1.bf16.msra.mxu0 0
        %1254 = vmatprep.mubr.bf16.mxu0 0
        %1255 = vmatmul.mubr.bf16.gmra.mrb[0].mxu0 %v1211
        %v1256 = vpop.f32.mrb[0].mxu0
        %v1257 = vadd.f32 0.0, %v1256
        %v1258 = vpop.f32.mrb[0].mxu0
        %v1259 = vadd.f32 0.0, %v1258
        %v1260 = vpop.f32.mrb[0].mxu0
        %v1261 = vpop.f32.mrb[0].mxu0
        %1262 = vdwg.mxu0
        %1263 = vmatprep.subr.bf16.mxu0 0
        %1264 = vmatpush1.bf16.msra.mxu0 %v1220
        %1265 = vmatprep.subr.bf16.mxu0 0
        %1266 = vmatpush1.bf16.msra.mxu0 0
        %1267 = vmatprep.subr.bf16.mxu0 0
        %1268 = vmatpush1.bf16.msra.mxu0 0
        %1269 = vmatprep.subr.bf16.mxu0 0
        %1270 = vmatpush1.bf16.msra.mxu0 0
        %1271 = vmatprep.subr.bf16.mxu0 0
        %1272 = vmatpush1.bf16.msra.mxu0 0
        %1273 = vmatprep.subr.bf16.mxu0 0
        %1274 = vmatpush1.bf16.msra.mxu0 0
        %1275 = vmatprep.subr.bf16.mxu0 0
        %1276 = vmatpush1.bf16.msra.mxu0 0
        %1277 = vmatprep.subr.bf16.mxu0 0
        %1278 = vmatpush1.bf16.msra.mxu0 0
        %1279 = vmatprep.subr.bf16.mxu0 0
        %1280 = vmatpush1.bf16.msra.mxu0 0
        %1281 = vmatprep.subr.bf16.mxu0 0
        %1282 = vmatpush1.bf16.msra.mxu0 0
        %1283 = vmatprep.subr.bf16.mxu0 0
        %1284 = vmatpush1.bf16.msra.mxu0 0
        %1285 = vmatprep.subr.bf16.mxu0 0
        %1286 = vmatpush1.bf16.msra.mxu0 0
        %1287 = vmatprep.subr.bf16.mxu0 0
        %1288 = vmatpush1.bf16.msra.mxu0 0
        %1289 = vmatprep.subr.bf16.mxu0 0
        %1290 = vmatpush1.bf16.msra.mxu0 0
        %1291 = vmatprep.subr.bf16.mxu0 0
        %1292 = vmatpush1.bf16.msra.mxu0 0
        %1293 = vmatprep.subr.bf16.mxu0 0
        %1294 = vmatpush1.bf16.msra.mxu0 0
        %1295 = vmatprep.mubr.bf16.mxu0 0
        %1296 = vmatmul.mubr.bf16.gmra.mrb[0].mxu0 %v1211
        %v1297 = vpop.f32.mrb[0].mxu0
        %v1298 = vadd.f32 0.0, %v1297
        %v1299 = vpop.f32.mrb[0].mxu0
        %v1300 = vpop.f32.mrb[0].mxu0
        %v1301 = vpop.f32.mrb[0].mxu0
        %1302 = vdwg.mxu0
        %v1303 = vadd.f32 %v1193, %v1257
        %v1304 = vadd.f32 %v1194, %v1259
        %v1305 = vadd.f32 %v1195, %v1298
        %s1306 = scalar_lea.vmem [#allocation7], 28
        %v1307 = vld [vmem:[%s1306] sm:$0xf]
        %1308 = vrot.lane.b32.xlu0 %v1084, 110
        %v1309 = vpop.permute.xlu0 %1308
        %1310 = vrot.lane.b32.xlu0 %v1085, 110
        %v1311 = vpop.permute.xlu0 %1310
        %1312 = vrot.lane.b32.xlu0 %v1086, 110
        %v1313 = vpop.permute.xlu0 %1312
        %1314 = vrot.lane.b32.xlu0 %v1087, 110
        %v1315 = vpop.permute.xlu0 %1314
        %vm1316 = vcmask 900096
        %v1317 = vsel %vm1316, %v1309, %v1311
        %v1318 = vsel %vm1316, %v1311, %v1313
        %v1319 = vsel %vm1316, %v1313, %v1315
        %v1321 = vsel %vm546, %v1307, 0
        %v1324 = vsel %vm550, %v1317, 0
        %v1327 = vsel %vm550, %v1318, 0
        %v1330 = vsel %vm550, %v1319, 0
        %1332 = vmatprep.subr.bf16.mxu0 %v1327
        %1333 = vmatpush1.bf16.msra.mxu0 %v1324
        %1334 = vmatprep.subr.bf16.mxu0 0
        %1335 = vmatpush1.bf16.msra.mxu0 0
        %1336 = vmatprep.subr.bf16.mxu0 0
        %1337 = vmatpush1.bf16.msra.mxu0 0
        %1338 = vmatprep.subr.bf16.mxu0 0
        %1339 = vmatpush1.bf16.msra.mxu0 0
        %1340 = vmatprep.subr.bf16.mxu0 0
        %1341 = vmatpush1.bf16.msra.mxu0 0
        %1342 = vmatprep.subr.bf16.mxu0 0
        %1343 = vmatpush1.bf16.msra.mxu0 0
        %1344 = vmatprep.subr.bf16.mxu0 0
        %1345 = vmatpush1.bf16.msra.mxu0 0
        %1346 = vmatprep.subr.bf16.mxu0 0
        %1347 = vmatpush1.bf16.msra.mxu0 0
        %1348 = vmatprep.subr.bf16.mxu0 0
        %1349 = vmatpush1.bf16.msra.mxu0 0
        %1350 = vmatprep.subr.bf16.mxu0 0
        %1351 = vmatpush1.bf16.msra.mxu0 0
        %1352 = vmatprep.subr.bf16.mxu0 0
        %1353 = vmatpush1.bf16.msra.mxu0 0
        %1354 = vmatprep.subr.bf16.mxu0 0
        %1355 = vmatpush1.bf16.msra.mxu0 0
        %1356 = vmatprep.subr.bf16.mxu0 0
        %1357 = vmatpush1.bf16.msra.mxu0 0
        %1358 = vmatprep.subr.bf16.mxu0 0
        %1359 = vmatpush1.bf16.msra.mxu0 0
        %1360 = vmatprep.subr.bf16.mxu0 0
        %1361 = vmatpush1.bf16.msra.mxu0 0
        %1362 = vmatprep.subr.bf16.mxu0 0
        %1363 = vmatpush1.bf16.msra.mxu0 0
        %1364 = vmatprep.mubr.bf16.mxu0 0
        %1365 = vmatmul.mubr.bf16.gmra.mrb[0].mxu0 %v1321
        %v1366 = vpop.f32.mrb[0].mxu0
        %v1367 = vadd.f32 0.0, %v1366
        %v1368 = vpop.f32.mrb[0].mxu0
        %v1369 = vadd.f32 0.0, %v1368
        %v1370 = vpop.f32.mrb[0].mxu0
        %v1371 = vpop.f32.mrb[0].mxu0
        %1372 = vdwg.mxu0
        %1373 = vmatprep.subr.bf16.mxu0 0
        %1374 = vmatpush1.bf16.msra.mxu0 %v1330
        %1375 = vmatprep.subr.bf16.mxu0 0
        %1376 = vmatpush1.bf16.msra.mxu0 0
        %1377 = vmatprep.subr.bf16.mxu0 0
        %1378 = vmatpush1.bf16.msra.mxu0 0
        %1379 = vmatprep.subr.bf16.mxu0 0
        %1380 = vmatpush1.bf16.msra.mxu0 0
        %1381 = vmatprep.subr.bf16.mxu0 0
        %1382 = vmatpush1.bf16.msra.mxu0 0
        %1383 = vmatprep.subr.bf16.mxu0 0
        %1384 = vmatpush1.bf16.msra.mxu0 0
        %1385 = vmatprep.subr.bf16.mxu0 0
        %1386 = vmatpush1.bf16.msra.mxu0 0
        %1387 = vmatprep.subr.bf16.mxu0 0
        %1388 = vmatpush1.bf16.msra.mxu0 0
        %1389 = vmatprep.subr.bf16.mxu0 0
        %1390 = vmatpush1.bf16.msra.mxu0 0
        %1391 = vmatprep.subr.bf16.mxu0 0
        %1392 = vmatpush1.bf16.msra.mxu0 0
        %1393 = vmatprep.subr.bf16.mxu0 0
        %1394 = vmatpush1.bf16.msra.mxu0 0
        %1395 = vmatprep.subr.bf16.mxu0 0
        %1396 = vmatpush1.bf16.msra.mxu0 0
        %1397 = vmatprep.subr.bf16.mxu0 0
        %1398 = vmatpush1.bf16.msra.mxu0 0
        %1399 = vmatprep.subr.bf16.mxu0 0
        %1400 = vmatpush1.bf16.msra.mxu0 0
        %1401 = vmatprep.subr.bf16.mxu0 0
        %1402 = vmatpush1.bf16.msra.mxu0 0
        %1403 = vmatprep.subr.bf16.mxu0 0
        %1404 = vmatpush1.bf16.msra.mxu0 0
        %1405 = vmatprep.mubr.bf16.mxu0 0
        %1406 = vmatmul.mubr.bf16.gmra.mrb[0].mxu0 %v1321
        %v1407 = vpop.f32.mrb[0].mxu0
        %v1408 = vadd.f32 0.0, %v1407
        %v1409 = vpop.f32.mrb[0].mxu0
        %v1410 = vpop.f32.mrb[0].mxu0
        %v1411 = vpop.f32.mrb[0].mxu0
        %1412 = vdwg.mxu0
        %v1413 = vadd.f32 %v1303, %v1367
        %v1414 = vadd.f32 %v1304, %v1369
        %v1415 = vadd.f32 %v1305, %v1408
        %s1416 = scalar_lea.vmem [#allocation7], 32
        %v1417 = vld [vmem:[%s1416] sm:$0xf]
        %1418 = vrot.lane.b32.xlu0 %v1084, 109
        %v1419 = vpop.permute.xlu0 %1418
        %1420 = vrot.lane.b32.xlu0 %v1085, 109
        %v1421 = vpop.permute.xlu0 %1420
        %1422 = vrot.lane.b32.xlu0 %v1086, 109
        %v1423 = vpop.permute.xlu0 %1422
        %1424 = vrot.lane.b32.xlu0 %v1087, 109
        %v1425 = vpop.permute.xlu0 %1424
        %vm1426 = vcmask 891904
        %v1427 = vsel %vm1426, %v1419, %v1421
        %v1428 = vsel %vm1426, %v1421, %v1423
        %v1429 = vsel %vm1426, %v1423, %v1425
        %v1431 = vsel %vm546, %v1417, 0
        %v1434 = vsel %vm550, %v1427, 0
        %v1437 = vsel %vm550, %v1428, 0
        %v1440 = vsel %vm550, %v1429, 0
        %1442 = vmatprep.subr.bf16.mxu0 %v1437
        %1443 = vmatpush1.bf16.msra.mxu0 %v1434
        %1444 = vmatprep.subr.bf16.mxu0 0
        %1445 = vmatpush1.bf16.msra.mxu0 0
        %1446 = vmatprep.subr.bf16.mxu0 0
        %1447 = vmatpush1.bf16.msra.mxu0 0
        %1448 = vmatprep.subr.bf16.mxu0 0
        %1449 = vmatpush1.bf16.msra.mxu0 0
        %1450 = vmatprep.subr.bf16.mxu0 0
        %1451 = vmatpush1.bf16.msra.mxu0 0
        %1452 = vmatprep.subr.bf16.mxu0 0
        %1453 = vmatpush1.bf16.msra.mxu0 0
        %1454 = vmatprep.subr.bf16.mxu0 0
        %1455 = vmatpush1.bf16.msra.mxu0 0
        %1456 = vmatprep.subr.bf16.mxu0 0
        %1457 = vmatpush1.bf16.msra.mxu0 0
        %1458 = vmatprep.subr.bf16.mxu0 0
        %1459 = vmatpush1.bf16.msra.mxu0 0
        %1460 = vmatprep.subr.bf16.mxu0 0
        %1461 = vmatpush1.bf16.msra.mxu0 0
        %1462 = vmatprep.subr.bf16.mxu0 0
        %1463 = vmatpush1.bf16.msra.mxu0 0
        %1464 = vmatprep.subr.bf16.mxu0 0
        %1465 = vmatpush1.bf16.msra.mxu0 0
        %1466 = vmatprep.subr.bf16.mxu0 0
        %1467 = vmatpush1.bf16.msra.mxu0 0
        %1468 = vmatprep.subr.bf16.mxu0 0
        %1469 = vmatpush1.bf16.msra.mxu0 0
        %1470 = vmatprep.subr.bf16.mxu0 0
        %1471 = vmatpush1.bf16.msra.mxu0 0
        %1472 = vmatprep.subr.bf16.mxu0 0
        %1473 = vmatpush1.bf16.msra.mxu0 0
        %1474 = vmatprep.mubr.bf16.mxu0 0
        %1475 = vmatmul.mubr.bf16.gmra.mrb[0].mxu0 %v1431
        %v1476 = vpop.f32.mrb[0].mxu0
        %v1477 = vadd.f32 0.0, %v1476
        %v1478 = vpop.f32.mrb[0].mxu0
        %v1479 = vadd.f32 0.0, %v1478
        %v1480 = vpop.f32.mrb[0].mxu0
        %v1481 = vpop.f32.mrb[0].mxu0
        %1482 = vdwg.mxu0
        %1483 = vmatprep.subr.bf16.mxu0 0
        %1484 = vmatpush1.bf16.msra.mxu0 %v1440
        %1485 = vmatprep.subr.bf16.mxu0 0
        %1486 = vmatpush1.bf16.msra.mxu0 0
        %1487 = vmatprep.subr.bf16.mxu0 0
        %1488 = vmatpush1.bf16.msra.mxu0 0
        %1489 = vmatprep.subr.bf16.mxu0 0
        %1490 = vmatpush1.bf16.msra.mxu0 0
        %1491 = vmatprep.subr.bf16.mxu0 0
        %1492 = vmatpush1.bf16.msra.mxu0 0
        %1493 = vmatprep.subr.bf16.mxu0 0
        %1494 = vmatpush1.bf16.msra.mxu0 0
        %1495 = vmatprep.subr.bf16.mxu0 0
        %1496 = vmatpush1.bf16.msra.mxu0 0
        %1497 = vmatprep.subr.bf16.mxu0 0
        %1498 = vmatpush1.bf16.msra.mxu0 0
        %1499 = vmatprep.subr.bf16.mxu0 0
        %1500 = vmatpush1.bf16.msra.mxu0 0
        %1501 = vmatprep.subr.bf16.mxu0 0
        %1502 = vmatpush1.bf16.msra.mxu0 0
        %1503 = vmatprep.subr.bf16.mxu0 0
        %1504 = vmatpush1.bf16.msra.mxu0 0
        %1505 = vmatprep.subr.bf16.mxu0 0
        %1506 = vmatpush1.bf16.msra.mxu0 0
        %1507 = vmatprep.subr.bf16.mxu0 0
        %1508 = vmatpush1.bf16.msra.mxu0 0
        %1509 = vmatprep.subr.bf16.mxu0 0
        %1510 = vmatpush1.bf16.msra.mxu0 0
        %1511 = vmatprep.subr.bf16.mxu0 0
        %1512 = vmatpush1.bf16.msra.mxu0 0
        %1513 = vmatprep.subr.bf16.mxu0 0
        %1514 = vmatpush1.bf16.msra.mxu0 0
        %1515 = vmatprep.mubr.bf16.mxu0 0
        %1516 = vmatmul.mubr.bf16.gmra.mrb[0].mxu0 %v1431
        %v1517 = vpop.f32.mrb[0].mxu0
        %v1518 = vadd.f32 0.0, %v1517
        %v1519 = vpop.f32.mrb[0].mxu0
        %v1520 = vpop.f32.mrb[0].mxu0
        %v1521 = vpop.f32.mrb[0].mxu0
        %1522 = vdwg.mxu0
        %v1523 = vadd.f32 %v1413, %v1477
        %v1524 = vadd.f32 %v1414, %v1479
        %v1525 = vadd.f32 %v1415, %v1518
        %v1526 = vld [vmem:[#allocation9] sm:$0xff]
        %1528 = vset.pattern.permute.xlu0 0
        %1529 = vperm.xlu0 %1528, %v1526
        %v1530 = vpop.permute.xlu0 %1529
        %v1532 = vadd.f32 %v1523, %v1530
        %v1533 = vadd.f32 %v1524, %v1530
        %v1534 = vadd.f32 %v1525, %v1530
        %v1535 = vmax.f32 %v1532, 0.0
        %v1536 = vmax.f32 %v1533, 0.0
        %v1537 = vmax.f32 %v1534, 0.0
        %v1538 = vmul.f32 %v1535, %v507
        %v1539 = vmul.f32 %v1536, %v511
        %v1540 = vmul.f32 %v1537, %v515
        %v1541 = vpack.c.bf16 %v1538, %v1538
        %v1542 = vpack.c.bf16 %v1539, %v1539
        %v1543 = vpack.c.bf16 %v1540, %v1540
        %v1547 = vunpack.c.l.b16 %v1541
        %v1548 = vunpack.c.l.b16 %v1542
        %v1549 = vunpack.c.l.b16 %v1543
        %v1550 = vpack.c.b16 %v1548, %v1547
        %v1551 = vpack.c.b16 %v1549, %v1549
        %1554 = vst [vmem:[#allocation2 + $0x4] sm:$0xff] %v1550
        %1555 = vst [vmem:[#allocation2 + $0xc] sm:$0xf] %v1551
        %v1556 = vld [vmem:[#allocation2] sm:$0xff]
        %v1557 = vld [vmem:[#allocation2 + $0x8] sm:$0xff]
        %v1558 = vld [vmem:[#allocation10] sm:$0xf]
        %s1559 = scalar_lea.vmem [#allocation10], 4
        %v1560 = vld [vmem:[%s1559] sm:$0xf]
        %v1563 = vunpack.c.l.b16 %v1556
        %v1564 = vunpack.c.h.b16 %v1556
        %v1565 = vunpack.c.l.b16 %v1557
        %v1566 = vunpack.c.h.b16 %v1557
        %v1567 = vpack.c.b16 %v1563, %v1563
        %v1568 = vpack.c.b16 %v1564, %v1564
        %v1569 = vpack.c.b16 %v1565, %v1565
        %v1570 = vpack.c.b16 %v1566, %v1566
        %1571 = vrot.lane.b32.xlu0 %v1567, 18
        %v1572 = vpop.permute.xlu0 %1571
        %1573 = vrot.lane.b32.xlu0 %v1568, 18
        %v1574 = vpop.permute.xlu0 %1573
        %1575 = vrot.lane.b32.xlu0 %v1569, 18
        %v1576 = vpop.permute.xlu0 %1575
        %1577 = vrot.lane.b32.xlu0 %v1570, 18
        %v1578 = vpop.permute.xlu0 %1577
        %v1579 = vsel %vm542, %v1572, %v1574
        %v1580 = vsel %vm542, %v1574, %v1576
        %v1581 = vsel %vm542, %v1576, %v1578
        %v1583 = vsel %vm546, %v1560, 0
        %v1586 = vsel %vm550, %v1579, 0
        %v1589 = vsel %vm550, %v1580, 0
        %v1592 = vsel %vm550, %v1581, 0
        %1594 = vmatprep.subr.bf16.mxu0 %v1589
        %1595 = vmatpush1.bf16.msra.mxu0 %v1586
        %1596 = vmatprep.subr.bf16.mxu0 0
        %1597 = vmatpush1.bf16.msra.mxu0 0
        %1598 = vmatprep.subr.bf16.mxu0 0
        %1599 = vmatpush1.bf16.msra.mxu0 0
        %1600 = vmatprep.subr.bf16.mxu0 0
        %1601 = vmatpush1.bf16.msra.mxu0 0
        %1602 = vmatprep.subr.bf16.mxu0 0
        %1603 = vmatpush1.bf16.msra.mxu0 0
        %1604 = vmatprep.subr.bf16.mxu0 0
        %1605 = vmatpush1.bf16.msra.mxu0 0
        %1606 = vmatprep.subr.bf16.mxu0 0
        %1607 = vmatpush1.bf16.msra.mxu0 0
        %1608 = vmatprep.subr.bf16.mxu0 0
        %1609 = vmatpush1.bf16.msra.mxu0 0
        %1610 = vmatprep.subr.bf16.mxu0 0
        %1611 = vmatpush1.bf16.msra.mxu0 0
        %1612 = vmatprep.subr.bf16.mxu0 0
        %1613 = vmatpush1.bf16.msra.mxu0 0
        %1614 = vmatprep.subr.bf16.mxu0 0
        %1615 = vmatpush1.bf16.msra.mxu0 0
        %1616 = vmatprep.subr.bf16.mxu0 0
        %1617 = vmatpush1.bf16.msra.mxu0 0
        %1618 = vmatprep.subr.bf16.mxu0 0
        %1619 = vmatpush1.bf16.msra.mxu0 0
        %1620 = vmatprep.subr.bf16.mxu0 0
        %1621 = vmatpush1.bf16.msra.mxu0 0
        %1622 = vmatprep.subr.bf16.mxu0 0
        %1623 = vmatpush1.bf16.msra.mxu0 0
        %1624 = vmatprep.subr.bf16.mxu0 0
        %1625 = vmatpush1.bf16.msra.mxu0 0
        %1626 = vmatprep.mubr.bf16.mxu0 0
        %1627 = vmatmul.mubr.bf16.gmra.mrb[0].mxu0 %v1583
        %v1628 = vpop.f32.mrb[0].mxu0
        %v1629 = vadd.f32 0.0, %v1628
        %v1630 = vpop.f32.mrb[0].mxu0
        %v1631 = vadd.f32 0.0, %v1630
        %v1632 = vpop.f32.mrb[0].mxu0
        %v1633 = vpop.f32.mrb[0].mxu0
        %1634 = vdwg.mxu0
        %1635 = vmatprep.subr.bf16.mxu0 0
        %1636 = vmatpush1.bf16.msra.mxu0 %v1592
        %1637 = vmatprep.subr.bf16.mxu0 0
        %1638 = vmatpush1.bf16.msra.mxu0 0
        %1639 = vmatprep.subr.bf16.mxu0 0
        %1640 = vmatpush1.bf16.msra.mxu0 0
        %1641 = vmatprep.subr.bf16.mxu0 0
        %1642 = vmatpush1.bf16.msra.mxu0 0
        %1643 = vmatprep.subr.bf16.mxu0 0
        %1644 = vmatpush1.bf16.msra.mxu0 0
        %1645 = vmatprep.subr.bf16.mxu0 0
        %1646 = vmatpush1.bf16.msra.mxu0 0
        %1647 = vmatprep.subr.bf16.mxu0 0
        %1648 = vmatpush1.bf16.msra.mxu0 0
        %1649 = vmatprep.subr.bf16.mxu0 0
        %1650 = vmatpush1.bf16.msra.mxu0 0
        %1651 = vmatprep.subr.bf16.mxu0 0
        %1652 = vmatpush1.bf16.msra.mxu0 0
        %1653 = vmatprep.subr.bf16.mxu0 0
        %1654 = vmatpush1.bf16.msra.mxu0 0
        %1655 = vmatprep.subr.bf16.mxu0 0
        %1656 = vmatpush1.bf16.msra.mxu0 0
        %1657 = vmatprep.subr.bf16.mxu0 0
        %1658 = vmatpush1.bf16.msra.mxu0 0
        %1659 = vmatprep.subr.bf16.mxu0 0
        %1660 = vmatpush1.bf16.msra.mxu0 0
        %1661 = vmatprep.subr.bf16.mxu0 0
        %1662 = vmatpush1.bf16.msra.mxu0 0
        %1663 = vmatprep.subr.bf16.mxu0 0
        %1664 = vmatpush1.bf16.msra.mxu0 0
        %1665 = vmatprep.subr.bf16.mxu0 0
        %1666 = vmatpush1.bf16.msra.mxu0 0
        %1667 = vmatprep.mubr.bf16.mxu0 0
        %1668 = vmatmul.mubr.bf16.gmra.mrb[0].mxu0 %v1583
        %v1669 = vpop.f32.mrb[0].mxu0
        %v1670 = vadd.f32 0.0, %v1669
        %v1671 = vpop.f32.mrb[0].mxu0
        %v1672 = vpop.f32.mrb[0].mxu0
        %v1673 = vpop.f32.mrb[0].mxu0
        %1674 = vdwg.mxu0
        %1675 = vrot.lane.b32.xlu0 %v1567, 19
        %v1676 = vpop.permute.xlu0 %1675
        %1677 = vrot.lane.b32.xlu0 %v1568, 19
        %v1678 = vpop.permute.xlu0 %1677
        %1679 = vrot.lane.b32.xlu0 %v1569, 19
        %v1680 = vpop.permute.xlu0 %1679
        %1681 = vrot.lane.b32.xlu0 %v1570, 19
        %v1682 = vpop.permute.xlu0 %1681
        %v1683 = vsel %vm649, %v1676, %v1678
        %v1684 = vsel %vm649, %v1678, %v1680
        %v1685 = vsel %vm649, %v1680, %v1682
        %v1687 = vsel %vm546, %v1558, 0
        %v1690 = vsel %vm550, %v1683, 0
        %v1693 = vsel %vm550, %v1684, 0
        %v1696 = vsel %vm550, %v1685, 0
        %1698 = vmatprep.subr.bf16.mxu0 %v1693
        %1699 = vmatpush1.bf16.msra.mxu0 %v1690
        %1700 = vmatprep.subr.bf16.mxu0 0
        %1701 = vmatpush1.bf16.msra.mxu0 0
        %1702 = vmatprep.subr.bf16.mxu0 0
        %1703 = vmatpush1.bf16.msra.mxu0 0
        %1704 = vmatprep.subr.bf16.mxu0 0
        %1705 = vmatpush1.bf16.msra.mxu0 0
        %1706 = vmatprep.subr.bf16.mxu0 0
        %1707 = vmatpush1.bf16.msra.mxu0 0
        %1708 = vmatprep.subr.bf16.mxu0 0
        %1709 = vmatpush1.bf16.msra.mxu0 0
        %1710 = vmatprep.subr.bf16.mxu0 0
        %1711 = vmatpush1.bf16.msra.mxu0 0
        %1712 = vmatprep.subr.bf16.mxu0 0
        %1713 = vmatpush1.bf16.msra.mxu0 0
        %1714 = vmatprep.subr.bf16.mxu0 0
        %1715 = vmatpush1.bf16.msra.mxu0 0
        %1716 = vmatprep.subr.bf16.mxu0 0
        %1717 = vmatpush1.bf16.msra.mxu0 0
        %1718 = vmatprep.subr.bf16.mxu0 0
        %1719 = vmatpush1.bf16.msra.mxu0 0
        %1720 = vmatprep.subr.bf16.mxu0 0
        %1721 = vmatpush1.bf16.msra.mxu0 0
        %1722 = vmatprep.subr.bf16.mxu0 0
        %1723 = vmatpush1.bf16.msra.mxu0 0
        %1724 = vmatprep.subr.bf16.mxu0 0
        %1725 = vmatpush1.bf16.msra.mxu0 0
        %1726 = vmatprep.subr.bf16.mxu0 0
        %1727 = vmatpush1.bf16.msra.mxu0 0
        %1728 = vmatprep.subr.bf16.mxu0 0
        %1729 = vmatpush1.bf16.msra.mxu0 0
        %1730 = vmatprep.mubr.bf16.mxu0 0
        %1731 = vmatmul.mubr.bf16.gmra.mrb[0].mxu0 %v1687
        %v1732 = vpop.f32.mrb[0].mxu0
        %v1733 = vadd.f32 %v1629, %v1732
        %v1734 = vpop.f32.mrb[0].mxu0
        %v1735 = vadd.f32 %v1631, %v1734
        %v1736 = vpop.f32.mrb[0].mxu0
        %v1737 = vpop.f32.mrb[0].mxu0
        %1738 = vdwg.mxu0
        %1739 = vmatprep.subr.bf16.mxu0 0
        %1740 = vmatpush1.bf16.msra.mxu0 %v1696
        %1741 = vmatprep.subr.bf16.mxu0 0
        %1742 = vmatpush1.bf16.msra.mxu0 0
        %1743 = vmatprep.subr.bf16.mxu0 0
        %1744 = vmatpush1.bf16.msra.mxu0 0
        %1745 = vmatprep.subr.bf16.mxu0 0
        %1746 = vmatpush1.bf16.msra.mxu0 0
        %1747 = vmatprep.subr.bf16.mxu0 0
        %1748 = vmatpush1.bf16.msra.mxu0 0
        %1749 = vmatprep.subr.bf16.mxu0 0
        %1750 = vmatpush1.bf16.msra.mxu0 0
        %1751 = vmatprep.subr.bf16.mxu0 0
        %1752 = vmatpush1.bf16.msra.mxu0 0
        %1753 = vmatprep.subr.bf16.mxu0 0
        %1754 = vmatpush1.bf16.msra.mxu0 0
        %1755 = vmatprep.subr.bf16.mxu0 0
        %1756 = vmatpush1.bf16.msra.mxu0 0
        %1757 = vmatprep.subr.bf16.mxu0 0
        %1758 = vmatpush1.bf16.msra.mxu0 0
        %1759 = vmatprep.subr.bf16.mxu0 0
        %1760 = vmatpush1.bf16.msra.mxu0 0
        %1761 = vmatprep.subr.bf16.mxu0 0
        %1762 = vmatpush1.bf16.msra.mxu0 0
        %1763 = vmatprep.subr.bf16.mxu0 0
        %1764 = vmatpush1.bf16.msra.mxu0 0
        %1765 = vmatprep.subr.bf16.mxu0 0
        %1766 = vmatpush1.bf16.msra.mxu0 0
        %1767 = vmatprep.subr.bf16.mxu0 0
        %1768 = vmatpush1.bf16.msra.mxu0 0
        %1769 = vmatprep.subr.bf16.mxu0 0
        %1770 = vmatpush1.bf16.msra.mxu0 0
        %1771 = vmatprep.mubr.bf16.mxu0 0
        %1772 = vmatmul.mubr.bf16.gmra.mrb[0].mxu0 %v1687
        %v1773 = vpop.f32.mrb[0].mxu0
        %v1774 = vadd.f32 %v1670, %v1773
        %v1775 = vpop.f32.mrb[0].mxu0
        %v1776 = vpop.f32.mrb[0].mxu0
        %v1777 = vpop.f32.mrb[0].mxu0
        %1778 = vdwg.mxu0
        %s1779 = scalar_lea.vmem [#allocation10], 8
        %v1780 = vld [vmem:[%s1779] sm:$0xf]
        %1781 = vrot.lane.b32.xlu0 %v1567, 17
        %v1782 = vpop.permute.xlu0 %1781
        %1783 = vrot.lane.b32.xlu0 %v1568, 17
        %v1784 = vpop.permute.xlu0 %1783
        %1785 = vrot.lane.b32.xlu0 %v1569, 17
        %v1786 = vpop.permute.xlu0 %1785
        %1787 = vrot.lane.b32.xlu0 %v1570, 17
        %v1788 = vpop.permute.xlu0 %1787
        %v1789 = vsel %vm756, %v1782, %v1784
        %v1790 = vsel %vm756, %v1784, %v1786
        %v1791 = vsel %vm756, %v1786, %v1788
        %v1793 = vsel %vm546, %v1780, 0
        %v1796 = vsel %vm550, %v1789, 0
        %v1799 = vsel %vm550, %v1790, 0
        %v1802 = vsel %vm550, %v1791, 0
        %1804 = vmatprep.subr.bf16.mxu0 %v1799
        %1805 = vmatpush1.bf16.msra.mxu0 %v1796
        %1806 = vmatprep.subr.bf16.mxu0 0
        %1807 = vmatpush1.bf16.msra.mxu0 0
        %1808 = vmatprep.subr.bf16.mxu0 0
        %1809 = vmatpush1.bf16.msra.mxu0 0
        %1810 = vmatprep.subr.bf16.mxu0 0
        %1811 = vmatpush1.bf16.msra.mxu0 0
        %1812 = vmatprep.subr.bf16.mxu0 0
        %1813 = vmatpush1.bf16.msra.mxu0 0
        %1814 = vmatprep.subr.bf16.mxu0 0
        %1815 = vmatpush1.bf16.msra.mxu0 0
        %1816 = vmatprep.subr.bf16.mxu0 0
        %1817 = vmatpush1.bf16.msra.mxu0 0
        %1818 = vmatprep.subr.bf16.mxu0 0
        %1819 = vmatpush1.bf16.msra.mxu0 0
        %1820 = vmatprep.subr.bf16.mxu0 0
        %1821 = vmatpush1.bf16.msra.mxu0 0
        %1822 = vmatprep.subr.bf16.mxu0 0
        %1823 = vmatpush1.bf16.msra.mxu0 0
        %1824 = vmatprep.subr.bf16.mxu0 0
        %1825 = vmatpush1.bf16.msra.mxu0 0
        %1826 = vmatprep.subr.bf16.mxu0 0
        %1827 = vmatpush1.bf16.msra.mxu0 0
        %1828 = vmatprep.subr.bf16.mxu0 0
        %1829 = vmatpush1.bf16.msra.mxu0 0
        %1830 = vmatprep.subr.bf16.mxu0 0
        %1831 = vmatpush1.bf16.msra.mxu0 0
        %1832 = vmatprep.subr.bf16.mxu0 0
        %1833 = vmatpush1.bf16.msra.mxu0 0
        %1834 = vmatprep.subr.bf16.mxu0 0
        %1835 = vmatpush1.bf16.msra.mxu0 0
        %1836 = vmatprep.mubr.bf16.mxu0 0
        %1837 = vmatmul.mubr.bf16.gmra.mrb[0].mxu0 %v1793
        %v1838 = vpop.f32.mrb[0].mxu0
        %v1839 = vadd.f32 0.0, %v1838
        %v1840 = vpop.f32.mrb[0].mxu0
        %v1841 = vadd.f32 0.0, %v1840
        %v1842 = vpop.f32.mrb[0].mxu0
        %v1843 = vpop.f32.mrb[0].mxu0
        %1844 = vdwg.mxu0
        %1845 = vmatprep.subr.bf16.mxu0 0
        %1846 = vmatpush1.bf16.msra.mxu0 %v1802
        %1847 = vmatprep.subr.bf16.mxu0 0
        %1848 = vmatpush1.bf16.msra.mxu0 0
        %1849 = vmatprep.subr.bf16.mxu0 0
        %1850 = vmatpush1.bf16.msra.mxu0 0
        %1851 = vmatprep.subr.bf16.mxu0 0
        %1852 = vmatpush1.bf16.msra.mxu0 0
        %1853 = vmatprep.subr.bf16.mxu0 0
        %1854 = vmatpush1.bf16.msra.mxu0 0
        %1855 = vmatprep.subr.bf16.mxu0 0
        %1856 = vmatpush1.bf16.msra.mxu0 0
        %1857 = vmatprep.subr.bf16.mxu0 0
        %1858 = vmatpush1.bf16.msra.mxu0 0
        %1859 = vmatprep.subr.bf16.mxu0 0
        %1860 = vmatpush1.bf16.msra.mxu0 0
        %1861 = vmatprep.subr.bf16.mxu0 0
        %1862 = vmatpush1.bf16.msra.mxu0 0
        %1863 = vmatprep.subr.bf16.mxu0 0
        %1864 = vmatpush1.bf16.msra.mxu0 0
        %1865 = vmatprep.subr.bf16.mxu0 0
        %1866 = vmatpush1.bf16.msra.mxu0 0
        %1867 = vmatprep.subr.bf16.mxu0 0
        %1868 = vmatpush1.bf16.msra.mxu0 0
        %1869 = vmatprep.subr.bf16.mxu0 0
        %1870 = vmatpush1.bf16.msra.mxu0 0
        %1871 = vmatprep.subr.bf16.mxu0 0
        %1872 = vmatpush1.bf16.msra.mxu0 0
        %1873 = vmatprep.subr.bf16.mxu0 0
        %1874 = vmatpush1.bf16.msra.mxu0 0
        %1875 = vmatprep.subr.bf16.mxu0 0
        %1876 = vmatpush1.bf16.msra.mxu0 0
        %1877 = vmatprep.mubr.bf16.mxu0 0
        %1878 = vmatmul.mubr.bf16.gmra.mrb[0].mxu0 %v1793
        %v1879 = vpop.f32.mrb[0].mxu0
        %v1880 = vadd.f32 0.0, %v1879
        %v1881 = vpop.f32.mrb[0].mxu0
        %v1882 = vpop.f32.mrb[0].mxu0
        %v1883 = vpop.f32.mrb[0].mxu0
        %1884 = vdwg.mxu0
        %v1885 = vadd.f32 %v1733, %v1839
        %v1886 = vadd.f32 %v1735, %v1841
        %v1887 = vadd.f32 %v1774, %v1880
        %s1888 = scalar_lea.vmem [#allocation10], 12
        %v1889 = vld [vmem:[%s1888] sm:$0xf]
        %1890 = vrot.lane.b32.xlu0 %v1567, 1
        %v1891 = vpop.permute.xlu0 %1890
        %1892 = vrot.lane.b32.xlu0 %v1568, 1
        %v1893 = vpop.permute.xlu0 %1892
        %1894 = vrot.lane.b32.xlu0 %v1569, 1
        %v1895 = vpop.permute.xlu0 %1894
        %1896 = vrot.lane.b32.xlu0 %v1570, 1
        %v1897 = vpop.permute.xlu0 %1896
        %v1898 = vsel %vm866, %v1891, %v1893
        %v1899 = vsel %vm866, %v1893, %v1895
        %v1900 = vsel %vm866, %v1895, %v1897
        %v1902 = vsel %vm546, %v1889, 0
        %v1905 = vsel %vm550, %v1898, 0
        %v1908 = vsel %vm550, %v1899, 0
        %v1911 = vsel %vm550, %v1900, 0
        %1913 = vmatprep.subr.bf16.mxu0 %v1908
        %1914 = vmatpush1.bf16.msra.mxu0 %v1905
        %1915 = vmatprep.subr.bf16.mxu0 0
        %1916 = vmatpush1.bf16.msra.mxu0 0
        %1917 = vmatprep.subr.bf16.mxu0 0
        %1918 = vmatpush1.bf16.msra.mxu0 0
        %1919 = vmatprep.subr.bf16.mxu0 0
        %1920 = vmatpush1.bf16.msra.mxu0 0
        %1921 = vmatprep.subr.bf16.mxu0 0
        %1922 = vmatpush1.bf16.msra.mxu0 0
        %1923 = vmatprep.subr.bf16.mxu0 0
        %1924 = vmatpush1.bf16.msra.mxu0 0
        %1925 = vmatprep.subr.bf16.mxu0 0
        %1926 = vmatpush1.bf16.msra.mxu0 0
        %1927 = vmatprep.subr.bf16.mxu0 0
        %1928 = vmatpush1.bf16.msra.mxu0 0
        %1929 = vmatprep.subr.bf16.mxu0 0
        %1930 = vmatpush1.bf16.msra.mxu0 0
        %1931 = vmatprep.subr.bf16.mxu0 0
        %1932 = vmatpush1.bf16.msra.mxu0 0
        %1933 = vmatprep.subr.bf16.mxu0 0
        %1934 = vmatpush1.bf16.msra.mxu0 0
        %1935 = vmatprep.subr.bf16.mxu0 0
        %1936 = vmatpush1.bf16.msra.mxu0 0
        %1937 = vmatprep.subr.bf16.mxu0 0
        %1938 = vmatpush1.bf16.msra.mxu0 0
        %1939 = vmatprep.subr.bf16.mxu0 0
        %1940 = vmatpush1.bf16.msra.mxu0 0
        %1941 = vmatprep.subr.bf16.mxu0 0
        %1942 = vmatpush1.bf16.msra.mxu0 0
        %1943 = vmatprep.subr.bf16.mxu0 0
        %1944 = vmatpush1.bf16.msra.mxu0 0
        %1945 = vmatprep.mubr.bf16.mxu0 0
        %1946 = vmatmul.mubr.bf16.gmra.mrb[0].mxu0 %v1902
        %v1947 = vpop.f32.mrb[0].mxu0
        %v1948 = vadd.f32 0.0, %v1947
        %v1949 = vpop.f32.mrb[0].mxu0
        %v1950 = vadd.f32 0.0, %v1949
        %v1951 = vpop.f32.mrb[0].mxu0
        %v1952 = vpop.f32.mrb[0].mxu0
        %1953 = vdwg.mxu0
        %1954 = vmatprep.subr.bf16.mxu0 0
        %1955 = vmatpush1.bf16.msra.mxu0 %v1911
        %1956 = vmatprep.subr.bf16.mxu0 0
        %1957 = vmatpush1.bf16.msra.mxu0 0
        %1958 = vmatprep.subr.bf16.mxu0 0
        %1959 = vmatpush1.bf16.msra.mxu0 0
        %1960 = vmatprep.subr.bf16.mxu0 0
        %1961 = vmatpush1.bf16.msra.mxu0 0
        %1962 = vmatprep.subr.bf16.mxu0 0
        %1963 = vmatpush1.bf16.msra.mxu0 0
        %1964 = vmatprep.subr.bf16.mxu0 0
        %1965 = vmatpush1.bf16.msra.mxu0 0
        %1966 = vmatprep.subr.bf16.mxu0 0
        %1967 = vmatpush1.bf16.msra.mxu0 0
        %1968 = vmatprep.subr.bf16.mxu0 0
        %1969 = vmatpush1.bf16.msra.mxu0 0
        %1970 = vmatprep.subr.bf16.mxu0 0
        %1971 = vmatpush1.bf16.msra.mxu0 0
        %1972 = vmatprep.subr.bf16.mxu0 0
        %1973 = vmatpush1.bf16.msra.mxu0 0
        %1974 = vmatprep.subr.bf16.mxu0 0
        %1975 = vmatpush1.bf16.msra.mxu0 0
        %1976 = vmatprep.subr.bf16.mxu0 0
        %1977 = vmatpush1.bf16.msra.mxu0 0
        %1978 = vmatprep.subr.bf16.mxu0 0
        %1979 = vmatpush1.bf16.msra.mxu0 0
        %1980 = vmatprep.subr.bf16.mxu0 0
        %1981 = vmatpush1.bf16.msra.mxu0 0
        %1982 = vmatprep.subr.bf16.mxu0 0
        %1983 = vmatpush1.bf16.msra.mxu0 0
        %1984 = vmatprep.subr.bf16.mxu0 0
        %1985 = vmatpush1.bf16.msra.mxu0 0
        %1986 = vmatprep.mubr.bf16.mxu0 0
        %1987 = vmatmul.mubr.bf16.gmra.mrb[0].mxu0 %v1902
        %v1988 = vpop.f32.mrb[0].mxu0
        %v1989 = vadd.f32 0.0, %v1988
        %v1990 = vpop.f32.mrb[0].mxu0
        %v1991 = vpop.f32.mrb[0].mxu0
        %v1992 = vpop.f32.mrb[0].mxu0
        %1993 = vdwg.mxu0
        %v1994 = vadd.f32 %v1885, %v1948
        %v1995 = vadd.f32 %v1886, %v1950
        %v1996 = vadd.f32 %v1887, %v1989
        %v1997 = vld [vmem:[#allocation2 + $0x4] sm:$0xff]
        %v1998 = vld [vmem:[#allocation2 + $0xc] sm:$0xf]
        %s1999 = scalar_lea.vmem [#allocation10], 16
        %v2000 = vld [vmem:[%s1999] sm:$0xf]
        %v2003 = vunpack.c.l.b16 %v1997
        %v2004 = vunpack.c.h.b16 %v1997
        %v2005 = vunpack.c.l.b16 %v1998
        %v2006 = vpack.c.b16 %v2003, %v2003
        %v2007 = vpack.c.b16 %v2004, %v2004
        %v2008 = vpack.c.b16 %v2005, %v2005
        %v2010 = vsel %vm546, %v2000, 0
        %v2013 = vsel %vm550, %v2006, 0
        %v2016 = vsel %vm550, %v2007, 0
        %v2019 = vsel %vm550, %v2008, 0
        %2021 = vmatprep.subr.bf16.mxu0 %v2016
        %2022 = vmatpush1.bf16.msra.mxu0 %v2013
        %2023 = vmatprep.subr.bf16.mxu0 0
        %2024 = vmatpush1.bf16.msra.mxu0 0
        %2025 = vmatprep.subr.bf16.mxu0 0
        %2026 = vmatpush1.bf16.msra.mxu0 0
        %2027 = vmatprep.subr.bf16.mxu0 0
        %2028 = vmatpush1.bf16.msra.mxu0 0
        %2029 = vmatprep.subr.bf16.mxu0 0
        %2030 = vmatpush1.bf16.msra.mxu0 0
        %2031 = vmatprep.subr.bf16.mxu0 0
        %2032 = vmatpush1.bf16.msra.mxu0 0
        %2033 = vmatprep.subr.bf16.mxu0 0
        %2034 = vmatpush1.bf16.msra.mxu0 0
        %2035 = vmatprep.subr.bf16.mxu0 0
        %2036 = vmatpush1.bf16.msra.mxu0 0
        %2037 = vmatprep.subr.bf16.mxu0 0
        %2038 = vmatpush1.bf16.msra.mxu0 0
        %2039 = vmatprep.subr.bf16.mxu0 0
        %2040 = vmatpush1.bf16.msra.mxu0 0
        %2041 = vmatprep.subr.bf16.mxu0 0
        %2042 = vmatpush1.bf16.msra.mxu0 0
        %2043 = vmatprep.subr.bf16.mxu0 0
        %2044 = vmatpush1.bf16.msra.mxu0 0
        %2045 = vmatprep.subr.bf16.mxu0 0
        %2046 = vmatpush1.bf16.msra.mxu0 0
        %2047 = vmatprep.subr.bf16.mxu0 0
        %2048 = vmatpush1.bf16.msra.mxu0 0
        %2049 = vmatprep.subr.bf16.mxu0 0
        %2050 = vmatpush1.bf16.msra.mxu0 0
        %2051 = vmatprep.subr.bf16.mxu0 0
        %2052 = vmatpush1.bf16.msra.mxu0 0
        %2053 = vmatprep.mubr.bf16.mxu0 0
        %2054 = vmatmul.mubr.bf16.gmra.mrb[0].mxu0 %v2010
        %v2055 = vpop.f32.mrb[0].mxu0
        %v2056 = vadd.f32 0.0, %v2055
        %v2057 = vpop.f32.mrb[0].mxu0
        %v2058 = vadd.f32 0.0, %v2057
        %v2059 = vpop.f32.mrb[0].mxu0
        %v2060 = vpop.f32.mrb[0].mxu0
        %2061 = vdwg.mxu0
        %2062 = vmatprep.subr.bf16.mxu0 0
        %2063 = vmatpush1.bf16.msra.mxu0 %v2019
        %2064 = vmatprep.subr.bf16.mxu0 0
        %2065 = vmatpush1.bf16.msra.mxu0 0
        %2066 = vmatprep.subr.bf16.mxu0 0
        %2067 = vmatpush1.bf16.msra.mxu0 0
        %2068 = vmatprep.subr.bf16.mxu0 0
        %2069 = vmatpush1.bf16.msra.mxu0 0
        %2070 = vmatprep.subr.bf16.mxu0 0
        %2071 = vmatpush1.bf16.msra.mxu0 0
        %2072 = vmatprep.subr.bf16.mxu0 0
        %2073 = vmatpush1.bf16.msra.mxu0 0
        %2074 = vmatprep.subr.bf16.mxu0 0
        %2075 = vmatpush1.bf16.msra.mxu0 0
        %2076 = vmatprep.subr.bf16.mxu0 0
        %2077 = vmatpush1.bf16.msra.mxu0 0
        %2078 = vmatprep.subr.bf16.mxu0 0
        %2079 = vmatpush1.bf16.msra.mxu0 0
        %2080 = vmatprep.subr.bf16.mxu0 0
        %2081 = vmatpush1.bf16.msra.mxu0 0
        %2082 = vmatprep.subr.bf16.mxu0 0
        %2083 = vmatpush1.bf16.msra.mxu0 0
        %2084 = vmatprep.subr.bf16.mxu0 0
        %2085 = vmatpush1.bf16.msra.mxu0 0
        %2086 = vmatprep.subr.bf16.mxu0 0
        %2087 = vmatpush1.bf16.msra.mxu0 0
        %2088 = vmatprep.subr.bf16.mxu0 0
        %2089 = vmatpush1.bf16.msra.mxu0 0
        %2090 = vmatprep.subr.bf16.mxu0 0
        %2091 = vmatpush1.bf16.msra.mxu0 0
        %2092 = vmatprep.subr.bf16.mxu0 0
        %2093 = vmatpush1.bf16.msra.mxu0 0
        %2094 = vmatprep.mubr.bf16.mxu0 0
        %2095 = vmatmul.mubr.bf16.gmra.mrb[0].mxu0 %v2010
        %v2096 = vpop.f32.mrb[0].mxu0
        %v2097 = vadd.f32 0.0, %v2096
        %v2098 = vpop.f32.mrb[0].mxu0
        %v2099 = vpop.f32.mrb[0].mxu0
        %v2100 = vpop.f32.mrb[0].mxu0
        %2101 = vdwg.mxu0
        %v2102 = vadd.f32 %v1994, %v2056
        %v2103 = vadd.f32 %v1995, %v2058
        %v2104 = vadd.f32 %v1996, %v2097
        %v2105 = vld [vmem:[#allocation2 + $0x4] sm:$0xff]
        %v2106 = vld [vmem:[#allocation2 + $0xc] sm:$0xff]
        %s2107 = scalar_lea.vmem [#allocation10], 20
        %v2108 = vld [vmem:[%s2107] sm:$0xf]
        %v2111 = vunpack.c.l.b16 %v2105
        %v2112 = vunpack.c.h.b16 %v2105
        %v2113 = vunpack.c.l.b16 %v2106
        %v2114 = vunpack.c.h.b16 %v2106
        %v2115 = vpack.c.b16 %v2111, %v2111
        %v2116 = vpack.c.b16 %v2112, %v2112
        %v2117 = vpack.c.b16 %v2113, %v2113
        %v2118 = vpack.c.b16 %v2114, %v2114
        %2119 = vrot.lane.b32.xlu0 %v2115, 127
        %v2120 = vpop.permute.xlu0 %2119
        %2121 = vrot.lane.b32.xlu0 %v2116, 127
        %v2122 = vpop.permute.xlu0 %2121
        %2123 = vrot.lane.b32.xlu0 %v2117, 127
        %v2124 = vpop.permute.xlu0 %2123
        %2125 = vrot.lane.b32.xlu0 %v2118, 127
        %v2126 = vpop.permute.xlu0 %2125
        %v2127 = vsel %vm1096, %v2120, %v2122
        %v2128 = vsel %vm1096, %v2122, %v2124
        %v2129 = vsel %vm1096, %v2124, %v2126
        %v2131 = vsel %vm546, %v2108, 0
        %v2134 = vsel %vm550, %v2127, 0
        %v2137 = vsel %vm550, %v2128, 0
        %v2140 = vsel %vm550, %v2129, 0
        %2142 = vmatprep.subr.bf16.mxu0 %v2137
        %2143 = vmatpush1.bf16.msra.mxu0 %v2134
        %2144 = vmatprep.subr.bf16.mxu0 0
        %2145 = vmatpush1.bf16.msra.mxu0 0
        %2146 = vmatprep.subr.bf16.mxu0 0
        %2147 = vmatpush1.bf16.msra.mxu0 0
        %2148 = vmatprep.subr.bf16.mxu0 0
        %2149 = vmatpush1.bf16.msra.mxu0 0
        %2150 = vmatprep.subr.bf16.mxu0 0
        %2151 = vmatpush1.bf16.msra.mxu0 0
        %2152 = vmatprep.subr.bf16.mxu0 0
        %2153 = vmatpush1.bf16.msra.mxu0 0
        %2154 = vmatprep.subr.bf16.mxu0 0
        %2155 = vmatpush1.bf16.msra.mxu0 0
        %2156 = vmatprep.subr.bf16.mxu0 0
        %2157 = vmatpush1.bf16.msra.mxu0 0
        %2158 = vmatprep.subr.bf16.mxu0 0
        %2159 = vmatpush1.bf16.msra.mxu0 0
        %2160 = vmatprep.subr.bf16.mxu0 0
        %2161 = vmatpush1.bf16.msra.mxu0 0
        %2162 = vmatprep.subr.bf16.mxu0 0
        %2163 = vmatpush1.bf16.msra.mxu0 0
        %2164 = vmatprep.subr.bf16.mxu0 0
        %2165 = vmatpush1.bf16.msra.mxu0 0
        %2166 = vmatprep.subr.bf16.mxu0 0
        %2167 = vmatpush1.bf16.msra.mxu0 0
        %2168 = vmatprep.subr.bf16.mxu0 0
        %2169 = vmatpush1.bf16.msra.mxu0 0
        %2170 = vmatprep.subr.bf16.mxu0 0
        %2171 = vmatpush1.bf16.msra.mxu0 0
        %2172 = vmatprep.subr.bf16.mxu0 0
        %2173 = vmatpush1.bf16.msra.mxu0 0
        %2174 = vmatprep.mubr.bf16.mxu0 0
        %2175 = vmatmul.mubr.bf16.gmra.mrb[0].mxu0 %v2131
        %v2176 = vpop.f32.mrb[0].mxu0
        %v2177 = vadd.f32 0.0, %v2176
        %v2178 = vpop.f32.mrb[0].mxu0
        %v2179 = vadd.f32 0.0, %v2178
        %v2180 = vpop.f32.mrb[0].mxu0
        %v2181 = vpop.f32.mrb[0].mxu0
        %2182 = vdwg.mxu0
        %2183 = vmatprep.subr.bf16.mxu0 0
        %2184 = vmatpush1.bf16.msra.mxu0 %v2140
        %2185 = vmatprep.subr.bf16.mxu0 0
        %2186 = vmatpush1.bf16.msra.mxu0 0
        %2187 = vmatprep.subr.bf16.mxu0 0
        %2188 = vmatpush1.bf16.msra.mxu0 0
        %2189 = vmatprep.subr.bf16.mxu0 0
        %2190 = vmatpush1.bf16.msra.mxu0 0
        %2191 = vmatprep.subr.bf16.mxu0 0
        %2192 = vmatpush1.bf16.msra.mxu0 0
        %2193 = vmatprep.subr.bf16.mxu0 0
        %2194 = vmatpush1.bf16.msra.mxu0 0
        %2195 = vmatprep.subr.bf16.mxu0 0
        %2196 = vmatpush1.bf16.msra.mxu0 0
        %2197 = vmatprep.subr.bf16.mxu0 0
        %2198 = vmatpush1.bf16.msra.mxu0 0
        %2199 = vmatprep.subr.bf16.mxu0 0
        %2200 = vmatpush1.bf16.msra.mxu0 0
        %2201 = vmatprep.subr.bf16.mxu0 0
        %2202 = vmatpush1.bf16.msra.mxu0 0
        %2203 = vmatprep.subr.bf16.mxu0 0
        %2204 = vmatpush1.bf16.msra.mxu0 0
        %2205 = vmatprep.subr.bf16.mxu0 0
        %2206 = vmatpush1.bf16.msra.mxu0 0
        %2207 = vmatprep.subr.bf16.mxu0 0
        %2208 = vmatpush1.bf16.msra.mxu0 0
        %2209 = vmatprep.subr.bf16.mxu0 0
        %2210 = vmatpush1.bf16.msra.mxu0 0
        %2211 = vmatprep.subr.bf16.mxu0 0
        %2212 = vmatpush1.bf16.msra.mxu0 0
        %2213 = vmatprep.subr.bf16.mxu0 0
        %2214 = vmatpush1.bf16.msra.mxu0 0
        %2215 = vmatprep.mubr.bf16.mxu0 0
        %2216 = vmatmul.mubr.bf16.gmra.mrb[0].mxu0 %v2131
        %v2217 = vpop.f32.mrb[0].mxu0
        %v2218 = vadd.f32 0.0, %v2217
        %v2219 = vpop.f32.mrb[0].mxu0
        %v2220 = vpop.f32.mrb[0].mxu0
        %v2221 = vpop.f32.mrb[0].mxu0
        %2222 = vdwg.mxu0
        %v2223 = vadd.f32 %v2102, %v2177
        %v2224 = vadd.f32 %v2103, %v2179
        %v2225 = vadd.f32 %v2104, %v2218
        %s2226 = scalar_lea.vmem [#allocation10], 24
        %v2227 = vld [vmem:[%s2226] sm:$0xf]
        %2228 = vrot.lane.b32.xlu0 %v2115, 111
        %v2229 = vpop.permute.xlu0 %2228
        %2230 = vrot.lane.b32.xlu0 %v2116, 111
        %v2231 = vpop.permute.xlu0 %2230
        %2232 = vrot.lane.b32.xlu0 %v2117, 111
        %v2233 = vpop.permute.xlu0 %2232
        %2234 = vrot.lane.b32.xlu0 %v2118, 111
        %v2235 = vpop.permute.xlu0 %2234
        %v2236 = vsel %vm1206, %v2229, %v2231
        %v2237 = vsel %vm1206, %v2231, %v2233
        %v2238 = vsel %vm1206, %v2233, %v2235
        %v2240 = vsel %vm546, %v2227, 0
        %v2243 = vsel %vm550, %v2236, 0
        %v2246 = vsel %vm550, %v2237, 0
        %v2249 = vsel %vm550, %v2238, 0
        %2251 = vmatprep.subr.bf16.mxu0 %v2246
        %2252 = vmatpush1.bf16.msra.mxu0 %v2243
        %2253 = vmatprep.subr.bf16.mxu0 0
        %2254 = vmatpush1.bf16.msra.mxu0 0
        %2255 = vmatprep.subr.bf16.mxu0 0
        %2256 = vmatpush1.bf16.msra.mxu0 0
        %2257 = vmatprep.subr.bf16.mxu0 0
        %2258 = vmatpush1.bf16.msra.mxu0 0
        %2259 = vmatprep.subr.bf16.mxu0 0
        %2260 = vmatpush1.bf16.msra.mxu0 0
        %2261 = vmatprep.subr.bf16.mxu0 0
        %2262 = vmatpush1.bf16.msra.mxu0 0
        %2263 = vmatprep.subr.bf16.mxu0 0
        %2264 = vmatpush1.bf16.msra.mxu0 0
        %2265 = vmatprep.subr.bf16.mxu0 0
        %2266 = vmatpush1.bf16.msra.mxu0 0
        %2267 = vmatprep.subr.bf16.mxu0 0
        %2268 = vmatpush1.bf16.msra.mxu0 0
        %2269 = vmatprep.subr.bf16.mxu0 0
        %2270 = vmatpush1.bf16.msra.mxu0 0
        %2271 = vmatprep.subr.bf16.mxu0 0
        %2272 = vmatpush1.bf16.msra.mxu0 0
        %2273 = vmatprep.subr.bf16.mxu0 0
        %2274 = vmatpush1.bf16.msra.mxu0 0
        %2275 = vmatprep.subr.bf16.mxu0 0
        %2276 = vmatpush1.bf16.msra.mxu0 0
        %2277 = vmatprep.subr.bf16.mxu0 0
        %2278 = vmatpush1.bf16.msra.mxu0 0
        %2279 = vmatprep.subr.bf16.mxu0 0
        %2280 = vmatpush1.bf16.msra.mxu0 0
        %2281 = vmatprep.subr.bf16.mxu0 0
        %2282 = vmatpush1.bf16.msra.mxu0 0
        %2283 = vmatprep.mubr.bf16.mxu0 0
        %2284 = vmatmul.mubr.bf16.gmra.mrb[0].mxu0 %v2240
        %v2285 = vpop.f32.mrb[0].mxu0
        %v2286 = vadd.f32 0.0, %v2285
        %v2287 = vpop.f32.mrb[0].mxu0
        %v2288 = vadd.f32 0.0, %v2287
        %v2289 = vpop.f32.mrb[0].mxu0
        %v2290 = vpop.f32.mrb[0].mxu0
        %2291 = vdwg.mxu0
        %2292 = vmatprep.subr.bf16.mxu0 0
        %2293 = vmatpush1.bf16.msra.mxu0 %v2249
        %2294 = vmatprep.subr.bf16.mxu0 0
        %2295 = vmatpush1.bf16.msra.mxu0 0
        %2296 = vmatprep.subr.bf16.mxu0 0
        %2297 = vmatpush1.bf16.msra.mxu0 0
        %2298 = vmatprep.subr.bf16.mxu0 0
        %2299 = vmatpush1.bf16.msra.mxu0 0
        %2300 = vmatprep.subr.bf16.mxu0 0
        %2301 = vmatpush1.bf16.msra.mxu0 0
        %2302 = vmatprep.subr.bf16.mxu0 0
        %2303 = vmatpush1.bf16.msra.mxu0 0
        %2304 = vmatprep.subr.bf16.mxu0 0
        %2305 = vmatpush1.bf16.msra.mxu0 0
        %2306 = vmatprep.subr.bf16.mxu0 0
        %2307 = vmatpush1.bf16.msra.mxu0 0
        %2308 = vmatprep.subr.bf16.mxu0 0
        %2309 = vmatpush1.bf16.msra.mxu0 0
        %2310 = vmatprep.subr.bf16.mxu0 0
        %2311 = vmatpush1.bf16.msra.mxu0 0
        %2312 = vmatprep.subr.bf16.mxu0 0
        %2313 = vmatpush1.bf16.msra.mxu0 0
        %2314 = vmatprep.subr.bf16.mxu0 0
        %2315 = vmatpush1.bf16.msra.mxu0 0
        %2316 = vmatprep.subr.bf16.mxu0 0
        %2317 = vmatpush1.bf16.msra.mxu0 0
        %2318 = vmatprep.subr.bf16.mxu0 0
        %2319 = vmatpush1.bf16.msra.mxu0 0
        %2320 = vmatprep.subr.bf16.mxu0 0
        %2321 = vmatpush1.bf16.msra.mxu0 0
        %2322 = vmatprep.subr.bf16.mxu0 0
        %2323 = vmatpush1.bf16.msra.mxu0 0
        %2324 = vmatprep.mubr.bf16.mxu0 0
        %2325 = vmatmul.mubr.bf16.gmra.mrb[0].mxu0 %v2240
        %v2326 = vpop.f32.mrb[0].mxu0
        %v2327 = vadd.f32 0.0, %v2326
        %v2328 = vpop.f32.mrb[0].mxu0
        %v2329 = vpop.f32.mrb[0].mxu0
        %v2330 = vpop.f32.mrb[0].mxu0
        %2331 = vdwg.mxu0
        %v2332 = vadd.f32 %v2223, %v2286
        %v2333 = vadd.f32 %v2224, %v2288
        %v2334 = vadd.f32 %v2225, %v2327
        %s2335 = scalar_lea.vmem [#allocation10], 28
        %v2336 = vld [vmem:[%s2335] sm:$0xf]
        %2337 = vrot.lane.b32.xlu0 %v2115, 110
        %v2338 = vpop.permute.xlu0 %2337
        %2339 = vrot.lane.b32.xlu0 %v2116, 110
        %v2340 = vpop.permute.xlu0 %2339
        %2341 = vrot.lane.b32.xlu0 %v2117, 110
        %v2342 = vpop.permute.xlu0 %2341
        %2343 = vrot.lane.b32.xlu0 %v2118, 110
        %v2344 = vpop.permute.xlu0 %2343
        %v2345 = vsel %vm1316, %v2338, %v2340
        %v2346 = vsel %vm1316, %v2340, %v2342
        %v2347 = vsel %vm1316, %v2342, %v2344
        %v2349 = vsel %vm546, %v2336, 0
        %v2352 = vsel %vm550, %v2345, 0
        %v2355 = vsel %vm550, %v2346, 0
        %v2358 = vsel %vm550, %v2347, 0
        %2360 = vmatprep.subr.bf16.mxu0 %v2355
        %2361 = vmatpush1.bf16.msra.mxu0 %v2352
        %2362 = vmatprep.subr.bf16.mxu0 0
        %2363 = vmatpush1.bf16.msra.mxu0 0
        %2364 = vmatprep.subr.bf16.mxu0 0
        %2365 = vmatpush1.bf16.msra.mxu0 0
        %2366 = vmatprep.subr.bf16.mxu0 0
        %2367 = vmatpush1.bf16.msra.mxu0 0
        %2368 = vmatprep.subr.bf16.mxu0 0
        %2369 = vmatpush1.bf16.msra.mxu0 0
        %2370 = vmatprep.subr.bf16.mxu0 0
        %2371 = vmatpush1.bf16.msra.mxu0 0
        %2372 = vmatprep.subr.bf16.mxu0 0
        %2373 = vmatpush1.bf16.msra.mxu0 0
        %2374 = vmatprep.subr.bf16.mxu0 0
        %2375 = vmatpush1.bf16.msra.mxu0 0
        %2376 = vmatprep.subr.bf16.mxu0 0
        %2377 = vmatpush1.bf16.msra.mxu0 0
        %2378 = vmatprep.subr.bf16.mxu0 0
        %2379 = vmatpush1.bf16.msra.mxu0 0
        %2380 = vmatprep.subr.bf16.mxu0 0
        %2381 = vmatpush1.bf16.msra.mxu0 0
        %2382 = vmatprep.subr.bf16.mxu0 0
        %2383 = vmatpush1.bf16.msra.mxu0 0
        %2384 = vmatprep.subr.bf16.mxu0 0
        %2385 = vmatpush1.bf16.msra.mxu0 0
        %2386 = vmatprep.subr.bf16.mxu0 0
        %2387 = vmatpush1.bf16.msra.mxu0 0
        %2388 = vmatprep.subr.bf16.mxu0 0
        %2389 = vmatpush1.bf16.msra.mxu0 0
        %2390 = vmatprep.subr.bf16.mxu0 0
        %2391 = vmatpush1.bf16.msra.mxu0 0
        %2392 = vmatprep.mubr.bf16.mxu0 0
        %2393 = vmatmul.mubr.bf16.gmra.mrb[0].mxu0 %v2349
        %v2394 = vpop.f32.mrb[0].mxu0
        %v2395 = vadd.f32 0.0, %v2394
        %v2396 = vpop.f32.mrb[0].mxu0
        %v2397 = vadd.f32 0.0, %v2396
        %v2398 = vpop.f32.mrb[0].mxu0
        %v2399 = vpop.f32.mrb[0].mxu0
        %2400 = vdwg.mxu0
        %2401 = vmatprep.subr.bf16.mxu0 0
        %2402 = vmatpush1.bf16.msra.mxu0 %v2358
        %2403 = vmatprep.subr.bf16.mxu0 0
        %2404 = vmatpush1.bf16.msra.mxu0 0
        %2405 = vmatprep.subr.bf16.mxu0 0
        %2406 = vmatpush1.bf16.msra.mxu0 0
        %2407 = vmatprep.subr.bf16.mxu0 0
        %2408 = vmatpush1.bf16.msra.mxu0 0
        %2409 = vmatprep.subr.bf16.mxu0 0
        %2410 = vmatpush1.bf16.msra.mxu0 0
        %2411 = vmatprep.subr.bf16.mxu0 0
        %2412 = vmatpush1.bf16.msra.mxu0 0
        %2413 = vmatprep.subr.bf16.mxu0 0
        %2414 = vmatpush1.bf16.msra.mxu0 0
        %2415 = vmatprep.subr.bf16.mxu0 0
        %2416 = vmatpush1.bf16.msra.mxu0 0
        %2417 = vmatprep.subr.bf16.mxu0 0
        %2418 = vmatpush1.bf16.msra.mxu0 0
        %2419 = vmatprep.subr.bf16.mxu0 0
        %2420 = vmatpush1.bf16.msra.mxu0 0
        %2421 = vmatprep.subr.bf16.mxu0 0
        %2422 = vmatpush1.bf16.msra.mxu0 0
        %2423 = vmatprep.subr.bf16.mxu0 0
        %2424 = vmatpush1.bf16.msra.mxu0 0
        %2425 = vmatprep.subr.bf16.mxu0 0
        %2426 = vmatpush1.bf16.msra.mxu0 0
        %2427 = vmatprep.subr.bf16.mxu0 0
        %2428 = vmatpush1.bf16.msra.mxu0 0
        %2429 = vmatprep.subr.bf16.mxu0 0
        %2430 = vmatpush1.bf16.msra.mxu0 0
        %2431 = vmatprep.subr.bf16.mxu0 0
        %2432 = vmatpush1.bf16.msra.mxu0 0
        %2433 = vmatprep.mubr.bf16.mxu0 0
        %2434 = vmatmul.mubr.bf16.gmra.mrb[0].mxu0 %v2349
        %v2435 = vpop.f32.mrb[0].mxu0
        %v2436 = vadd.f32 0.0, %v2435
        %v2437 = vpop.f32.mrb[0].mxu0
        %v2438 = vpop.f32.mrb[0].mxu0
        %v2439 = vpop.f32.mrb[0].mxu0
        %2440 = vdwg.mxu0
        %v2441 = vadd.f32 %v2332, %v2395
        %v2442 = vadd.f32 %v2333, %v2397
        %v2443 = vadd.f32 %v2334, %v2436
        %s2444 = scalar_lea.vmem [#allocation10], 32
        %v2445 = vld [vmem:[%s2444] sm:$0xf]
        %2446 = vrot.lane.b32.xlu0 %v2115, 109
        %v2447 = vpop.permute.xlu0 %2446
        %2448 = vrot.lane.b32.xlu0 %v2116, 109
        %v2449 = vpop.permute.xlu0 %2448
        %2450 = vrot.lane.b32.xlu0 %v2117, 109
        %v2451 = vpop.permute.xlu0 %2450
        %2452 = vrot.lane.b32.xlu0 %v2118, 109
        %v2453 = vpop.permute.xlu0 %2452
        %v2454 = vsel %vm1426, %v2447, %v2449
        %v2455 = vsel %vm1426, %v2449, %v2451
        %v2456 = vsel %vm1426, %v2451, %v2453
        %v2458 = vsel %vm546, %v2445, 0
        %v2461 = vsel %vm550, %v2454, 0
        %v2464 = vsel %vm550, %v2455, 0
        %v2467 = vsel %vm550, %v2456, 0
        %2469 = vmatprep.subr.bf16.mxu0 %v2464
        %2470 = vmatpush1.bf16.msra.mxu0 %v2461
        %2471 = vmatprep.subr.bf16.mxu0 0
        %2472 = vmatpush1.bf16.msra.mxu0 0
        %2473 = vmatprep.subr.bf16.mxu0 0
        %2474 = vmatpush1.bf16.msra.mxu0 0
        %2475 = vmatprep.subr.bf16.mxu0 0
        %2476 = vmatpush1.bf16.msra.mxu0 0
        %2477 = vmatprep.subr.bf16.mxu0 0
        %2478 = vmatpush1.bf16.msra.mxu0 0
        %2479 = vmatprep.subr.bf16.mxu0 0
        %2480 = vmatpush1.bf16.msra.mxu0 0
        %2481 = vmatprep.subr.bf16.mxu0 0
        %2482 = vmatpush1.bf16.msra.mxu0 0
        %2483 = vmatprep.subr.bf16.mxu0 0
        %2484 = vmatpush1.bf16.msra.mxu0 0
        %2485 = vmatprep.subr.bf16.mxu0 0
        %2486 = vmatpush1.bf16.msra.mxu0 0
        %2487 = vmatprep.subr.bf16.mxu0 0
        %2488 = vmatpush1.bf16.msra.mxu0 0
        %2489 = vmatprep.subr.bf16.mxu0 0
        %2490 = vmatpush1.bf16.msra.mxu0 0
        %2491 = vmatprep.subr.bf16.mxu0 0
        %2492 = vmatpush1.bf16.msra.mxu0 0
        %2493 = vmatprep.subr.bf16.mxu0 0
        %2494 = vmatpush1.bf16.msra.mxu0 0
        %2495 = vmatprep.subr.bf16.mxu0 0
        %2496 = vmatpush1.bf16.msra.mxu0 0
        %2497 = vmatprep.subr.bf16.mxu0 0
        %2498 = vmatpush1.bf16.msra.mxu0 0
        %2499 = vmatprep.subr.bf16.mxu0 0
        %2500 = vmatpush1.bf16.msra.mxu0 0
        %2501 = vmatprep.mubr.bf16.mxu0 0
        %2502 = vmatmul.mubr.bf16.gmra.mrb[0].mxu0 %v2458
        %v2503 = vpop.f32.mrb[0].mxu0
        %v2504 = vadd.f32 0.0, %v2503
        %v2505 = vpop.f32.mrb[0].mxu0
        %v2506 = vadd.f32 0.0, %v2505
        %v2507 = vpop.f32.mrb[0].mxu0
        %v2508 = vpop.f32.mrb[0].mxu0
        %2509 = vdwg.mxu0
        %2510 = vmatprep.subr.bf16.mxu0 0
        %2511 = vmatpush1.bf16.msra.mxu0 %v2467
        %2512 = vmatprep.subr.bf16.mxu0 0
        %2513 = vmatpush1.bf16.msra.mxu0 0
        %2514 = vmatprep.subr.bf16.mxu0 0
        %2515 = vmatpush1.bf16.msra.mxu0 0
        %2516 = vmatprep.subr.bf16.mxu0 0
        %2517 = vmatpush1.bf16.msra.mxu0 0
        %2518 = vmatprep.subr.bf16.mxu0 0
        %2519 = vmatpush1.bf16.msra.mxu0 0
        %2520 = vmatprep.subr.bf16.mxu0 0
        %2521 = vmatpush1.bf16.msra.mxu0 0
        %2522 = vmatprep.subr.bf16.mxu0 0
        %2523 = vmatpush1.bf16.msra.mxu0 0
        %2524 = vmatprep.subr.bf16.mxu0 0
        %2525 = vmatpush1.bf16.msra.mxu0 0
        %2526 = vmatprep.subr.bf16.mxu0 0
        %2527 = vmatpush1.bf16.msra.mxu0 0
        %2528 = vmatprep.subr.bf16.mxu0 0
        %2529 = vmatpush1.bf16.msra.mxu0 0
        %2530 = vmatprep.subr.bf16.mxu0 0
        %2531 = vmatpush1.bf16.msra.mxu0 0
        %2532 = vmatprep.subr.bf16.mxu0 0
        %2533 = vmatpush1.bf16.msra.mxu0 0
        %2534 = vmatprep.subr.bf16.mxu0 0
        %2535 = vmatpush1.bf16.msra.mxu0 0
        %2536 = vmatprep.subr.bf16.mxu0 0
        %2537 = vmatpush1.bf16.msra.mxu0 0
        %2538 = vmatprep.subr.bf16.mxu0 0
        %2539 = vmatpush1.bf16.msra.mxu0 0
        %2540 = vmatprep.subr.bf16.mxu0 0
        %2541 = vmatpush1.bf16.msra.mxu0 0
        %2542 = vmatprep.mubr.bf16.mxu0 0
        %2543 = vmatmul.mubr.bf16.gmra.mrb[0].mxu0 %v2458
        %v2544 = vpop.f32.mrb[0].mxu0
        %v2545 = vadd.f32 0.0, %v2544
        %v2546 = vpop.f32.mrb[0].mxu0
        %v2547 = vpop.f32.mrb[0].mxu0
        %v2548 = vpop.f32.mrb[0].mxu0
        %2549 = vdwg.mxu0
        %v2550 = vadd.f32 %v2441, %v2504
        %v2551 = vadd.f32 %v2442, %v2506
        %v2552 = vadd.f32 %v2443, %v2545
        %v2553 = vld [vmem:[#allocation12] sm:$0xff]
        %2555 = vset.pattern.permute.xlu0 0
        %2556 = vperm.xlu0 %2555, %v2553
        %v2557 = vpop.permute.xlu0 %2556
        %v2559 = vadd.f32 %v2550, %v2557
        %v2560 = vadd.f32 %v2551, %v2557
        %v2561 = vadd.f32 %v2552, %v2557
        %v2562 = vmax.f32 %v2559, 0.0
        %v2563 = vmax.f32 %v2560, 0.0
        %v2564 = vmax.f32 %v2561, 0.0
        %v2565 = vmul.f32 %v2562, %v507
        %v2566 = vmul.f32 %v2563, %v511
        %v2567 = vmul.f32 %v2564, %v515
        %v2568 = vpack.c.bf16 %v2565, %v2565
        %v2569 = vpack.c.bf16 %v2566, %v2566
        %v2570 = vpack.c.bf16 %v2567, %v2567
        %v2574 = vunpack.c.l.b16 %v2568
        %v2575 = vunpack.c.l.b16 %v2569
        %v2576 = vunpack.c.l.b16 %v2570
        %v2577 = vpack.c.b16 %v2575, %v2574
        %v2578 = vpack.c.b16 %v2576, %v2576
        %2581 = vst [vmem:[#allocation3 + $0x4] sm:$0xff] %v2577
        %2582 = vst [vmem:[#allocation3 + $0xc] sm:$0xf] %v2578
        %v2583 = vld [vmem:[#allocation3] sm:$0xff]
        %v2584 = vld [vmem:[#allocation3 + $0x8] sm:$0xff]
        %v2585 = vld [vmem:[#allocation13] sm:$0xf]
        %s2586 = scalar_lea.vmem [#allocation13], 4
        %v2587 = vld [vmem:[%s2586] sm:$0xf]
        %v2590 = vunpack.c.l.b16 %v2583
        %v2591 = vunpack.c.h.b16 %v2583
        %v2592 = vunpack.c.l.b16 %v2584
        %v2593 = vunpack.c.h.b16 %v2584
        %v2594 = vpack.c.b16 %v2590, %v2590
        %v2595 = vpack.c.b16 %v2591, %v2591
        %v2596 = vpack.c.b16 %v2592, %v2592
        %v2597 = vpack.c.b16 %v2593, %v2593
        %2598 = vrot.lane.b32.xlu0 %v2594, 18
        %v2599 = vpop.permute.xlu0 %2598
        %2600 = vrot.lane.b32.xlu0 %v2595, 18
        %v2601 = vpop.permute.xlu0 %2600
        %2602 = vrot.lane.b32.xlu0 %v2596, 18
        %v2603 = vpop.permute.xlu0 %2602
        %2604 = vrot.lane.b32.xlu0 %v2597, 18
        %v2605 = vpop.permute.xlu0 %2604
        %v2606 = vsel %vm542, %v2599, %v2601
        %v2607 = vsel %vm542, %v2601, %v2603
        %v2608 = vsel %vm542, %v2603, %v2605
        %v2610 = vsel %vm546, %v2587, 0
        %v2613 = vsel %vm550, %v2606, 0
        %v2616 = vsel %vm550, %v2607, 0
        %v2619 = vsel %vm550, %v2608, 0
        %2621 = vmatprep.subr.bf16.mxu0 %v2616
        %2622 = vmatpush1.bf16.msra.mxu0 %v2613
        %2623 = vmatprep.subr.bf16.mxu0 0
        %2624 = vmatpush1.bf16.msra.mxu0 0
        %2625 = vmatprep.subr.bf16.mxu0 0
        %2626 = vmatpush1.bf16.msra.mxu0 0
        %2627 = vmatprep.subr.bf16.mxu0 0
        %2628 = vmatpush1.bf16.msra.mxu0 0
        %2629 = vmatprep.subr.bf16.mxu0 0
        %2630 = vmatpush1.bf16.msra.mxu0 0
        %2631 = vmatprep.subr.bf16.mxu0 0
        %2632 = vmatpush1.bf16.msra.mxu0 0
        %2633 = vmatprep.subr.bf16.mxu0 0
        %2634 = vmatpush1.bf16.msra.mxu0 0
        %2635 = vmatprep.subr.bf16.mxu0 0
        %2636 = vmatpush1.bf16.msra.mxu0 0
        %2637 = vmatprep.subr.bf16.mxu0 0
        %2638 = vmatpush1.bf16.msra.mxu0 0
        %2639 = vmatprep.subr.bf16.mxu0 0
        %2640 = vmatpush1.bf16.msra.mxu0 0
        %2641 = vmatprep.subr.bf16.mxu0 0
        %2642 = vmatpush1.bf16.msra.mxu0 0
        %2643 = vmatprep.subr.bf16.mxu0 0
        %2644 = vmatpush1.bf16.msra.mxu0 0
        %2645 = vmatprep.subr.bf16.mxu0 0
        %2646 = vmatpush1.bf16.msra.mxu0 0
        %2647 = vmatprep.subr.bf16.mxu0 0
        %2648 = vmatpush1.bf16.msra.mxu0 0
        %2649 = vmatprep.subr.bf16.mxu0 0
        %2650 = vmatpush1.bf16.msra.mxu0 0
        %2651 = vmatprep.subr.bf16.mxu0 0
        %2652 = vmatpush1.bf16.msra.mxu0 0
        %2653 = vmatprep.mubr.bf16.mxu0 0
        %2654 = vmatmul.mubr.bf16.gmra.mrb[0].mxu0 %v2610
        %v2655 = vpop.f32.mrb[0].mxu0
        %v2656 = vadd.f32 0.0, %v2655
        %v2657 = vpop.f32.mrb[0].mxu0
        %v2658 = vadd.f32 0.0, %v2657
        %v2659 = vpop.f32.mrb[0].mxu0
        %v2660 = vpop.f32.mrb[0].mxu0
        %2661 = vdwg.mxu0
        %2662 = vmatprep.subr.bf16.mxu0 0
        %2663 = vmatpush1.bf16.msra.mxu0 %v2619
        %2664 = vmatprep.subr.bf16.mxu0 0
        %2665 = vmatpush1.bf16.msra.mxu0 0
        %2666 = vmatprep.subr.bf16.mxu0 0
        %2667 = vmatpush1.bf16.msra.mxu0 0
        %2668 = vmatprep.subr.bf16.mxu0 0
        %2669 = vmatpush1.bf16.msra.mxu0 0
        %2670 = vmatprep.subr.bf16.mxu0 0
        %2671 = vmatpush1.bf16.msra.mxu0 0
        %2672 = vmatprep.subr.bf16.mxu0 0
        %2673 = vmatpush1.bf16.msra.mxu0 0
        %2674 = vmatprep.subr.bf16.mxu0 0
        %2675 = vmatpush1.bf16.msra.mxu0 0
        %2676 = vmatprep.subr.bf16.mxu0 0
        %2677 = vmatpush1.bf16.msra.mxu0 0
        %2678 = vmatprep.subr.bf16.mxu0 0
        %2679 = vmatpush1.bf16.msra.mxu0 0
        %2680 = vmatprep.subr.bf16.mxu0 0
        %2681 = vmatpush1.bf16.msra.mxu0 0
        %2682 = vmatprep.subr.bf16.mxu0 0
        %2683 = vmatpush1.bf16.msra.mxu0 0
        %2684 = vmatprep.subr.bf16.mxu0 0
        %2685 = vmatpush1.bf16.msra.mxu0 0
        %2686 = vmatprep.subr.bf16.mxu0 0
        %2687 = vmatpush1.bf16.msra.mxu0 0
        %2688 = vmatprep.subr.bf16.mxu0 0
        %2689 = vmatpush1.bf16.msra.mxu0 0
        %2690 = vmatprep.subr.bf16.mxu0 0
        %2691 = vmatpush1.bf16.msra.mxu0 0
        %2692 = vmatprep.subr.bf16.mxu0 0
        %2693 = vmatpush1.bf16.msra.mxu0 0
        %2694 = vmatprep.mubr.bf16.mxu0 0
        %2695 = vmatmul.mubr.bf16.gmra.mrb[0].mxu0 %v2610
        %v2696 = vpop.f32.mrb[0].mxu0
        %v2697 = vadd.f32 0.0, %v2696
        %v2698 = vpop.f32.mrb[0].mxu0
        %v2699 = vpop.f32.mrb[0].mxu0
        %v2700 = vpop.f32.mrb[0].mxu0
        %2701 = vdwg.mxu0
        %2702 = vrot.lane.b32.xlu0 %v2594, 19
        %v2703 = vpop.permute.xlu0 %2702
        %2704 = vrot.lane.b32.xlu0 %v2595, 19
        %v2705 = vpop.permute.xlu0 %2704
        %2706 = vrot.lane.b32.xlu0 %v2596, 19
        %v2707 = vpop.permute.xlu0 %2706
        %2708 = vrot.lane.b32.xlu0 %v2597, 19
        %v2709 = vpop.permute.xlu0 %2708
        %v2710 = vsel %vm649, %v2703, %v2705
        %v2711 = vsel %vm649, %v2705, %v2707
        %v2712 = vsel %vm649, %v2707, %v2709
        %v2714 = vsel %vm546, %v2585, 0
        %v2717 = vsel %vm550, %v2710, 0
        %v2720 = vsel %vm550, %v2711, 0
        %v2723 = vsel %vm550, %v2712, 0
        %2725 = vmatprep.subr.bf16.mxu0 %v2720
        %2726 = vmatpush1.bf16.msra.mxu0 %v2717
        %2727 = vmatprep.subr.bf16.mxu0 0
        %2728 = vmatpush1.bf16.msra.mxu0 0
        %2729 = vmatprep.subr.bf16.mxu0 0
        %2730 = vmatpush1.bf16.msra.mxu0 0
        %2731 = vmatprep.subr.bf16.mxu0 0
        %2732 = vmatpush1.bf16.msra.mxu0 0
        %2733 = vmatprep.subr.bf16.mxu0 0
        %2734 = vmatpush1.bf16.msra.mxu0 0
        %2735 = vmatprep.subr.bf16.mxu0 0
        %2736 = vmatpush1.bf16.msra.mxu0 0
        %2737 = vmatprep.subr.bf16.mxu0 0
        %2738 = vmatpush1.bf16.msra.mxu0 0
        %2739 = vmatprep.subr.bf16.mxu0 0
        %2740 = vmatpush1.bf16.msra.mxu0 0
        %2741 = vmatprep.subr.bf16.mxu0 0
        %2742 = vmatpush1.bf16.msra.mxu0 0
        %2743 = vmatprep.subr.bf16.mxu0 0
        %2744 = vmatpush1.bf16.msra.mxu0 0
        %2745 = vmatprep.subr.bf16.mxu0 0
        %2746 = vmatpush1.bf16.msra.mxu0 0
        %2747 = vmatprep.subr.bf16.mxu0 0
        %2748 = vmatpush1.bf16.msra.mxu0 0
        %2749 = vmatprep.subr.bf16.mxu0 0
        %2750 = vmatpush1.bf16.msra.mxu0 0
        %2751 = vmatprep.subr.bf16.mxu0 0
        %2752 = vmatpush1.bf16.msra.mxu0 0
        %2753 = vmatprep.subr.bf16.mxu0 0
        %2754 = vmatpush1.bf16.msra.mxu0 0
        %2755 = vmatprep.subr.bf16.mxu0 0
        %2756 = vmatpush1.bf16.msra.mxu0 0
        %2757 = vmatprep.mubr.bf16.mxu0 0
        %2758 = vmatmul.mubr.bf16.gmra.mrb[0].mxu0 %v2714
        %v2759 = vpop.f32.mrb[0].mxu0
        %v2760 = vadd.f32 %v2656, %v2759
        %v2761 = vpop.f32.mrb[0].mxu0
        %v2762 = vadd.f32 %v2658, %v2761
        %v2763 = vpop.f32.mrb[0].mxu0
        %v2764 = vpop.f32.mrb[0].mxu0
        %2765 = vdwg.mxu0
        %2766 = vmatprep.subr.bf16.mxu0 0
        %2767 = vmatpush1.bf16.msra.mxu0 %v2723
        %2768 = vmatprep.subr.bf16.mxu0 0
        %2769 = vmatpush1.bf16.msra.mxu0 0
        %2770 = vmatprep.subr.bf16.mxu0 0
        %2771 = vmatpush1.bf16.msra.mxu0 0
        %2772 = vmatprep.subr.bf16.mxu0 0
        %2773 = vmatpush1.bf16.msra.mxu0 0
        %2774 = vmatprep.subr.bf16.mxu0 0
        %2775 = vmatpush1.bf16.msra.mxu0 0
        %2776 = vmatprep.subr.bf16.mxu0 0
        %2777 = vmatpush1.bf16.msra.mxu0 0
        %2778 = vmatprep.subr.bf16.mxu0 0
        %2779 = vmatpush1.bf16.msra.mxu0 0
        %2780 = vmatprep.subr.bf16.mxu0 0
        %2781 = vmatpush1.bf16.msra.mxu0 0
        %2782 = vmatprep.subr.bf16.mxu0 0
        %2783 = vmatpush1.bf16.msra.mxu0 0
        %2784 = vmatprep.subr.bf16.mxu0 0
        %2785 = vmatpush1.bf16.msra.mxu0 0
        %2786 = vmatprep.subr.bf16.mxu0 0
        %2787 = vmatpush1.bf16.msra.mxu0 0
        %2788 = vmatprep.subr.bf16.mxu0 0
        %2789 = vmatpush1.bf16.msra.mxu0 0
        %2790 = vmatprep.subr.bf16.mxu0 0
        %2791 = vmatpush1.bf16.msra.mxu0 0
        %2792 = vmatprep.subr.bf16.mxu0 0
        %2793 = vmatpush1.bf16.msra.mxu0 0
        %2794 = vmatprep.subr.bf16.mxu0 0
        %2795 = vmatpush1.bf16.msra.mxu0 0
        %2796 = vmatprep.subr.bf16.mxu0 0
        %2797 = vmatpush1.bf16.msra.mxu0 0
        %2798 = vmatprep.mubr.bf16.mxu0 0
        %2799 = vmatmul.mubr.bf16.gmra.mrb[0].mxu0 %v2714
        %v2800 = vpop.f32.mrb[0].mxu0
        %v2801 = vadd.f32 %v2697, %v2800
        %v2802 = vpop.f32.mrb[0].mxu0
        %v2803 = vpop.f32.mrb[0].mxu0
        %v2804 = vpop.f32.mrb[0].mxu0
        %2805 = vdwg.mxu0
        %s2806 = scalar_lea.vmem [#allocation13], 8
        %v2807 = vld [vmem:[%s2806] sm:$0xf]
        %2808 = vrot.lane.b32.xlu0 %v2594, 17
        %v2809 = vpop.permute.xlu0 %2808
        %2810 = vrot.lane.b32.xlu0 %v2595, 17
        %v2811 = vpop.permute.xlu0 %2810
        %2812 = vrot.lane.b32.xlu0 %v2596, 17
        %v2813 = vpop.permute.xlu0 %2812
        %2814 = vrot.lane.b32.xlu0 %v2597, 17
        %v2815 = vpop.permute.xlu0 %2814
        %v2816 = vsel %vm756, %v2809, %v2811
        %v2817 = vsel %vm756, %v2811, %v2813
        %v2818 = vsel %vm756, %v2813, %v2815
        %v2820 = vsel %vm546, %v2807, 0
        %v2823 = vsel %vm550, %v2816, 0
        %v2826 = vsel %vm550, %v2817, 0
        %v2829 = vsel %vm550, %v2818, 0
        %2831 = vmatprep.subr.bf16.mxu0 %v2826
        %2832 = vmatpush1.bf16.msra.mxu0 %v2823
        %2833 = vmatprep.subr.bf16.mxu0 0
        %2834 = vmatpush1.bf16.msra.mxu0 0
        %2835 = vmatprep.subr.bf16.mxu0 0
        %2836 = vmatpush1.bf16.msra.mxu0 0
        %2837 = vmatprep.subr.bf16.mxu0 0
        %2838 = vmatpush1.bf16.msra.mxu0 0
        %2839 = vmatprep.subr.bf16.mxu0 0
        %2840 = vmatpush1.bf16.msra.mxu0 0
        %2841 = vmatprep.subr.bf16.mxu0 0
        %2842 = vmatpush1.bf16.msra.mxu0 0
        %2843 = vmatprep.subr.bf16.mxu0 0
        %2844 = vmatpush1.bf16.msra.mxu0 0
        %2845 = vmatprep.subr.bf16.mxu0 0
        %2846 = vmatpush1.bf16.msra.mxu0 0
        %2847 = vmatprep.subr.bf16.mxu0 0
        %2848 = vmatpush1.bf16.msra.mxu0 0
        %2849 = vmatprep.subr.bf16.mxu0 0
        %2850 = vmatpush1.bf16.msra.mxu0 0
        %2851 = vmatprep.subr.bf16.mxu0 0
        %2852 = vmatpush1.bf16.msra.mxu0 0
        %2853 = vmatprep.subr.bf16.mxu0 0
        %2854 = vmatpush1.bf16.msra.mxu0 0
        %2855 = vmatprep.subr.bf16.mxu0 0
        %2856 = vmatpush1.bf16.msra.mxu0 0
        %2857 = vmatprep.subr.bf16.mxu0 0
        %2858 = vmatpush1.bf16.msra.mxu0 0
        %2859 = vmatprep.subr.bf16.mxu0 0
        %2860 = vmatpush1.bf16.msra.mxu0 0
        %2861 = vmatprep.subr.bf16.mxu0 0
        %2862 = vmatpush1.bf16.msra.mxu0 0
        %2863 = vmatprep.mubr.bf16.mxu0 0
        %2864 = vmatmul.mubr.bf16.gmra.mrb[0].mxu0 %v2820
        %v2865 = vpop.f32.mrb[0].mxu0
        %v2866 = vadd.f32 0.0, %v2865
        %v2867 = vpop.f32.mrb[0].mxu0
        %v2868 = vadd.f32 0.0, %v2867
        %v2869 = vpop.f32.mrb[0].mxu0
        %v2870 = vpop.f32.mrb[0].mxu0
        %2871 = vdwg.mxu0
        %2872 = vmatprep.subr.bf16.mxu0 0
        %2873 = vmatpush1.bf16.msra.mxu0 %v2829
        %2874 = vmatprep.subr.bf16.mxu0 0
        %2875 = vmatpush1.bf16.msra.mxu0 0
        %2876 = vmatprep.subr.bf16.mxu0 0
        %2877 = vmatpush1.bf16.msra.mxu0 0
        %2878 = vmatprep.subr.bf16.mxu0 0
        %2879 = vmatpush1.bf16.msra.mxu0 0
        %2880 = vmatprep.subr.bf16.mxu0 0
        %2881 = vmatpush1.bf16.msra.mxu0 0
        %2882 = vmatprep.subr.bf16.mxu0 0
        %2883 = vmatpush1.bf16.msra.mxu0 0
        %2884 = vmatprep.subr.bf16.mxu0 0
        %2885 = vmatpush1.bf16.msra.mxu0 0
        %2886 = vmatprep.subr.bf16.mxu0 0
        %2887 = vmatpush1.bf16.msra.mxu0 0
        %2888 = vmatprep.subr.bf16.mxu0 0
        %2889 = vmatpush1.bf16.msra.mxu0 0
        %2890 = vmatprep.subr.bf16.mxu0 0
        %2891 = vmatpush1.bf16.msra.mxu0 0
        %2892 = vmatprep.subr.bf16.mxu0 0
        %2893 = vmatpush1.bf16.msra.mxu0 0
        %2894 = vmatprep.subr.bf16.mxu0 0
        %2895 = vmatpush1.bf16.msra.mxu0 0
        %2896 = vmatprep.subr.bf16.mxu0 0
        %2897 = vmatpush1.bf16.msra.mxu0 0
        %2898 = vmatprep.subr.bf16.mxu0 0
        %2899 = vmatpush1.bf16.msra.mxu0 0
        %2900 = vmatprep.subr.bf16.mxu0 0
        %2901 = vmatpush1.bf16.msra.mxu0 0
        %2902 = vmatprep.subr.bf16.mxu0 0
        %2903 = vmatpush1.bf16.msra.mxu0 0
        %2904 = vmatprep.mubr.bf16.mxu0 0
        %2905 = vmatmul.mubr.bf16.gmra.mrb[0].mxu0 %v2820
        %v2906 = vpop.f32.mrb[0].mxu0
        %v2907 = vadd.f32 0.0, %v2906
        %v2908 = vpop.f32.mrb[0].mxu0
        %v2909 = vpop.f32.mrb[0].mxu0
        %v2910 = vpop.f32.mrb[0].mxu0
        %2911 = vdwg.mxu0
        %v2912 = vadd.f32 %v2760, %v2866
        %v2913 = vadd.f32 %v2762, %v2868
        %v2914 = vadd.f32 %v2801, %v2907
        %s2915 = scalar_lea.vmem [#allocation13], 12
        %v2916 = vld [vmem:[%s2915] sm:$0xf]
        %2917 = vrot.lane.b32.xlu0 %v2594, 1
        %v2918 = vpop.permute.xlu0 %2917
        %2919 = vrot.lane.b32.xlu0 %v2595, 1
        %v2920 = vpop.permute.xlu0 %2919
        %2921 = vrot.lane.b32.xlu0 %v2596, 1
        %v2922 = vpop.permute.xlu0 %2921
        %2923 = vrot.lane.b32.xlu0 %v2597, 1
        %v2924 = vpop.permute.xlu0 %2923
        %v2925 = vsel %vm866, %v2918, %v2920
        %v2926 = vsel %vm866, %v2920, %v2922
        %v2927 = vsel %vm866, %v2922, %v2924
        %v2929 = vsel %vm546, %v2916, 0
        %v2932 = vsel %vm550, %v2925, 0
        %v2935 = vsel %vm550, %v2926, 0
        %v2938 = vsel %vm550, %v2927, 0
        %2940 = vmatprep.subr.bf16.mxu0 %v2935
        %2941 = vmatpush1.bf16.msra.mxu0 %v2932
        %2942 = vmatprep.subr.bf16.mxu0 0
        %2943 = vmatpush1.bf16.msra.mxu0 0
        %2944 = vmatprep.subr.bf16.mxu0 0
        %2945 = vmatpush1.bf16.msra.mxu0 0
        %2946 = vmatprep.subr.bf16.mxu0 0
        %2947 = vmatpush1.bf16.msra.mxu0 0
        %2948 = vmatprep.subr.bf16.mxu0 0
        %2949 = vmatpush1.bf16.msra.mxu0 0
        %2950 = vmatprep.subr.bf16.mxu0 0
        %2951 = vmatpush1.bf16.msra.mxu0 0
        %2952 = vmatprep.subr.bf16.mxu0 0
        %2953 = vmatpush1.bf16.msra.mxu0 0
        %2954 = vmatprep.subr.bf16.mxu0 0
        %2955 = vmatpush1.bf16.msra.mxu0 0
        %2956 = vmatprep.subr.bf16.mxu0 0
        %2957 = vmatpush1.bf16.msra.mxu0 0
        %2958 = vmatprep.subr.bf16.mxu0 0
        %2959 = vmatpush1.bf16.msra.mxu0 0
        %2960 = vmatprep.subr.bf16.mxu0 0
        %2961 = vmatpush1.bf16.msra.mxu0 0
        %2962 = vmatprep.subr.bf16.mxu0 0
        %2963 = vmatpush1.bf16.msra.mxu0 0
        %2964 = vmatprep.subr.bf16.mxu0 0
        %2965 = vmatpush1.bf16.msra.mxu0 0
        %2966 = vmatprep.subr.bf16.mxu0 0
        %2967 = vmatpush1.bf16.msra.mxu0 0
        %2968 = vmatprep.subr.bf16.mxu0 0
        %2969 = vmatpush1.bf16.msra.mxu0 0
        %2970 = vmatprep.subr.bf16.mxu0 0
        %2971 = vmatpush1.bf16.msra.mxu0 0
        %2972 = vmatprep.mubr.bf16.mxu0 0
        %2973 = vmatmul.mubr.bf16.gmra.mrb[0].mxu0 %v2929
        %v2974 = vpop.f32.mrb[0].mxu0
        %v2975 = vadd.f32 0.0, %v2974
        %v2976 = vpop.f32.mrb[0].mxu0
        %v2977 = vadd.f32 0.0, %v2976
        %v2978 = vpop.f32.mrb[0].mxu0
        %v2979 = vpop.f32.mrb[0].mxu0
        %2980 = vdwg.mxu0
        %2981 = vmatprep.subr.bf16.mxu0 0
        %2982 = vmatpush1.bf16.msra.mxu0 %v2938
        %2983 = vmatprep.subr.bf16.mxu0 0
        %2984 = vmatpush1.bf16.msra.mxu0 0
        %2985 = vmatprep.subr.bf16.mxu0 0
        %2986 = vmatpush1.bf16.msra.mxu0 0
        %2987 = vmatprep.subr.bf16.mxu0 0
        %2988 = vmatpush1.bf16.msra.mxu0 0
        %2989 = vmatprep.subr.bf16.mxu0 0
        %2990 = vmatpush1.bf16.msra.mxu0 0
        %2991 = vmatprep.subr.bf16.mxu0 0
        %2992 = vmatpush1.bf16.msra.mxu0 0
        %2993 = vmatprep.subr.bf16.mxu0 0
        %2994 = vmatpush1.bf16.msra.mxu0 0
        %2995 = vmatprep.subr.bf16.mxu0 0
        %2996 = vmatpush1.bf16.msra.mxu0 0
        %2997 = vmatprep.subr.bf16.mxu0 0
        %2998 = vmatpush1.bf16.msra.mxu0 0
        %2999 = vmatprep.subr.bf16.mxu0 0
        %3000 = vmatpush1.bf16.msra.mxu0 0
        %3001 = vmatprep.subr.bf16.mxu0 0
        %3002 = vmatpush1.bf16.msra.mxu0 0
        %3003 = vmatprep.subr.bf16.mxu0 0
        %3004 = vmatpush1.bf16.msra.mxu0 0
        %3005 = vmatprep.subr.bf16.mxu0 0
        %3006 = vmatpush1.bf16.msra.mxu0 0
        %3007 = vmatprep.subr.bf16.mxu0 0
        %3008 = vmatpush1.bf16.msra.mxu0 0
        %3009 = vmatprep.subr.bf16.mxu0 0
        %3010 = vmatpush1.bf16.msra.mxu0 0
        %3011 = vmatprep.subr.bf16.mxu0 0
        %3012 = vmatpush1.bf16.msra.mxu0 0
        %3013 = vmatprep.mubr.bf16.mxu0 0
        %3014 = vmatmul.mubr.bf16.gmra.mrb[0].mxu0 %v2929
        %v3015 = vpop.f32.mrb[0].mxu0
        %v3016 = vadd.f32 0.0, %v3015
        %v3017 = vpop.f32.mrb[0].mxu0
        %v3018 = vpop.f32.mrb[0].mxu0
        %v3019 = vpop.f32.mrb[0].mxu0
        %3020 = vdwg.mxu0
        %v3021 = vadd.f32 %v2912, %v2975
        %v3022 = vadd.f32 %v2913, %v2977
        %v3023 = vadd.f32 %v2914, %v3016
        %v3024 = vld [vmem:[#allocation3 + $0x4] sm:$0xff]
        %v3025 = vld [vmem:[#allocation3 + $0xc] sm:$0xf]
        %s3026 = scalar_lea.vmem [#allocation13], 16
        %v3027 = vld [vmem:[%s3026] sm:$0xf]
        %v3030 = vunpack.c.l.b16 %v3024
        %v3031 = vunpack.c.h.b16 %v3024
        %v3032 = vunpack.c.l.b16 %v3025
        %v3033 = vpack.c.b16 %v3030, %v3030
        %v3034 = vpack.c.b16 %v3031, %v3031
        %v3035 = vpack.c.b16 %v3032, %v3032
        %v3037 = vsel %vm546, %v3027, 0
        %v3040 = vsel %vm550, %v3033, 0
        %v3043 = vsel %vm550, %v3034, 0
        %v3046 = vsel %vm550, %v3035, 0
        %3048 = vmatprep.subr.bf16.mxu0 %v3043
        %3049 = vmatpush1.bf16.msra.mxu0 %v3040
        %3050 = vmatprep.subr.bf16.mxu0 0
        %3051 = vmatpush1.bf16.msra.mxu0 0
        %3052 = vmatprep.subr.bf16.mxu0 0
        %3053 = vmatpush1.bf16.msra.mxu0 0
        %3054 = vmatprep.subr.bf16.mxu0 0
        %3055 = vmatpush1.bf16.msra.mxu0 0
        %3056 = vmatprep.subr.bf16.mxu0 0
        %3057 = vmatpush1.bf16.msra.mxu0 0
        %3058 = vmatprep.subr.bf16.mxu0 0
        %3059 = vmatpush1.bf16.msra.mxu0 0
        %3060 = vmatprep.subr.bf16.mxu0 0
        %3061 = vmatpush1.bf16.msra.mxu0 0
        %3062 = vmatprep.subr.bf16.mxu0 0
        %3063 = vmatpush1.bf16.msra.mxu0 0
        %3064 = vmatprep.subr.bf16.mxu0 0
        %3065 = vmatpush1.bf16.msra.mxu0 0
        %3066 = vmatprep.subr.bf16.mxu0 0
        %3067 = vmatpush1.bf16.msra.mxu0 0
        %3068 = vmatprep.subr.bf16.mxu0 0
        %3069 = vmatpush1.bf16.msra.mxu0 0
        %3070 = vmatprep.subr.bf16.mxu0 0
        %3071 = vmatpush1.bf16.msra.mxu0 0
        %3072 = vmatprep.subr.bf16.mxu0 0
        %3073 = vmatpush1.bf16.msra.mxu0 0
        %3074 = vmatprep.subr.bf16.mxu0 0
        %3075 = vmatpush1.bf16.msra.mxu0 0
        %3076 = vmatprep.subr.bf16.mxu0 0
        %3077 = vmatpush1.bf16.msra.mxu0 0
        %3078 = vmatprep.subr.bf16.mxu0 0
        %3079 = vmatpush1.bf16.msra.mxu0 0
        %3080 = vmatprep.mubr.bf16.mxu0 0
        %3081 = vmatmul.mubr.bf16.gmra.mrb[0].mxu0 %v3037
        %v3082 = vpop.f32.mrb[0].mxu0
        %v3083 = vadd.f32 0.0, %v3082
        %v3084 = vpop.f32.mrb[0].mxu0
        %v3085 = vadd.f32 0.0, %v3084
        %v3086 = vpop.f32.mrb[0].mxu0
        %v3087 = vpop.f32.mrb[0].mxu0
        %3088 = vdwg.mxu0
        %3089 = vmatprep.subr.bf16.mxu0 0
        %3090 = vmatpush1.bf16.msra.mxu0 %v3046
        %3091 = vmatprep.subr.bf16.mxu0 0
        %3092 = vmatpush1.bf16.msra.mxu0 0
        %3093 = vmatprep.subr.bf16.mxu0 0
        %3094 = vmatpush1.bf16.msra.mxu0 0
        %3095 = vmatprep.subr.bf16.mxu0 0
        %3096 = vmatpush1.bf16.msra.mxu0 0
        %3097 = vmatprep.subr.bf16.mxu0 0
        %3098 = vmatpush1.bf16.msra.mxu0 0
        %3099 = vmatprep.subr.bf16.mxu0 0
        %3100 = vmatpush1.bf16.msra.mxu0 0
        %3101 = vmatprep.subr.bf16.mxu0 0
        %3102 = vmatpush1.bf16.msra.mxu0 0
        %3103 = vmatprep.subr.bf16.mxu0 0
        %3104 = vmatpush1.bf16.msra.mxu0 0
        %3105 = vmatprep.subr.bf16.mxu0 0
        %3106 = vmatpush1.bf16.msra.mxu0 0
        %3107 = vmatprep.subr.bf16.mxu0 0
        %3108 = vmatpush1.bf16.msra.mxu0 0
        %3109 = vmatprep.subr.bf16.mxu0 0
        %3110 = vmatpush1.bf16.msra.mxu0 0
        %3111 = vmatprep.subr.bf16.mxu0 0
        %3112 = vmatpush1.bf16.msra.mxu0 0
        %3113 = vmatprep.subr.bf16.mxu0 0
        %3114 = vmatpush1.bf16.msra.mxu0 0
        %3115 = vmatprep.subr.bf16.mxu0 0
        %3116 = vmatpush1.bf16.msra.mxu0 0
        %3117 = vmatprep.subr.bf16.mxu0 0
        %3118 = vmatpush1.bf16.msra.mxu0 0
        %3119 = vmatprep.subr.bf16.mxu0 0
        %3120 = vmatpush1.bf16.msra.mxu0 0
        %3121 = vmatprep.mubr.bf16.mxu0 0
        %3122 = vmatmul.mubr.bf16.gmra.mrb[0].mxu0 %v3037
        %v3123 = vpop.f32.mrb[0].mxu0
        %v3124 = vadd.f32 0.0, %v3123
        %v3125 = vpop.f32.mrb[0].mxu0
        %v3126 = vpop.f32.mrb[0].mxu0
        %v3127 = vpop.f32.mrb[0].mxu0
        %3128 = vdwg.mxu0
        %v3129 = vadd.f32 %v3021, %v3083
        %v3130 = vadd.f32 %v3022, %v3085
        %v3131 = vadd.f32 %v3023, %v3124
        %v3132 = vld [vmem:[#allocation3 + $0x4] sm:$0xff]
        %v3133 = vld [vmem:[#allocation3 + $0xc] sm:$0xff]
        %s3134 = scalar_lea.vmem [#allocation13], 20
        %v3135 = vld [vmem:[%s3134] sm:$0xf]
        %v3138 = vunpack.c.l.b16 %v3132
        %v3139 = vunpack.c.h.b16 %v3132
        %v3140 = vunpack.c.l.b16 %v3133
        %v3141 = vunpack.c.h.b16 %v3133
        %v3142 = vpack.c.b16 %v3138, %v3138
        %v3143 = vpack.c.b16 %v3139, %v3139
        %v3144 = vpack.c.b16 %v3140, %v3140
        %v3145 = vpack.c.b16 %v3141, %v3141
        %3146 = vrot.lane.b32.xlu0 %v3142, 127
        %v3147 = vpop.permute.xlu0 %3146
        %3148 = vrot.lane.b32.xlu0 %v3143, 127
        %v3149 = vpop.permute.xlu0 %3148
        %3150 = vrot.lane.b32.xlu0 %v3144, 127
        %v3151 = vpop.permute.xlu0 %3150
        %3152 = vrot.lane.b32.xlu0 %v3145, 127
        %v3153 = vpop.permute.xlu0 %3152
        %v3154 = vsel %vm1096, %v3147, %v3149
        %v3155 = vsel %vm1096, %v3149, %v3151
        %v3156 = vsel %vm1096, %v3151, %v3153
        %v3158 = vsel %vm546, %v3135, 0
        %v3161 = vsel %vm550, %v3154, 0
        %v3164 = vsel %vm550, %v3155, 0
        %v3167 = vsel %vm550, %v3156, 0
        %3169 = vmatprep.subr.bf16.mxu0 %v3164
        %3170 = vmatpush1.bf16.msra.mxu0 %v3161
        %3171 = vmatprep.subr.bf16.mxu0 0
        %3172 = vmatpush1.bf16.msra.mxu0 0
        %3173 = vmatprep.subr.bf16.mxu0 0
        %3174 = vmatpush1.bf16.msra.mxu0 0
        %3175 = vmatprep.subr.bf16.mxu0 0
        %3176 = vmatpush1.bf16.msra.mxu0 0
        %3177 = vmatprep.subr.bf16.mxu0 0
        %3178 = vmatpush1.bf16.msra.mxu0 0
        %3179 = vmatprep.subr.bf16.mxu0 0
        %3180 = vmatpush1.bf16.msra.mxu0 0
        %3181 = vmatprep.subr.bf16.mxu0 0
        %3182 = vmatpush1.bf16.msra.mxu0 0
        %3183 = vmatprep.subr.bf16.mxu0 0
        %3184 = vmatpush1.bf16.msra.mxu0 0
        %3185 = vmatprep.subr.bf16.mxu0 0
        %3186 = vmatpush1.bf16.msra.mxu0 0
        %3187 = vmatprep.subr.bf16.mxu0 0
        %3188 = vmatpush1.bf16.msra.mxu0 0
        %3189 = vmatprep.subr.bf16.mxu0 0
        %3190 = vmatpush1.bf16.msra.mxu0 0
        %3191 = vmatprep.subr.bf16.mxu0 0
        %3192 = vmatpush1.bf16.msra.mxu0 0
        %3193 = vmatprep.subr.bf16.mxu0 0
        %3194 = vmatpush1.bf16.msra.mxu0 0
        %3195 = vmatprep.subr.bf16.mxu0 0
        %3196 = vmatpush1.bf16.msra.mxu0 0
        %3197 = vmatprep.subr.bf16.mxu0 0
        %3198 = vmatpush1.bf16.msra.mxu0 0
        %3199 = vmatprep.subr.bf16.mxu0 0
        %3200 = vmatpush1.bf16.msra.mxu0 0
        %3201 = vmatprep.mubr.bf16.mxu0 0
        %3202 = vmatmul.mubr.bf16.gmra.mrb[0].mxu0 %v3158
        %v3203 = vpop.f32.mrb[0].mxu0
        %v3204 = vadd.f32 0.0, %v3203
        %v3205 = vpop.f32.mrb[0].mxu0
        %v3206 = vadd.f32 0.0, %v3205
        %v3207 = vpop.f32.mrb[0].mxu0
        %v3208 = vpop.f32.mrb[0].mxu0
        %3209 = vdwg.mxu0
        %3210 = vmatprep.subr.bf16.mxu0 0
        %3211 = vmatpush1.bf16.msra.mxu0 %v3167
        %3212 = vmatprep.subr.bf16.mxu0 0
        %3213 = vmatpush1.bf16.msra.mxu0 0
        %3214 = vmatprep.subr.bf16.mxu0 0
        %3215 = vmatpush1.bf16.msra.mxu0 0
        %3216 = vmatprep.subr.bf16.mxu0 0
        %3217 = vmatpush1.bf16.msra.mxu0 0
        %3218 = vmatprep.subr.bf16.mxu0 0
        %3219 = vmatpush1.bf16.msra.mxu0 0
        %3220 = vmatprep.subr.bf16.mxu0 0
        %3221 = vmatpush1.bf16.msra.mxu0 0
        %3222 = vmatprep.subr.bf16.mxu0 0
        %3223 = vmatpush1.bf16.msra.mxu0 0
        %3224 = vmatprep.subr.bf16.mxu0 0
        %3225 = vmatpush1.bf16.msra.mxu0 0
        %3226 = vmatprep.subr.bf16.mxu0 0
        %3227 = vmatpush1.bf16.msra.mxu0 0
        %3228 = vmatprep.subr.bf16.mxu0 0
        %3229 = vmatpush1.bf16.msra.mxu0 0
        %3230 = vmatprep.subr.bf16.mxu0 0
        %3231 = vmatpush1.bf16.msra.mxu0 0
        %3232 = vmatprep.subr.bf16.mxu0 0
        %3233 = vmatpush1.bf16.msra.mxu0 0
        %3234 = vmatprep.subr.bf16.mxu0 0
        %3235 = vmatpush1.bf16.msra.mxu0 0
        %3236 = vmatprep.subr.bf16.mxu0 0
        %3237 = vmatpush1.bf16.msra.mxu0 0
        %3238 = vmatprep.subr.bf16.mxu0 0
        %3239 = vmatpush1.bf16.msra.mxu0 0
        %3240 = vmatprep.subr.bf16.mxu0 0
        %3241 = vmatpush1.bf16.msra.mxu0 0
        %3242 = vmatprep.mubr.bf16.mxu0 0
        %3243 = vmatmul.mubr.bf16.gmra.mrb[0].mxu0 %v3158
        %v3244 = vpop.f32.mrb[0].mxu0
        %v3245 = vadd.f32 0.0, %v3244
        %v3246 = vpop.f32.mrb[0].mxu0
        %v3247 = vpop.f32.mrb[0].mxu0
        %v3248 = vpop.f32.mrb[0].mxu0
        %3249 = vdwg.mxu0
        %v3250 = vadd.f32 %v3129, %v3204
        %v3251 = vadd.f32 %v3130, %v3206
        %v3252 = vadd.f32 %v3131, %v3245
        %s3253 = scalar_lea.vmem [#allocation13], 24
        %v3254 = vld [vmem:[%s3253] sm:$0xf]
        %3255 = vrot.lane.b32.xlu0 %v3142, 111
        %v3256 = vpop.permute.xlu0 %3255
        %3257 = vrot.lane.b32.xlu0 %v3143, 111
        %v3258 = vpop.permute.xlu0 %3257
        %3259 = vrot.lane.b32.xlu0 %v3144, 111
        %v3260 = vpop.permute.xlu0 %3259
        %3261 = vrot.lane.b32.xlu0 %v3145, 111
        %v3262 = vpop.permute.xlu0 %3261
        %v3263 = vsel %vm1206, %v3256, %v3258
        %v3264 = vsel %vm1206, %v3258, %v3260
        %v3265 = vsel %vm1206, %v3260, %v3262
        %v3267 = vsel %vm546, %v3254, 0
        %v3270 = vsel %vm550, %v3263, 0
        %v3273 = vsel %vm550, %v3264, 0
        %v3276 = vsel %vm550, %v3265, 0
        %3278 = vmatprep.subr.bf16.mxu0 %v3273
        %3279 = vmatpush1.bf16.msra.mxu0 %v3270
        %3280 = vmatprep.subr.bf16.mxu0 0
        %3281 = vmatpush1.bf16.msra.mxu0 0
        %3282 = vmatprep.subr.bf16.mxu0 0
        %3283 = vmatpush1.bf16.msra.mxu0 0
        %3284 = vmatprep.subr.bf16.mxu0 0
        %3285 = vmatpush1.bf16.msra.mxu0 0
        %3286 = vmatprep.subr.bf16.mxu0 0
        %3287 = vmatpush1.bf16.msra.mxu0 0
        %3288 = vmatprep.subr.bf16.mxu0 0
        %3289 = vmatpush1.bf16.msra.mxu0 0
        %3290 = vmatprep.subr.bf16.mxu0 0
        %3291 = vmatpush1.bf16.msra.mxu0 0
        %3292 = vmatprep.subr.bf16.mxu0 0
        %3293 = vmatpush1.bf16.msra.mxu0 0
        %3294 = vmatprep.subr.bf16.mxu0 0
        %3295 = vmatpush1.bf16.msra.mxu0 0
        %3296 = vmatprep.subr.bf16.mxu0 0
        %3297 = vmatpush1.bf16.msra.mxu0 0
        %3298 = vmatprep.subr.bf16.mxu0 0
        %3299 = vmatpush1.bf16.msra.mxu0 0
        %3300 = vmatprep.subr.bf16.mxu0 0
        %3301 = vmatpush1.bf16.msra.mxu0 0
        %3302 = vmatprep.subr.bf16.mxu0 0
        %3303 = vmatpush1.bf16.msra.mxu0 0
        %3304 = vmatprep.subr.bf16.mxu0 0
        %3305 = vmatpush1.bf16.msra.mxu0 0
        %3306 = vmatprep.subr.bf16.mxu0 0
        %3307 = vmatpush1.bf16.msra.mxu0 0
        %3308 = vmatprep.subr.bf16.mxu0 0
        %3309 = vmatpush1.bf16.msra.mxu0 0
        %3310 = vmatprep.mubr.bf16.mxu0 0
        %3311 = vmatmul.mubr.bf16.gmra.mrb[0].mxu0 %v3267
        %v3312 = vpop.f32.mrb[0].mxu0
        %v3313 = vadd.f32 0.0, %v3312
        %v3314 = vpop.f32.mrb[0].mxu0
        %v3315 = vadd.f32 0.0, %v3314
        %v3316 = vpop.f32.mrb[0].mxu0
        %v3317 = vpop.f32.mrb[0].mxu0
        %3318 = vdwg.mxu0
        %3319 = vmatprep.subr.bf16.mxu0 0
        %3320 = vmatpush1.bf16.msra.mxu0 %v3276
        %3321 = vmatprep.subr.bf16.mxu0 0
        %3322 = vmatpush1.bf16.msra.mxu0 0
        %3323 = vmatprep.subr.bf16.mxu0 0
        %3324 = vmatpush1.bf16.msra.mxu0 0
        %3325 = vmatprep.subr.bf16.mxu0 0
        %3326 = vmatpush1.bf16.msra.mxu0 0
        %3327 = vmatprep.subr.bf16.mxu0 0
        %3328 = vmatpush1.bf16.msra.mxu0 0
        %3329 = vmatprep.subr.bf16.mxu0 0
        %3330 = vmatpush1.bf16.msra.mxu0 0
        %3331 = vmatprep.subr.bf16.mxu0 0
        %3332 = vmatpush1.bf16.msra.mxu0 0
        %3333 = vmatprep.subr.bf16.mxu0 0
        %3334 = vmatpush1.bf16.msra.mxu0 0
        %3335 = vmatprep.subr.bf16.mxu0 0
        %3336 = vmatpush1.bf16.msra.mxu0 0
        %3337 = vmatprep.subr.bf16.mxu0 0
        %3338 = vmatpush1.bf16.msra.mxu0 0
        %3339 = vmatprep.subr.bf16.mxu0 0
        %3340 = vmatpush1.bf16.msra.mxu0 0
        %3341 = vmatprep.subr.bf16.mxu0 0
        %3342 = vmatpush1.bf16.msra.mxu0 0
        %3343 = vmatprep.subr.bf16.mxu0 0
        %3344 = vmatpush1.bf16.msra.mxu0 0
        %3345 = vmatprep.subr.bf16.mxu0 0
        %3346 = vmatpush1.bf16.msra.mxu0 0
        %3347 = vmatprep.subr.bf16.mxu0 0
        %3348 = vmatpush1.bf16.msra.mxu0 0
        %3349 = vmatprep.subr.bf16.mxu0 0
        %3350 = vmatpush1.bf16.msra.mxu0 0
        %3351 = vmatprep.mubr.bf16.mxu0 0
        %3352 = vmatmul.mubr.bf16.gmra.mrb[0].mxu0 %v3267
        %v3353 = vpop.f32.mrb[0].mxu0
        %v3354 = vadd.f32 0.0, %v3353
        %v3355 = vpop.f32.mrb[0].mxu0
        %v3356 = vpop.f32.mrb[0].mxu0
        %v3357 = vpop.f32.mrb[0].mxu0
        %3358 = vdwg.mxu0
        %v3359 = vadd.f32 %v3250, %v3313
        %v3360 = vadd.f32 %v3251, %v3315
        %v3361 = vadd.f32 %v3252, %v3354
        %s3362 = scalar_lea.vmem [#allocation13], 28
        %v3363 = vld [vmem:[%s3362] sm:$0xf]
        %3364 = vrot.lane.b32.xlu0 %v3142, 110
        %v3365 = vpop.permute.xlu0 %3364
        %3366 = vrot.lane.b32.xlu0 %v3143, 110
        %v3367 = vpop.permute.xlu0 %3366
        %3368 = vrot.lane.b32.xlu0 %v3144, 110
        %v3369 = vpop.permute.xlu0 %3368
        %3370 = vrot.lane.b32.xlu0 %v3145, 110
        %v3371 = vpop.permute.xlu0 %3370
        %v3372 = vsel %vm1316, %v3365, %v3367
        %v3373 = vsel %vm1316, %v3367, %v3369
        %v3374 = vsel %vm1316, %v3369, %v3371
        %v3376 = vsel %vm546, %v3363, 0
        %v3379 = vsel %vm550, %v3372, 0
        %v3382 = vsel %vm550, %v3373, 0
        %v3385 = vsel %vm550, %v3374, 0
        %3387 = vmatprep.subr.bf16.mxu0 %v3382
        %3388 = vmatpush1.bf16.msra.mxu0 %v3379
        %3389 = vmatprep.subr.bf16.mxu0 0
        %3390 = vmatpush1.bf16.msra.mxu0 0
        %3391 = vmatprep.subr.bf16.mxu0 0
        %3392 = vmatpush1.bf16.msra.mxu0 0
        %3393 = vmatprep.subr.bf16.mxu0 0
        %3394 = vmatpush1.bf16.msra.mxu0 0
        %3395 = vmatprep.subr.bf16.mxu0 0
        %3396 = vmatpush1.bf16.msra.mxu0 0
        %3397 = vmatprep.subr.bf16.mxu0 0
        %3398 = vmatpush1.bf16.msra.mxu0 0
        %3399 = vmatprep.subr.bf16.mxu0 0
        %3400 = vmatpush1.bf16.msra.mxu0 0
        %3401 = vmatprep.subr.bf16.mxu0 0
        %3402 = vmatpush1.bf16.msra.mxu0 0
        %3403 = vmatprep.subr.bf16.mxu0 0
        %3404 = vmatpush1.bf16.msra.mxu0 0
        %3405 = vmatprep.subr.bf16.mxu0 0
        %3406 = vmatpush1.bf16.msra.mxu0 0
        %3407 = vmatprep.subr.bf16.mxu0 0
        %3408 = vmatpush1.bf16.msra.mxu0 0
        %3409 = vmatprep.subr.bf16.mxu0 0
        %3410 = vmatpush1.bf16.msra.mxu0 0
        %3411 = vmatprep.subr.bf16.mxu0 0
        %3412 = vmatpush1.bf16.msra.mxu0 0
        %3413 = vmatprep.subr.bf16.mxu0 0
        %3414 = vmatpush1.bf16.msra.mxu0 0
        %3415 = vmatprep.subr.bf16.mxu0 0
        %3416 = vmatpush1.bf16.msra.mxu0 0
        %3417 = vmatprep.subr.bf16.mxu0 0
        %3418 = vmatpush1.bf16.msra.mxu0 0
        %3419 = vmatprep.mubr.bf16.mxu0 0
        %3420 = vmatmul.mubr.bf16.gmra.mrb[0].mxu0 %v3376
        %v3421 = vpop.f32.mrb[0].mxu0
        %v3422 = vadd.f32 0.0, %v3421
        %v3423 = vpop.f32.mrb[0].mxu0
        %v3424 = vadd.f32 0.0, %v3423
        %v3425 = vpop.f32.mrb[0].mxu0
        %v3426 = vpop.f32.mrb[0].mxu0
        %3427 = vdwg.mxu0
        %3428 = vmatprep.subr.bf16.mxu0 0
        %3429 = vmatpush1.bf16.msra.mxu0 %v3385
        %3430 = vmatprep.subr.bf16.mxu0 0
        %3431 = vmatpush1.bf16.msra.mxu0 0
        %3432 = vmatprep.subr.bf16.mxu0 0
        %3433 = vmatpush1.bf16.msra.mxu0 0
        %3434 = vmatprep.subr.bf16.mxu0 0
        %3435 = vmatpush1.bf16.msra.mxu0 0
        %3436 = vmatprep.subr.bf16.mxu0 0
        %3437 = vmatpush1.bf16.msra.mxu0 0
        %3438 = vmatprep.subr.bf16.mxu0 0
        %3439 = vmatpush1.bf16.msra.mxu0 0
        %3440 = vmatprep.subr.bf16.mxu0 0
        %3441 = vmatpush1.bf16.msra.mxu0 0
        %3442 = vmatprep.subr.bf16.mxu0 0
        %3443 = vmatpush1.bf16.msra.mxu0 0
        %3444 = vmatprep.subr.bf16.mxu0 0
        %3445 = vmatpush1.bf16.msra.mxu0 0
        %3446 = vmatprep.subr.bf16.mxu0 0
        %3447 = vmatpush1.bf16.msra.mxu0 0
        %3448 = vmatprep.subr.bf16.mxu0 0
        %3449 = vmatpush1.bf16.msra.mxu0 0
        %3450 = vmatprep.subr.bf16.mxu0 0
        %3451 = vmatpush1.bf16.msra.mxu0 0
        %3452 = vmatprep.subr.bf16.mxu0 0
        %3453 = vmatpush1.bf16.msra.mxu0 0
        %3454 = vmatprep.subr.bf16.mxu0 0
        %3455 = vmatpush1.bf16.msra.mxu0 0
        %3456 = vmatprep.subr.bf16.mxu0 0
        %3457 = vmatpush1.bf16.msra.mxu0 0
        %3458 = vmatprep.subr.bf16.mxu0 0
        %3459 = vmatpush1.bf16.msra.mxu0 0
        %3460 = vmatprep.mubr.bf16.mxu0 0
        %3461 = vmatmul.mubr.bf16.gmra.mrb[0].mxu0 %v3376
        %v3462 = vpop.f32.mrb[0].mxu0
        %v3463 = vadd.f32 0.0, %v3462
        %v3464 = vpop.f32.mrb[0].mxu0
        %v3465 = vpop.f32.mrb[0].mxu0
        %v3466 = vpop.f32.mrb[0].mxu0
        %3467 = vdwg.mxu0
        %v3468 = vadd.f32 %v3359, %v3422
        %v3469 = vadd.f32 %v3360, %v3424
        %v3470 = vadd.f32 %v3361, %v3463
        %s3471 = scalar_lea.vmem [#allocation13], 32
        %v3472 = vld [vmem:[%s3471] sm:$0xf]
        %3473 = vrot.lane.b32.xlu0 %v3142, 109
        %v3474 = vpop.permute.xlu0 %3473
        %3475 = vrot.lane.b32.xlu0 %v3143, 109
        %v3476 = vpop.permute.xlu0 %3475
        %3477 = vrot.lane.b32.xlu0 %v3144, 109
        %v3478 = vpop.permute.xlu0 %3477
        %3479 = vrot.lane.b32.xlu0 %v3145, 109
        %v3480 = vpop.permute.xlu0 %3479
        %v3481 = vsel %vm1426, %v3474, %v3476
        %v3482 = vsel %vm1426, %v3476, %v3478
        %v3483 = vsel %vm1426, %v3478, %v3480
        %v3485 = vsel %vm546, %v3472, 0
        %v3488 = vsel %vm550, %v3481, 0
        %v3491 = vsel %vm550, %v3482, 0
        %v3494 = vsel %vm550, %v3483, 0
        %3496 = vmatprep.subr.bf16.mxu0 %v3491
        %3497 = vmatpush1.bf16.msra.mxu0 %v3488
        %3498 = vmatprep.subr.bf16.mxu0 0
        %3499 = vmatpush1.bf16.msra.mxu0 0
        %3500 = vmatprep.subr.bf16.mxu0 0
        %3501 = vmatpush1.bf16.msra.mxu0 0
        %3502 = vmatprep.subr.bf16.mxu0 0
        %3503 = vmatpush1.bf16.msra.mxu0 0
        %3504 = vmatprep.subr.bf16.mxu0 0
        %3505 = vmatpush1.bf16.msra.mxu0 0
        %3506 = vmatprep.subr.bf16.mxu0 0
        %3507 = vmatpush1.bf16.msra.mxu0 0
        %3508 = vmatprep.subr.bf16.mxu0 0
        %3509 = vmatpush1.bf16.msra.mxu0 0
        %3510 = vmatprep.subr.bf16.mxu0 0
        %3511 = vmatpush1.bf16.msra.mxu0 0
        %3512 = vmatprep.subr.bf16.mxu0 0
        %3513 = vmatpush1.bf16.msra.mxu0 0
        %3514 = vmatprep.subr.bf16.mxu0 0
        %3515 = vmatpush1.bf16.msra.mxu0 0
        %3516 = vmatprep.subr.bf16.mxu0 0
        %3517 = vmatpush1.bf16.msra.mxu0 0
        %3518 = vmatprep.subr.bf16.mxu0 0
        %3519 = vmatpush1.bf16.msra.mxu0 0
        %3520 = vmatprep.subr.bf16.mxu0 0
        %3521 = vmatpush1.bf16.msra.mxu0 0
        %3522 = vmatprep.subr.bf16.mxu0 0
        %3523 = vmatpush1.bf16.msra.mxu0 0
        %3524 = vmatprep.subr.bf16.mxu0 0
        %3525 = vmatpush1.bf16.msra.mxu0 0
        %3526 = vmatprep.subr.bf16.mxu0 0
        %3527 = vmatpush1.bf16.msra.mxu0 0
        %3528 = vmatprep.mubr.bf16.mxu0 0
        %3529 = vmatmul.mubr.bf16.gmra.mrb[0].mxu0 %v3485
        %v3530 = vpop.f32.mrb[0].mxu0
        %v3531 = vadd.f32 0.0, %v3530
        %v3532 = vpop.f32.mrb[0].mxu0
        %v3533 = vadd.f32 0.0, %v3532
        %v3534 = vpop.f32.mrb[0].mxu0
        %v3535 = vpop.f32.mrb[0].mxu0
        %3536 = vdwg.mxu0
        %3537 = vmatprep.subr.bf16.mxu0 0
        %3538 = vmatpush1.bf16.msra.mxu0 %v3494
        %3539 = vmatprep.subr.bf16.mxu0 0
        %3540 = vmatpush1.bf16.msra.mxu0 0
        %3541 = vmatprep.subr.bf16.mxu0 0
        %3542 = vmatpush1.bf16.msra.mxu0 0
        %3543 = vmatprep.subr.bf16.mxu0 0
        %3544 = vmatpush1.bf16.msra.mxu0 0
        %3545 = vmatprep.subr.bf16.mxu0 0
        %3546 = vmatpush1.bf16.msra.mxu0 0
        %3547 = vmatprep.subr.bf16.mxu0 0
        %3548 = vmatpush1.bf16.msra.mxu0 0
        %3549 = vmatprep.subr.bf16.mxu0 0
        %3550 = vmatpush1.bf16.msra.mxu0 0
        %3551 = vmatprep.subr.bf16.mxu0 0
        %3552 = vmatpush1.bf16.msra.mxu0 0
        %3553 = vmatprep.subr.bf16.mxu0 0
        %3554 = vmatpush1.bf16.msra.mxu0 0
        %3555 = vmatprep.subr.bf16.mxu0 0
        %3556 = vmatpush1.bf16.msra.mxu0 0
        %3557 = vmatprep.subr.bf16.mxu0 0
        %3558 = vmatpush1.bf16.msra.mxu0 0
        %3559 = vmatprep.subr.bf16.mxu0 0
        %3560 = vmatpush1.bf16.msra.mxu0 0
        %3561 = vmatprep.subr.bf16.mxu0 0
        %3562 = vmatpush1.bf16.msra.mxu0 0
        %3563 = vmatprep.subr.bf16.mxu0 0
        %3564 = vmatpush1.bf16.msra.mxu0 0
        %3565 = vmatprep.subr.bf16.mxu0 0
        %3566 = vmatpush1.bf16.msra.mxu0 0
        %3567 = vmatprep.subr.bf16.mxu0 0
        %3568 = vmatpush1.bf16.msra.mxu0 0
        %3569 = vmatprep.mubr.bf16.mxu0 0
        %3570 = vmatmul.mubr.bf16.gmra.mrb[0].mxu0 %v3485
        %v3571 = vpop.f32.mrb[0].mxu0
        %v3572 = vadd.f32 0.0, %v3571
        %v3573 = vpop.f32.mrb[0].mxu0
        %v3574 = vpop.f32.mrb[0].mxu0
        %v3575 = vpop.f32.mrb[0].mxu0
        %3576 = vdwg.mxu0
        %v3577 = vadd.f32 %v3468, %v3531
        %v3578 = vadd.f32 %v3469, %v3533
        %v3579 = vadd.f32 %v3470, %v3572
        %v3580 = vld [vmem:[#allocation15] sm:$0xff]
        %3582 = vset.pattern.permute.xlu0 0
        %3583 = vperm.xlu0 %3582, %v3580
        %v3584 = vpop.permute.xlu0 %3583
        %v3586 = vadd.f32 %v3577, %v3584
        %v3587 = vadd.f32 %v3578, %v3584
        %v3588 = vadd.f32 %v3579, %v3584
        %v3589 = vmul.f32 %v3586, %v507
        %v3590 = vmul.f32 %v3587, %v511
        %v3591 = vmul.f32 %v3588, %v515
        %v3592 = vpack.c.bf16 %v3589, %v3589
        %v3593 = vpack.c.bf16 %v3590, %v3590
        %v3594 = vpack.c.bf16 %v3591, %v3591
        %v3598 = vunpack.c.l.b16 %v3592
        %v3599 = vunpack.c.l.b16 %v3593
        %v3600 = vunpack.c.l.b16 %v3594
        %v3601 = vpack.c.b16 %v3599, %v3598
        %v3602 = vpack.c.b16 %v3600, %v3600
        %3605 = vst [vmem:[#allocation2 + $0x4] sm:$0xff] %v3601
        %3606 = vst [vmem:[#allocation2 + $0xc] sm:$0xf] %v3602
        %v3607 = vld [vmem:[#allocation2] sm:$0xff]
        %v3608 = vld [vmem:[#allocation2 + $0x8] sm:$0xff]
        %v3609 = vld [vmem:[#allocation16] sm:$0xf]
        %s3610 = scalar_lea.vmem [#allocation16], 4
        %v3611 = vld [vmem:[%s3610] sm:$0xf]
        %v3614 = vunpack.c.l.b16 %v3607
        %v3615 = vunpack.c.h.b16 %v3607
        %v3616 = vunpack.c.l.b16 %v3608
        %v3617 = vunpack.c.h.b16 %v3608
        %v3618 = vpack.c.b16 %v3614, %v3614
        %v3619 = vpack.c.b16 %v3615, %v3615
        %v3620 = vpack.c.b16 %v3616, %v3616
        %v3621 = vpack.c.b16 %v3617, %v3617
        %3622 = vrot.lane.b32.xlu0 %v3618, 18
        %v3623 = vpop.permute.xlu0 %3622
        %3624 = vrot.lane.b32.xlu0 %v3619, 18
        %v3625 = vpop.permute.xlu0 %3624
        %3626 = vrot.lane.b32.xlu0 %v3620, 18
        %v3627 = vpop.permute.xlu0 %3626
        %3628 = vrot.lane.b32.xlu0 %v3621, 18
        %v3629 = vpop.permute.xlu0 %3628
        %v3630 = vsel %vm542, %v3623, %v3625
        %v3631 = vsel %vm542, %v3625, %v3627
        %v3632 = vsel %vm542, %v3627, %v3629
        %v3634 = vsel %vm546, %v3611, 0
        %v3637 = vsel %vm550, %v3630, 0
        %v3640 = vsel %vm550, %v3631, 0
        %v3643 = vsel %vm550, %v3632, 0
        %3645 = vmatprep.subr.bf16.mxu0 %v3640
        %3646 = vmatpush1.bf16.msra.mxu0 %v3637
        %3647 = vmatprep.subr.bf16.mxu0 0
        %3648 = vmatpush1.bf16.msra.mxu0 0
        %3649 = vmatprep.subr.bf16.mxu0 0
        %3650 = vmatpush1.bf16.msra.mxu0 0
        %3651 = vmatprep.subr.bf16.mxu0 0
        %3652 = vmatpush1.bf16.msra.mxu0 0
        %3653 = vmatprep.subr.bf16.mxu0 0
        %3654 = vmatpush1.bf16.msra.mxu0 0
        %3655 = vmatprep.subr.bf16.mxu0 0
        %3656 = vmatpush1.bf16.msra.mxu0 0
        %3657 = vmatprep.subr.bf16.mxu0 0
        %3658 = vmatpush1.bf16.msra.mxu0 0
        %3659 = vmatprep.subr.bf16.mxu0 0
        %3660 = vmatpush1.bf16.msra.mxu0 0
        %3661 = vmatprep.subr.bf16.mxu0 0
        %3662 = vmatpush1.bf16.msra.mxu0 0
        %3663 = vmatprep.subr.bf16.mxu0 0
        %3664 = vmatpush1.bf16.msra.mxu0 0
        %3665 = vmatprep.subr.bf16.mxu0 0
        %3666 = vmatpush1.bf16.msra.mxu0 0
        %3667 = vmatprep.subr.bf16.mxu0 0
        %3668 = vmatpush1.bf16.msra.mxu0 0
        %3669 = vmatprep.subr.bf16.mxu0 0
        %3670 = vmatpush1.bf16.msra.mxu0 0
        %3671 = vmatprep.subr.bf16.mxu0 0
        %3672 = vmatpush1.bf16.msra.mxu0 0
        %3673 = vmatprep.subr.bf16.mxu0 0
        %3674 = vmatpush1.bf16.msra.mxu0 0
        %3675 = vmatprep.subr.bf16.mxu0 0
        %3676 = vmatpush1.bf16.msra.mxu0 0
        %3677 = vmatprep.mubr.bf16.mxu0 0
        %3678 = vmatmul.mubr.bf16.gmra.mrb[0].mxu0 %v3634
        %v3679 = vpop.f32.mrb[0].mxu0
        %v3680 = vadd.f32 0.0, %v3679
        %v3681 = vpop.f32.mrb[0].mxu0
        %v3682 = vadd.f32 0.0, %v3681
        %v3683 = vpop.f32.mrb[0].mxu0
        %v3684 = vpop.f32.mrb[0].mxu0
        %3685 = vdwg.mxu0
        %3686 = vmatprep.subr.bf16.mxu0 0
        %3687 = vmatpush1.bf16.msra.mxu0 %v3643
        %3688 = vmatprep.subr.bf16.mxu0 0
        %3689 = vmatpush1.bf16.msra.mxu0 0
        %3690 = vmatprep.subr.bf16.mxu0 0
        %3691 = vmatpush1.bf16.msra.mxu0 0
        %3692 = vmatprep.subr.bf16.mxu0 0
        %3693 = vmatpush1.bf16.msra.mxu0 0
        %3694 = vmatprep.subr.bf16.mxu0 0
        %3695 = vmatpush1.bf16.msra.mxu0 0
        %3696 = vmatprep.subr.bf16.mxu0 0
        %3697 = vmatpush1.bf16.msra.mxu0 0
        %3698 = vmatprep.subr.bf16.mxu0 0
        %3699 = vmatpush1.bf16.msra.mxu0 0
        %3700 = vmatprep.subr.bf16.mxu0 0
        %3701 = vmatpush1.bf16.msra.mxu0 0
        %3702 = vmatprep.subr.bf16.mxu0 0
        %3703 = vmatpush1.bf16.msra.mxu0 0
        %3704 = vmatprep.subr.bf16.mxu0 0
        %3705 = vmatpush1.bf16.msra.mxu0 0
        %3706 = vmatprep.subr.bf16.mxu0 0
        %3707 = vmatpush1.bf16.msra.mxu0 0
        %3708 = vmatprep.subr.bf16.mxu0 0
        %3709 = vmatpush1.bf16.msra.mxu0 0
        %3710 = vmatprep.subr.bf16.mxu0 0
        %3711 = vmatpush1.bf16.msra.mxu0 0
        %3712 = vmatprep.subr.bf16.mxu0 0
        %3713 = vmatpush1.bf16.msra.mxu0 0
        %3714 = vmatprep.subr.bf16.mxu0 0
        %3715 = vmatpush1.bf16.msra.mxu0 0
        %3716 = vmatprep.subr.bf16.mxu0 0
        %3717 = vmatpush1.bf16.msra.mxu0 0
        %3718 = vmatprep.mubr.bf16.mxu0 0
        %3719 = vmatmul.mubr.bf16.gmra.mrb[0].mxu0 %v3634
        %v3720 = vpop.f32.mrb[0].mxu0
        %v3721 = vadd.f32 0.0, %v3720
        %v3722 = vpop.f32.mrb[0].mxu0
        %v3723 = vpop.f32.mrb[0].mxu0
        %v3724 = vpop.f32.mrb[0].mxu0
        %3725 = vdwg.mxu0
        %3726 = vrot.lane.b32.xlu0 %v3618, 19
        %v3727 = vpop.permute.xlu0 %3726
        %3728 = vrot.lane.b32.xlu0 %v3619, 19
        %v3729 = vpop.permute.xlu0 %3728
        %3730 = vrot.lane.b32.xlu0 %v3620, 19
        %v3731 = vpop.permute.xlu0 %3730
        %3732 = vrot.lane.b32.xlu0 %v3621, 19
        %v3733 = vpop.permute.xlu0 %3732
        %v3734 = vsel %vm649, %v3727, %v3729
        %v3735 = vsel %vm649, %v3729, %v3731
        %v3736 = vsel %vm649, %v3731, %v3733
        %v3738 = vsel %vm546, %v3609, 0
        %v3741 = vsel %vm550, %v3734, 0
        %v3744 = vsel %vm550, %v3735, 0
        %v3747 = vsel %vm550, %v3736, 0
        %3749 = vmatprep.subr.bf16.mxu0 %v3744
        %3750 = vmatpush1.bf16.msra.mxu0 %v3741
        %3751 = vmatprep.subr.bf16.mxu0 0
        %3752 = vmatpush1.bf16.msra.mxu0 0
        %3753 = vmatprep.subr.bf16.mxu0 0
        %3754 = vmatpush1.bf16.msra.mxu0 0
        %3755 = vmatprep.subr.bf16.mxu0 0
        %3756 = vmatpush1.bf16.msra.mxu0 0
        %3757 = vmatprep.subr.bf16.mxu0 0
        %3758 = vmatpush1.bf16.msra.mxu0 0
        %3759 = vmatprep.subr.bf16.mxu0 0
        %3760 = vmatpush1.bf16.msra.mxu0 0
        %3761 = vmatprep.subr.bf16.mxu0 0
        %3762 = vmatpush1.bf16.msra.mxu0 0
        %3763 = vmatprep.subr.bf16.mxu0 0
        %3764 = vmatpush1.bf16.msra.mxu0 0
        %3765 = vmatprep.subr.bf16.mxu0 0
        %3766 = vmatpush1.bf16.msra.mxu0 0
        %3767 = vmatprep.subr.bf16.mxu0 0
        %3768 = vmatpush1.bf16.msra.mxu0 0
        %3769 = vmatprep.subr.bf16.mxu0 0
        %3770 = vmatpush1.bf16.msra.mxu0 0
        %3771 = vmatprep.subr.bf16.mxu0 0
        %3772 = vmatpush1.bf16.msra.mxu0 0
        %3773 = vmatprep.subr.bf16.mxu0 0
        %3774 = vmatpush1.bf16.msra.mxu0 0
        %3775 = vmatprep.subr.bf16.mxu0 0
        %3776 = vmatpush1.bf16.msra.mxu0 0
        %3777 = vmatprep.subr.bf16.mxu0 0
        %3778 = vmatpush1.bf16.msra.mxu0 0
        %3779 = vmatprep.subr.bf16.mxu0 0
        %3780 = vmatpush1.bf16.msra.mxu0 0
        %3781 = vmatprep.mubr.bf16.mxu0 0
        %3782 = vmatmul.mubr.bf16.gmra.mrb[0].mxu0 %v3738
        %v3783 = vpop.f32.mrb[0].mxu0
        %v3784 = vadd.f32 %v3680, %v3783
        %v3785 = vpop.f32.mrb[0].mxu0
        %v3786 = vadd.f32 %v3682, %v3785
        %v3787 = vpop.f32.mrb[0].mxu0
        %v3788 = vpop.f32.mrb[0].mxu0
        %3789 = vdwg.mxu0
        %3790 = vmatprep.subr.bf16.mxu0 0
        %3791 = vmatpush1.bf16.msra.mxu0 %v3747
        %3792 = vmatprep.subr.bf16.mxu0 0
        %3793 = vmatpush1.bf16.msra.mxu0 0
        %3794 = vmatprep.subr.bf16.mxu0 0
        %3795 = vmatpush1.bf16.msra.mxu0 0
        %3796 = vmatprep.subr.bf16.mxu0 0
        %3797 = vmatpush1.bf16.msra.mxu0 0
        %3798 = vmatprep.subr.bf16.mxu0 0
        %3799 = vmatpush1.bf16.msra.mxu0 0
        %3800 = vmatprep.subr.bf16.mxu0 0
        %3801 = vmatpush1.bf16.msra.mxu0 0
        %3802 = vmatprep.subr.bf16.mxu0 0
        %3803 = vmatpush1.bf16.msra.mxu0 0
        %3804 = vmatprep.subr.bf16.mxu0 0
        %3805 = vmatpush1.bf16.msra.mxu0 0
        %3806 = vmatprep.subr.bf16.mxu0 0
        %3807 = vmatpush1.bf16.msra.mxu0 0
        %3808 = vmatprep.subr.bf16.mxu0 0
        %3809 = vmatpush1.bf16.msra.mxu0 0
        %3810 = vmatprep.subr.bf16.mxu0 0
        %3811 = vmatpush1.bf16.msra.mxu0 0
        %3812 = vmatprep.subr.bf16.mxu0 0
        %3813 = vmatpush1.bf16.msra.mxu0 0
        %3814 = vmatprep.subr.bf16.mxu0 0
        %3815 = vmatpush1.bf16.msra.mxu0 0
        %3816 = vmatprep.subr.bf16.mxu0 0
        %3817 = vmatpush1.bf16.msra.mxu0 0
        %3818 = vmatprep.subr.bf16.mxu0 0
        %3819 = vmatpush1.bf16.msra.mxu0 0
        %3820 = vmatprep.subr.bf16.mxu0 0
        %3821 = vmatpush1.bf16.msra.mxu0 0
        %3822 = vmatprep.mubr.bf16.mxu0 0
        %3823 = vmatmul.mubr.bf16.gmra.mrb[0].mxu0 %v3738
        %v3824 = vpop.f32.mrb[0].mxu0
        %v3825 = vadd.f32 %v3721, %v3824
        %v3826 = vpop.f32.mrb[0].mxu0
        %v3827 = vpop.f32.mrb[0].mxu0
        %v3828 = vpop.f32.mrb[0].mxu0
        %3829 = vdwg.mxu0
        %s3830 = scalar_lea.vmem [#allocation16], 8
        %v3831 = vld [vmem:[%s3830] sm:$0xf]
        %3832 = vrot.lane.b32.xlu0 %v3618, 17
        %v3833 = vpop.permute.xlu0 %3832
        %3834 = vrot.lane.b32.xlu0 %v3619, 17
        %v3835 = vpop.permute.xlu0 %3834
        %3836 = vrot.lane.b32.xlu0 %v3620, 17
        %v3837 = vpop.permute.xlu0 %3836
        %3838 = vrot.lane.b32.xlu0 %v3621, 17
        %v3839 = vpop.permute.xlu0 %3838
        %v3840 = vsel %vm756, %v3833, %v3835
        %v3841 = vsel %vm756, %v3835, %v3837
        %v3842 = vsel %vm756, %v3837, %v3839
        %v3844 = vsel %vm546, %v3831, 0
        %v3847 = vsel %vm550, %v3840, 0
        %v3850 = vsel %vm550, %v3841, 0
        %v3853 = vsel %vm550, %v3842, 0
        %3855 = vmatprep.subr.bf16.mxu0 %v3850
        %3856 = vmatpush1.bf16.msra.mxu0 %v3847
        %3857 = vmatprep.subr.bf16.mxu0 0
        %3858 = vmatpush1.bf16.msra.mxu0 0
        %3859 = vmatprep.subr.bf16.mxu0 0
        %3860 = vmatpush1.bf16.msra.mxu0 0
        %3861 = vmatprep.subr.bf16.mxu0 0
        %3862 = vmatpush1.bf16.msra.mxu0 0
        %3863 = vmatprep.subr.bf16.mxu0 0
        %3864 = vmatpush1.bf16.msra.mxu0 0
        %3865 = vmatprep.subr.bf16.mxu0 0
        %3866 = vmatpush1.bf16.msra.mxu0 0
        %3867 = vmatprep.subr.bf16.mxu0 0
        %3868 = vmatpush1.bf16.msra.mxu0 0
        %3869 = vmatprep.subr.bf16.mxu0 0
        %3870 = vmatpush1.bf16.msra.mxu0 0
        %3871 = vmatprep.subr.bf16.mxu0 0
        %3872 = vmatpush1.bf16.msra.mxu0 0
        %3873 = vmatprep.subr.bf16.mxu0 0
        %3874 = vmatpush1.bf16.msra.mxu0 0
        %3875 = vmatprep.subr.bf16.mxu0 0
        %3876 = vmatpush1.bf16.msra.mxu0 0
        %3877 = vmatprep.subr.bf16.mxu0 0
        %3878 = vmatpush1.bf16.msra.mxu0 0
        %3879 = vmatprep.subr.bf16.mxu0 0
        %3880 = vmatpush1.bf16.msra.mxu0 0
        %3881 = vmatprep.subr.bf16.mxu0 0
        %3882 = vmatpush1.bf16.msra.mxu0 0
        %3883 = vmatprep.subr.bf16.mxu0 0
        %3884 = vmatpush1.bf16.msra.mxu0 0
        %3885 = vmatprep.subr.bf16.mxu0 0
        %3886 = vmatpush1.bf16.msra.mxu0 0
        %3887 = vmatprep.mubr.bf16.mxu0 0
        %3888 = vmatmul.mubr.bf16.gmra.mrb[0].mxu0 %v3844
        %v3889 = vpop.f32.mrb[0].mxu0
        %v3890 = vadd.f32 0.0, %v3889
        %v3891 = vpop.f32.mrb[0].mxu0
        %v3892 = vadd.f32 0.0, %v3891
        %v3893 = vpop.f32.mrb[0].mxu0
        %v3894 = vpop.f32.mrb[0].mxu0
        %3895 = vdwg.mxu0
        %3896 = vmatprep.subr.bf16.mxu0 0
        %3897 = vmatpush1.bf16.msra.mxu0 %v3853
        %3898 = vmatprep.subr.bf16.mxu0 0
        %3899 = vmatpush1.bf16.msra.mxu0 0
        %3900 = vmatprep.subr.bf16.mxu0 0
        %3901 = vmatpush1.bf16.msra.mxu0 0
        %3902 = vmatprep.subr.bf16.mxu0 0
        %3903 = vmatpush1.bf16.msra.mxu0 0
        %3904 = vmatprep.subr.bf16.mxu0 0
        %3905 = vmatpush1.bf16.msra.mxu0 0
        %3906 = vmatprep.subr.bf16.mxu0 0
        %3907 = vmatpush1.bf16.msra.mxu0 0
        %3908 = vmatprep.subr.bf16.mxu0 0
        %3909 = vmatpush1.bf16.msra.mxu0 0
        %3910 = vmatprep.subr.bf16.mxu0 0
        %3911 = vmatpush1.bf16.msra.mxu0 0
        %3912 = vmatprep.subr.bf16.mxu0 0
        %3913 = vmatpush1.bf16.msra.mxu0 0
        %3914 = vmatprep.subr.bf16.mxu0 0
        %3915 = vmatpush1.bf16.msra.mxu0 0
        %3916 = vmatprep.subr.bf16.mxu0 0
        %3917 = vmatpush1.bf16.msra.mxu0 0
        %3918 = vmatprep.subr.bf16.mxu0 0
        %3919 = vmatpush1.bf16.msra.mxu0 0
        %3920 = vmatprep.subr.bf16.mxu0 0
        %3921 = vmatpush1.bf16.msra.mxu0 0
        %3922 = vmatprep.subr.bf16.mxu0 0
        %3923 = vmatpush1.bf16.msra.mxu0 0
        %3924 = vmatprep.subr.bf16.mxu0 0
        %3925 = vmatpush1.bf16.msra.mxu0 0
        %3926 = vmatprep.subr.bf16.mxu0 0
        %3927 = vmatpush1.bf16.msra.mxu0 0
        %3928 = vmatprep.mubr.bf16.mxu0 0
        %3929 = vmatmul.mubr.bf16.gmra.mrb[0].mxu0 %v3844
        %v3930 = vpop.f32.mrb[0].mxu0
        %v3931 = vadd.f32 0.0, %v3930
        %v3932 = vpop.f32.mrb[0].mxu0
        %v3933 = vpop.f32.mrb[0].mxu0
        %v3934 = vpop.f32.mrb[0].mxu0
        %3935 = vdwg.mxu0
        %v3936 = vadd.f32 %v3784, %v3890
        %v3937 = vadd.f32 %v3786, %v3892
        %v3938 = vadd.f32 %v3825, %v3931
        %s3939 = scalar_lea.vmem [#allocation16], 12
        %v3940 = vld [vmem:[%s3939] sm:$0xf]
        %3941 = vrot.lane.b32.xlu0 %v3618, 1
        %v3942 = vpop.permute.xlu0 %3941
        %3943 = vrot.lane.b32.xlu0 %v3619, 1
        %v3944 = vpop.permute.xlu0 %3943
        %3945 = vrot.lane.b32.xlu0 %v3620, 1
        %v3946 = vpop.permute.xlu0 %3945
        %3947 = vrot.lane.b32.xlu0 %v3621, 1
        %v3948 = vpop.permute.xlu0 %3947
        %v3949 = vsel %vm866, %v3942, %v3944
        %v3950 = vsel %vm866, %v3944, %v3946
        %v3951 = vsel %vm866, %v3946, %v3948
        %v3953 = vsel %vm546, %v3940, 0
        %v3956 = vsel %vm550, %v3949, 0
        %v3959 = vsel %vm550, %v3950, 0
        %v3962 = vsel %vm550, %v3951, 0
        %3964 = vmatprep.subr.bf16.mxu0 %v3959
        %3965 = vmatpush1.bf16.msra.mxu0 %v3956
        %3966 = vmatprep.subr.bf16.mxu0 0
        %3967 = vmatpush1.bf16.msra.mxu0 0
        %3968 = vmatprep.subr.bf16.mxu0 0
        %3969 = vmatpush1.bf16.msra.mxu0 0
        %3970 = vmatprep.subr.bf16.mxu0 0
        %3971 = vmatpush1.bf16.msra.mxu0 0
        %3972 = vmatprep.subr.bf16.mxu0 0
        %3973 = vmatpush1.bf16.msra.mxu0 0
        %3974 = vmatprep.subr.bf16.mxu0 0
        %3975 = vmatpush1.bf16.msra.mxu0 0
        %3976 = vmatprep.subr.bf16.mxu0 0
        %3977 = vmatpush1.bf16.msra.mxu0 0
        %3978 = vmatprep.subr.bf16.mxu0 0
        %3979 = vmatpush1.bf16.msra.mxu0 0
        %3980 = vmatprep.subr.bf16.mxu0 0
        %3981 = vmatpush1.bf16.msra.mxu0 0
        %3982 = vmatprep.subr.bf16.mxu0 0
        %3983 = vmatpush1.bf16.msra.mxu0 0
        %3984 = vmatprep.subr.bf16.mxu0 0
        %3985 = vmatpush1.bf16.msra.mxu0 0
        %3986 = vmatprep.subr.bf16.mxu0 0
        %3987 = vmatpush1.bf16.msra.mxu0 0
        %3988 = vmatprep.subr.bf16.mxu0 0
        %3989 = vmatpush1.bf16.msra.mxu0 0
        %3990 = vmatprep.subr.bf16.mxu0 0
        %3991 = vmatpush1.bf16.msra.mxu0 0
        %3992 = vmatprep.subr.bf16.mxu0 0
        %3993 = vmatpush1.bf16.msra.mxu0 0
        %3994 = vmatprep.subr.bf16.mxu0 0
        %3995 = vmatpush1.bf16.msra.mxu0 0
        %3996 = vmatprep.mubr.bf16.mxu0 0
        %3997 = vmatmul.mubr.bf16.gmra.mrb[0].mxu0 %v3953
        %v3998 = vpop.f32.mrb[0].mxu0
        %v3999 = vadd.f32 0.0, %v3998
        %v4000 = vpop.f32.mrb[0].mxu0
        %v4001 = vadd.f32 0.0, %v4000
        %v4002 = vpop.f32.mrb[0].mxu0
        %v4003 = vpop.f32.mrb[0].mxu0
        %4004 = vdwg.mxu0
        %4005 = vmatprep.subr.bf16.mxu0 0
        %4006 = vmatpush1.bf16.msra.mxu0 %v3962
        %4007 = vmatprep.subr.bf16.mxu0 0
        %4008 = vmatpush1.bf16.msra.mxu0 0
        %4009 = vmatprep.subr.bf16.mxu0 0
        %4010 = vmatpush1.bf16.msra.mxu0 0
        %4011 = vmatprep.subr.bf16.mxu0 0
        %4012 = vmatpush1.bf16.msra.mxu0 0
        %4013 = vmatprep.subr.bf16.mxu0 0
        %4014 = vmatpush1.bf16.msra.mxu0 0
        %4015 = vmatprep.subr.bf16.mxu0 0
        %4016 = vmatpush1.bf16.msra.mxu0 0
        %4017 = vmatprep.subr.bf16.mxu0 0
        %4018 = vmatpush1.bf16.msra.mxu0 0
        %4019 = vmatprep.subr.bf16.mxu0 0
        %4020 = vmatpush1.bf16.msra.mxu0 0
        %4021 = vmatprep.subr.bf16.mxu0 0
        %4022 = vmatpush1.bf16.msra.mxu0 0
        %4023 = vmatprep.subr.bf16.mxu0 0
        %4024 = vmatpush1.bf16.msra.mxu0 0
        %4025 = vmatprep.subr.bf16.mxu0 0
        %4026 = vmatpush1.bf16.msra.mxu0 0
        %4027 = vmatprep.subr.bf16.mxu0 0
        %4028 = vmatpush1.bf16.msra.mxu0 0
        %4029 = vmatprep.subr.bf16.mxu0 0
        %4030 = vmatpush1.bf16.msra.mxu0 0
        %4031 = vmatprep.subr.bf16.mxu0 0
        %4032 = vmatpush1.bf16.msra.mxu0 0
        %4033 = vmatprep.subr.bf16.mxu0 0
        %4034 = vmatpush1.bf16.msra.mxu0 0
        %4035 = vmatprep.subr.bf16.mxu0 0
        %4036 = vmatpush1.bf16.msra.mxu0 0
        %4037 = vmatprep.mubr.bf16.mxu0 0
        %4038 = vmatmul.mubr.bf16.gmra.mrb[0].mxu0 %v3953
        %v4039 = vpop.f32.mrb[0].mxu0
        %v4040 = vadd.f32 0.0, %v4039
        %v4041 = vpop.f32.mrb[0].mxu0
        %v4042 = vpop.f32.mrb[0].mxu0
        %v4043 = vpop.f32.mrb[0].mxu0
        %4044 = vdwg.mxu0
        %v4045 = vadd.f32 %v3936, %v3999
        %v4046 = vadd.f32 %v3937, %v4001
        %v4047 = vadd.f32 %v3938, %v4040
        %v4048 = vld [vmem:[#allocation2 + $0x4] sm:$0xff]
        %v4049 = vld [vmem:[#allocation2 + $0xc] sm:$0xf]
        %s4050 = scalar_lea.vmem [#allocation16], 16
        %v4051 = vld [vmem:[%s4050] sm:$0xf]
        %v4054 = vunpack.c.l.b16 %v4048
        %v4055 = vunpack.c.h.b16 %v4048
        %v4056 = vunpack.c.l.b16 %v4049
        %v4057 = vpack.c.b16 %v4054, %v4054
        %v4058 = vpack.c.b16 %v4055, %v4055
        %v4059 = vpack.c.b16 %v4056, %v4056
        %v4061 = vsel %vm546, %v4051, 0
        %v4064 = vsel %vm550, %v4057, 0
        %v4067 = vsel %vm550, %v4058, 0
        %v4070 = vsel %vm550, %v4059, 0
        %4072 = vmatprep.subr.bf16.mxu0 %v4067
        %4073 = vmatpush1.bf16.msra.mxu0 %v4064
        %4074 = vmatprep.subr.bf16.mxu0 0
        %4075 = vmatpush1.bf16.msra.mxu0 0
        %4076 = vmatprep.subr.bf16.mxu0 0
        %4077 = vmatpush1.bf16.msra.mxu0 0
        %4078 = vmatprep.subr.bf16.mxu0 0
        %4079 = vmatpush1.bf16.msra.mxu0 0
        %4080 = vmatprep.subr.bf16.mxu0 0
        %4081 = vmatpush1.bf16.msra.mxu0 0
        %4082 = vmatprep.subr.bf16.mxu0 0
        %4083 = vmatpush1.bf16.msra.mxu0 0
        %4084 = vmatprep.subr.bf16.mxu0 0
        %4085 = vmatpush1.bf16.msra.mxu0 0
        %4086 = vmatprep.subr.bf16.mxu0 0
        %4087 = vmatpush1.bf16.msra.mxu0 0
        %4088 = vmatprep.subr.bf16.mxu0 0
        %4089 = vmatpush1.bf16.msra.mxu0 0
        %4090 = vmatprep.subr.bf16.mxu0 0
        %4091 = vmatpush1.bf16.msra.mxu0 0
        %4092 = vmatprep.subr.bf16.mxu0 0
        %4093 = vmatpush1.bf16.msra.mxu0 0
        %4094 = vmatprep.subr.bf16.mxu0 0
        %4095 = vmatpush1.bf16.msra.mxu0 0
        %4096 = vmatprep.subr.bf16.mxu0 0
        %4097 = vmatpush1.bf16.msra.mxu0 0
        %4098 = vmatprep.subr.bf16.mxu0 0
        %4099 = vmatpush1.bf16.msra.mxu0 0
        %4100 = vmatprep.subr.bf16.mxu0 0
        %4101 = vmatpush1.bf16.msra.mxu0 0
        %4102 = vmatprep.subr.bf16.mxu0 0
        %4103 = vmatpush1.bf16.msra.mxu0 0
        %4104 = vmatprep.mubr.bf16.mxu0 0
        %4105 = vmatmul.mubr.bf16.gmra.mrb[0].mxu0 %v4061
        %v4106 = vpop.f32.mrb[0].mxu0
        %v4107 = vadd.f32 0.0, %v4106
        %v4108 = vpop.f32.mrb[0].mxu0
        %v4109 = vadd.f32 0.0, %v4108
        %v4110 = vpop.f32.mrb[0].mxu0
        %v4111 = vpop.f32.mrb[0].mxu0
        %4112 = vdwg.mxu0
        %4113 = vmatprep.subr.bf16.mxu0 0
        %4114 = vmatpush1.bf16.msra.mxu0 %v4070
        %4115 = vmatprep.subr.bf16.mxu0 0
        %4116 = vmatpush1.bf16.msra.mxu0 0
        %4117 = vmatprep.subr.bf16.mxu0 0
        %4118 = vmatpush1.bf16.msra.mxu0 0
        %4119 = vmatprep.subr.bf16.mxu0 0
        %4120 = vmatpush1.bf16.msra.mxu0 0
        %4121 = vmatprep.subr.bf16.mxu0 0
        %4122 = vmatpush1.bf16.msra.mxu0 0
        %4123 = vmatprep.subr.bf16.mxu0 0
        %4124 = vmatpush1.bf16.msra.mxu0 0
        %4125 = vmatprep.subr.bf16.mxu0 0
        %4126 = vmatpush1.bf16.msra.mxu0 0
        %4127 = vmatprep.subr.bf16.mxu0 0
        %4128 = vmatpush1.bf16.msra.mxu0 0
        %4129 = vmatprep.subr.bf16.mxu0 0
        %4130 = vmatpush1.bf16.msra.mxu0 0
        %4131 = vmatprep.subr.bf16.mxu0 0
        %4132 = vmatpush1.bf16.msra.mxu0 0
        %4133 = vmatprep.subr.bf16.mxu0 0
        %4134 = vmatpush1.bf16.msra.mxu0 0
        %4135 = vmatprep.subr.bf16.mxu0 0
        %4136 = vmatpush1.bf16.msra.mxu0 0
        %4137 = vmatprep.subr.bf16.mxu0 0
        %4138 = vmatpush1.bf16.msra.mxu0 0
        %4139 = vmatprep.subr.bf16.mxu0 0
        %4140 = vmatpush1.bf16.msra.mxu0 0
        %4141 = vmatprep.subr.bf16.mxu0 0
        %4142 = vmatpush1.bf16.msra.mxu0 0
        %4143 = vmatprep.subr.bf16.mxu0 0
        %4144 = vmatpush1.bf16.msra.mxu0 0
        %4145 = vmatprep.mubr.bf16.mxu0 0
        %4146 = vmatmul.mubr.bf16.gmra.mrb[0].mxu0 %v4061
        %v4147 = vpop.f32.mrb[0].mxu0
        %v4148 = vadd.f32 0.0, %v4147
        %v4149 = vpop.f32.mrb[0].mxu0
        %v4150 = vpop.f32.mrb[0].mxu0
        %v4151 = vpop.f32.mrb[0].mxu0
        %4152 = vdwg.mxu0
        %v4153 = vadd.f32 %v4045, %v4107
        %v4154 = vadd.f32 %v4046, %v4109
        %v4155 = vadd.f32 %v4047, %v4148
        %v4156 = vld [vmem:[#allocation2 + $0x4] sm:$0xff]
        %v4157 = vld [vmem:[#allocation2 + $0xc] sm:$0xff]
        %s4158 = scalar_lea.vmem [#allocation16], 20
        %v4159 = vld [vmem:[%s4158] sm:$0xf]
        %v4162 = vunpack.c.l.b16 %v4156
        %v4163 = vunpack.c.h.b16 %v4156
        %v4164 = vunpack.c.l.b16 %v4157
        %v4165 = vunpack.c.h.b16 %v4157
        %v4166 = vpack.c.b16 %v4162, %v4162
        %v4167 = vpack.c.b16 %v4163, %v4163
        %v4168 = vpack.c.b16 %v4164, %v4164
        %v4169 = vpack.c.b16 %v4165, %v4165
        %4170 = vrot.lane.b32.xlu0 %v4166, 127
        %v4171 = vpop.permute.xlu0 %4170
        %4172 = vrot.lane.b32.xlu0 %v4167, 127
        %v4173 = vpop.permute.xlu0 %4172
        %4174 = vrot.lane.b32.xlu0 %v4168, 127
        %v4175 = vpop.permute.xlu0 %4174
        %4176 = vrot.lane.b32.xlu0 %v4169, 127
        %v4177 = vpop.permute.xlu0 %4176
        %v4178 = vsel %vm1096, %v4171, %v4173
        %v4179 = vsel %vm1096, %v4173, %v4175
        %v4180 = vsel %vm1096, %v4175, %v4177
        %v4182 = vsel %vm546, %v4159, 0
        %v4185 = vsel %vm550, %v4178, 0
        %v4188 = vsel %vm550, %v4179, 0
        %v4191 = vsel %vm550, %v4180, 0
        %4193 = vmatprep.subr.bf16.mxu0 %v4188
        %4194 = vmatpush1.bf16.msra.mxu0 %v4185
        %4195 = vmatprep.subr.bf16.mxu0 0
        %4196 = vmatpush1.bf16.msra.mxu0 0
        %4197 = vmatprep.subr.bf16.mxu0 0
        %4198 = vmatpush1.bf16.msra.mxu0 0
        %4199 = vmatprep.subr.bf16.mxu0 0
        %4200 = vmatpush1.bf16.msra.mxu0 0
        %4201 = vmatprep.subr.bf16.mxu0 0
        %4202 = vmatpush1.bf16.msra.mxu0 0
        %4203 = vmatprep.subr.bf16.mxu0 0
        %4204 = vmatpush1.bf16.msra.mxu0 0
        %4205 = vmatprep.subr.bf16.mxu0 0
        %4206 = vmatpush1.bf16.msra.mxu0 0
        %4207 = vmatprep.subr.bf16.mxu0 0
        %4208 = vmatpush1.bf16.msra.mxu0 0
        %4209 = vmatprep.subr.bf16.mxu0 0
        %4210 = vmatpush1.bf16.msra.mxu0 0
        %4211 = vmatprep.subr.bf16.mxu0 0
        %4212 = vmatpush1.bf16.msra.mxu0 0
        %4213 = vmatprep.subr.bf16.mxu0 0
        %4214 = vmatpush1.bf16.msra.mxu0 0
        %4215 = vmatprep.subr.bf16.mxu0 0
        %4216 = vmatpush1.bf16.msra.mxu0 0
        %4217 = vmatprep.subr.bf16.mxu0 0
        %4218 = vmatpush1.bf16.msra.mxu0 0
        %4219 = vmatprep.subr.bf16.mxu0 0
        %4220 = vmatpush1.bf16.msra.mxu0 0
        %4221 = vmatprep.subr.bf16.mxu0 0
        %4222 = vmatpush1.bf16.msra.mxu0 0
        %4223 = vmatprep.subr.bf16.mxu0 0
        %4224 = vmatpush1.bf16.msra.mxu0 0
        %4225 = vmatprep.mubr.bf16.mxu0 0
        %4226 = vmatmul.mubr.bf16.gmra.mrb[0].mxu0 %v4182
        %v4227 = vpop.f32.mrb[0].mxu0
        %v4228 = vadd.f32 0.0, %v4227
        %v4229 = vpop.f32.mrb[0].mxu0
        %v4230 = vadd.f32 0.0, %v4229
        %v4231 = vpop.f32.mrb[0].mxu0
        %v4232 = vpop.f32.mrb[0].mxu0
        %4233 = vdwg.mxu0
        %4234 = vmatprep.subr.bf16.mxu0 0
        %4235 = vmatpush1.bf16.msra.mxu0 %v4191
        %4236 = vmatprep.subr.bf16.mxu0 0
        %4237 = vmatpush1.bf16.msra.mxu0 0
        %4238 = vmatprep.subr.bf16.mxu0 0
        %4239 = vmatpush1.bf16.msra.mxu0 0
        %4240 = vmatprep.subr.bf16.mxu0 0
        %4241 = vmatpush1.bf16.msra.mxu0 0
        %4242 = vmatprep.subr.bf16.mxu0 0
        %4243 = vmatpush1.bf16.msra.mxu0 0
        %4244 = vmatprep.subr.bf16.mxu0 0
        %4245 = vmatpush1.bf16.msra.mxu0 0
        %4246 = vmatprep.subr.bf16.mxu0 0
        %4247 = vmatpush1.bf16.msra.mxu0 0
        %4248 = vmatprep.subr.bf16.mxu0 0
        %4249 = vmatpush1.bf16.msra.mxu0 0
        %4250 = vmatprep.subr.bf16.mxu0 0
        %4251 = vmatpush1.bf16.msra.mxu0 0
        %4252 = vmatprep.subr.bf16.mxu0 0
        %4253 = vmatpush1.bf16.msra.mxu0 0
        %4254 = vmatprep.subr.bf16.mxu0 0
        %4255 = vmatpush1.bf16.msra.mxu0 0
        %4256 = vmatprep.subr.bf16.mxu0 0
        %4257 = vmatpush1.bf16.msra.mxu0 0
        %4258 = vmatprep.subr.bf16.mxu0 0
        %4259 = vmatpush1.bf16.msra.mxu0 0
        %4260 = vmatprep.subr.bf16.mxu0 0
        %4261 = vmatpush1.bf16.msra.mxu0 0
        %4262 = vmatprep.subr.bf16.mxu0 0
        %4263 = vmatpush1.bf16.msra.mxu0 0
        %4264 = vmatprep.subr.bf16.mxu0 0
        %4265 = vmatpush1.bf16.msra.mxu0 0
        %4266 = vmatprep.mubr.bf16.mxu0 0
        %4267 = vmatmul.mubr.bf16.gmra.mrb[0].mxu0 %v4182
        %v4268 = vpop.f32.mrb[0].mxu0
        %v4269 = vadd.f32 0.0, %v4268
        %v4270 = vpop.f32.mrb[0].mxu0
        %v4271 = vpop.f32.mrb[0].mxu0
        %v4272 = vpop.f32.mrb[0].mxu0
        %4273 = vdwg.mxu0
        %v4274 = vadd.f32 %v4153, %v4228
        %v4275 = vadd.f32 %v4154, %v4230
        %v4276 = vadd.f32 %v4155, %v4269
        %s4277 = scalar_lea.vmem [#allocation16], 24
        %v4278 = vld [vmem:[%s4277] sm:$0xf]
        %4279 = vrot.lane.b32.xlu0 %v4166, 111
        %v4280 = vpop.permute.xlu0 %4279
        %4281 = vrot.lane.b32.xlu0 %v4167, 111
        %v4282 = vpop.permute.xlu0 %4281
        %4283 = vrot.lane.b32.xlu0 %v4168, 111
        %v4284 = vpop.permute.xlu0 %4283
        %4285 = vrot.lane.b32.xlu0 %v4169, 111
        %v4286 = vpop.permute.xlu0 %4285
        %v4287 = vsel %vm1206, %v4280, %v4282
        %v4288 = vsel %vm1206, %v4282, %v4284
        %v4289 = vsel %vm1206, %v4284, %v4286
        %v4291 = vsel %vm546, %v4278, 0
        %v4294 = vsel %vm550, %v4287, 0
        %v4297 = vsel %vm550, %v4288, 0
        %v4300 = vsel %vm550, %v4289, 0
        %4302 = vmatprep.subr.bf16.mxu0 %v4297
        %4303 = vmatpush1.bf16.msra.mxu0 %v4294
        %4304 = vmatprep.subr.bf16.mxu0 0
        %4305 = vmatpush1.bf16.msra.mxu0 0
        %4306 = vmatprep.subr.bf16.mxu0 0
        %4307 = vmatpush1.bf16.msra.mxu0 0
        %4308 = vmatprep.subr.bf16.mxu0 0
        %4309 = vmatpush1.bf16.msra.mxu0 0
        %4310 = vmatprep.subr.bf16.mxu0 0
        %4311 = vmatpush1.bf16.msra.mxu0 0
        %4312 = vmatprep.subr.bf16.mxu0 0
        %4313 = vmatpush1.bf16.msra.mxu0 0
        %4314 = vmatprep.subr.bf16.mxu0 0
        %4315 = vmatpush1.bf16.msra.mxu0 0
        %4316 = vmatprep.subr.bf16.mxu0 0
        %4317 = vmatpush1.bf16.msra.mxu0 0
        %4318 = vmatprep.subr.bf16.mxu0 0
        %4319 = vmatpush1.bf16.msra.mxu0 0
        %4320 = vmatprep.subr.bf16.mxu0 0
        %4321 = vmatpush1.bf16.msra.mxu0 0
        %4322 = vmatprep.subr.bf16.mxu0 0
        %4323 = vmatpush1.bf16.msra.mxu0 0
        %4324 = vmatprep.subr.bf16.mxu0 0
        %4325 = vmatpush1.bf16.msra.mxu0 0
        %4326 = vmatprep.subr.bf16.mxu0 0
        %4327 = vmatpush1.bf16.msra.mxu0 0
        %4328 = vmatprep.subr.bf16.mxu0 0
        %4329 = vmatpush1.bf16.msra.mxu0 0
        %4330 = vmatprep.subr.bf16.mxu0 0
        %4331 = vmatpush1.bf16.msra.mxu0 0
        %4332 = vmatprep.subr.bf16.mxu0 0
        %4333 = vmatpush1.bf16.msra.mxu0 0
        %4334 = vmatprep.mubr.bf16.mxu0 0
        %4335 = vmatmul.mubr.bf16.gmra.mrb[0].mxu0 %v4291
        %v4336 = vpop.f32.mrb[0].mxu0
        %v4337 = vadd.f32 0.0, %v4336
        %v4338 = vpop.f32.mrb[0].mxu0
        %v4339 = vadd.f32 0.0, %v4338
        %v4340 = vpop.f32.mrb[0].mxu0
        %v4341 = vpop.f32.mrb[0].mxu0
        %4342 = vdwg.mxu0
        %4343 = vmatprep.subr.bf16.mxu0 0
        %4344 = vmatpush1.bf16.msra.mxu0 %v4300
        %4345 = vmatprep.subr.bf16.mxu0 0
        %4346 = vmatpush1.bf16.msra.mxu0 0
        %4347 = vmatprep.subr.bf16.mxu0 0
        %4348 = vmatpush1.bf16.msra.mxu0 0
        %4349 = vmatprep.subr.bf16.mxu0 0
        %4350 = vmatpush1.bf16.msra.mxu0 0
        %4351 = vmatprep.subr.bf16.mxu0 0
        %4352 = vmatpush1.bf16.msra.mxu0 0
        %4353 = vmatprep.subr.bf16.mxu0 0
        %4354 = vmatpush1.bf16.msra.mxu0 0
        %4355 = vmatprep.subr.bf16.mxu0 0
        %4356 = vmatpush1.bf16.msra.mxu0 0
        %4357 = vmatprep.subr.bf16.mxu0 0
        %4358 = vmatpush1.bf16.msra.mxu0 0
        %4359 = vmatprep.subr.bf16.mxu0 0
        %4360 = vmatpush1.bf16.msra.mxu0 0
        %4361 = vmatprep.subr.bf16.mxu0 0
        %4362 = vmatpush1.bf16.msra.mxu0 0
        %4363 = vmatprep.subr.bf16.mxu0 0
        %4364 = vmatpush1.bf16.msra.mxu0 0
        %4365 = vmatprep.subr.bf16.mxu0 0
        %4366 = vmatpush1.bf16.msra.mxu0 0
        %4367 = vmatprep.subr.bf16.mxu0 0
        %4368 = vmatpush1.bf16.msra.mxu0 0
        %4369 = vmatprep.subr.bf16.mxu0 0
        %4370 = vmatpush1.bf16.msra.mxu0 0
        %4371 = vmatprep.subr.bf16.mxu0 0
        %4372 = vmatpush1.bf16.msra.mxu0 0
        %4373 = vmatprep.subr.bf16.mxu0 0
        %4374 = vmatpush1.bf16.msra.mxu0 0
        %4375 = vmatprep.mubr.bf16.mxu0 0
        %4376 = vmatmul.mubr.bf16.gmra.mrb[0].mxu0 %v4291
        %v4377 = vpop.f32.mrb[0].mxu0
        %v4378 = vadd.f32 0.0, %v4377
        %v4379 = vpop.f32.mrb[0].mxu0
        %v4380 = vpop.f32.mrb[0].mxu0
        %v4381 = vpop.f32.mrb[0].mxu0
        %4382 = vdwg.mxu0
        %v4383 = vadd.f32 %v4274, %v4337
        %v4384 = vadd.f32 %v4275, %v4339
        %v4385 = vadd.f32 %v4276, %v4378
        %s4386 = scalar_lea.vmem [#allocation16], 28
        %v4387 = vld [vmem:[%s4386] sm:$0xf]
        %4388 = vrot.lane.b32.xlu0 %v4166, 110
        %v4389 = vpop.permute.xlu0 %4388
        %4390 = vrot.lane.b32.xlu0 %v4167, 110
        %v4391 = vpop.permute.xlu0 %4390
        %4392 = vrot.lane.b32.xlu0 %v4168, 110
        %v4393 = vpop.permute.xlu0 %4392
        %4394 = vrot.lane.b32.xlu0 %v4169, 110
        %v4395 = vpop.permute.xlu0 %4394
        %v4396 = vsel %vm1316, %v4389, %v4391
        %v4397 = vsel %vm1316, %v4391, %v4393
        %v4398 = vsel %vm1316, %v4393, %v4395
        %v4400 = vsel %vm546, %v4387, 0
        %v4403 = vsel %vm550, %v4396, 0
        %v4406 = vsel %vm550, %v4397, 0
        %v4409 = vsel %vm550, %v4398, 0
        %4411 = vmatprep.subr.bf16.mxu0 %v4406
        %4412 = vmatpush1.bf16.msra.mxu0 %v4403
        %4413 = vmatprep.subr.bf16.mxu0 0
        %4414 = vmatpush1.bf16.msra.mxu0 0
        %4415 = vmatprep.subr.bf16.mxu0 0
        %4416 = vmatpush1.bf16.msra.mxu0 0
        %4417 = vmatprep.subr.bf16.mxu0 0
        %4418 = vmatpush1.bf16.msra.mxu0 0
        %4419 = vmatprep.subr.bf16.mxu0 0
        %4420 = vmatpush1.bf16.msra.mxu0 0
        %4421 = vmatprep.subr.bf16.mxu0 0
        %4422 = vmatpush1.bf16.msra.mxu0 0
        %4423 = vmatprep.subr.bf16.mxu0 0
        %4424 = vmatpush1.bf16.msra.mxu0 0
        %4425 = vmatprep.subr.bf16.mxu0 0
        %4426 = vmatpush1.bf16.msra.mxu0 0
        %4427 = vmatprep.subr.bf16.mxu0 0
        %4428 = vmatpush1.bf16.msra.mxu0 0
        %4429 = vmatprep.subr.bf16.mxu0 0
        %4430 = vmatpush1.bf16.msra.mxu0 0
        %4431 = vmatprep.subr.bf16.mxu0 0
        %4432 = vmatpush1.bf16.msra.mxu0 0
        %4433 = vmatprep.subr.bf16.mxu0 0
        %4434 = vmatpush1.bf16.msra.mxu0 0
        %4435 = vmatprep.subr.bf16.mxu0 0
        %4436 = vmatpush1.bf16.msra.mxu0 0
        %4437 = vmatprep.subr.bf16.mxu0 0
        %4438 = vmatpush1.bf16.msra.mxu0 0
        %4439 = vmatprep.subr.bf16.mxu0 0
        %4440 = vmatpush1.bf16.msra.mxu0 0
        %4441 = vmatprep.subr.bf16.mxu0 0
        %4442 = vmatpush1.bf16.msra.mxu0 0
        %4443 = vmatprep.mubr.bf16.mxu0 0
        %4444 = vmatmul.mubr.bf16.gmra.mrb[0].mxu0 %v4400
        %v4445 = vpop.f32.mrb[0].mxu0
        %v4446 = vadd.f32 0.0, %v4445
        %v4447 = vpop.f32.mrb[0].mxu0
        %v4448 = vadd.f32 0.0, %v4447
        %v4449 = vpop.f32.mrb[0].mxu0
        %v4450 = vpop.f32.mrb[0].mxu0
        %4451 = vdwg.mxu0
        %4452 = vmatprep.subr.bf16.mxu0 0
        %4453 = vmatpush1.bf16.msra.mxu0 %v4409
        %4454 = vmatprep.subr.bf16.mxu0 0
        %4455 = vmatpush1.bf16.msra.mxu0 0
        %4456 = vmatprep.subr.bf16.mxu0 0
        %4457 = vmatpush1.bf16.msra.mxu0 0
        %4458 = vmatprep.subr.bf16.mxu0 0
        %4459 = vmatpush1.bf16.msra.mxu0 0
        %4460 = vmatprep.subr.bf16.mxu0 0
        %4461 = vmatpush1.bf16.msra.mxu0 0
        %4462 = vmatprep.subr.bf16.mxu0 0
        %4463 = vmatpush1.bf16.msra.mxu0 0
        %4464 = vmatprep.subr.bf16.mxu0 0
        %4465 = vmatpush1.bf16.msra.mxu0 0
        %4466 = vmatprep.subr.bf16.mxu0 0
        %4467 = vmatpush1.bf16.msra.mxu0 0
        %4468 = vmatprep.subr.bf16.mxu0 0
        %4469 = vmatpush1.bf16.msra.mxu0 0
        %4470 = vmatprep.subr.bf16.mxu0 0
        %4471 = vmatpush1.bf16.msra.mxu0 0
        %4472 = vmatprep.subr.bf16.mxu0 0
        %4473 = vmatpush1.bf16.msra.mxu0 0
        %4474 = vmatprep.subr.bf16.mxu0 0
        %4475 = vmatpush1.bf16.msra.mxu0 0
        %4476 = vmatprep.subr.bf16.mxu0 0
        %4477 = vmatpush1.bf16.msra.mxu0 0
        %4478 = vmatprep.subr.bf16.mxu0 0
        %4479 = vmatpush1.bf16.msra.mxu0 0
        %4480 = vmatprep.subr.bf16.mxu0 0
        %4481 = vmatpush1.bf16.msra.mxu0 0
        %4482 = vmatprep.subr.bf16.mxu0 0
        %4483 = vmatpush1.bf16.msra.mxu0 0
        %4484 = vmatprep.mubr.bf16.mxu0 0
        %4485 = vmatmul.mubr.bf16.gmra.mrb[0].mxu0 %v4400
        %v4486 = vpop.f32.mrb[0].mxu0
        %v4487 = vadd.f32 0.0, %v4486
        %v4488 = vpop.f32.mrb[0].mxu0
        %v4489 = vpop.f32.mrb[0].mxu0
        %v4490 = vpop.f32.mrb[0].mxu0
        %4491 = vdwg.mxu0
        %v4492 = vadd.f32 %v4383, %v4446
        %v4493 = vadd.f32 %v4384, %v4448
        %v4494 = vadd.f32 %v4385, %v4487
        %s4495 = scalar_lea.vmem [#allocation16], 32
        %v4496 = vld [vmem:[%s4495] sm:$0xf]
        %4497 = vrot.lane.b32.xlu0 %v4166, 109
        %v4498 = vpop.permute.xlu0 %4497
        %4499 = vrot.lane.b32.xlu0 %v4167, 109
        %v4500 = vpop.permute.xlu0 %4499
        %4501 = vrot.lane.b32.xlu0 %v4168, 109
        %v4502 = vpop.permute.xlu0 %4501
        %4503 = vrot.lane.b32.xlu0 %v4169, 109
        %v4504 = vpop.permute.xlu0 %4503
        %v4505 = vsel %vm1426, %v4498, %v4500
        %v4506 = vsel %vm1426, %v4500, %v4502
        %v4507 = vsel %vm1426, %v4502, %v4504
        %v4509 = vsel %vm546, %v4496, 0
        %v4512 = vsel %vm550, %v4505, 0
        %v4515 = vsel %vm550, %v4506, 0
        %v4518 = vsel %vm550, %v4507, 0
        %4520 = vmatprep.subr.bf16.mxu0 %v4515
        %4521 = vmatpush1.bf16.msra.mxu0 %v4512
        %4522 = vmatprep.subr.bf16.mxu0 0
        %4523 = vmatpush1.bf16.msra.mxu0 0
        %4524 = vmatprep.subr.bf16.mxu0 0
        %4525 = vmatpush1.bf16.msra.mxu0 0
        %4526 = vmatprep.subr.bf16.mxu0 0
        %4527 = vmatpush1.bf16.msra.mxu0 0
        %4528 = vmatprep.subr.bf16.mxu0 0
        %4529 = vmatpush1.bf16.msra.mxu0 0
        %4530 = vmatprep.subr.bf16.mxu0 0
        %4531 = vmatpush1.bf16.msra.mxu0 0
        %4532 = vmatprep.subr.bf16.mxu0 0
        %4533 = vmatpush1.bf16.msra.mxu0 0
        %4534 = vmatprep.subr.bf16.mxu0 0
        %4535 = vmatpush1.bf16.msra.mxu0 0
        %4536 = vmatprep.subr.bf16.mxu0 0
        %4537 = vmatpush1.bf16.msra.mxu0 0
        %4538 = vmatprep.subr.bf16.mxu0 0
        %4539 = vmatpush1.bf16.msra.mxu0 0
        %4540 = vmatprep.subr.bf16.mxu0 0
        %4541 = vmatpush1.bf16.msra.mxu0 0
        %4542 = vmatprep.subr.bf16.mxu0 0
        %4543 = vmatpush1.bf16.msra.mxu0 0
        %4544 = vmatprep.subr.bf16.mxu0 0
        %4545 = vmatpush1.bf16.msra.mxu0 0
        %4546 = vmatprep.subr.bf16.mxu0 0
        %4547 = vmatpush1.bf16.msra.mxu0 0
        %4548 = vmatprep.subr.bf16.mxu0 0
        %4549 = vmatpush1.bf16.msra.mxu0 0
        %4550 = vmatprep.subr.bf16.mxu0 0
        %4551 = vmatpush1.bf16.msra.mxu0 0
        %4552 = vmatprep.mubr.bf16.mxu0 0
        %4553 = vmatmul.mubr.bf16.gmra.mrb[0].mxu0 %v4509
        %v4554 = vpop.f32.mrb[0].mxu0
        %v4555 = vadd.f32 0.0, %v4554
        %v4556 = vpop.f32.mrb[0].mxu0
        %v4557 = vadd.f32 0.0, %v4556
        %v4558 = vpop.f32.mrb[0].mxu0
        %v4559 = vpop.f32.mrb[0].mxu0
        %4560 = vdwg.mxu0
        %4561 = vmatprep.subr.bf16.mxu0 0
        %4562 = vmatpush1.bf16.msra.mxu0 %v4518
        %4563 = vmatprep.subr.bf16.mxu0 0
        %4564 = vmatpush1.bf16.msra.mxu0 0
        %4565 = vmatprep.subr.bf16.mxu0 0
        %4566 = vmatpush1.bf16.msra.mxu0 0
        %4567 = vmatprep.subr.bf16.mxu0 0
        %4568 = vmatpush1.bf16.msra.mxu0 0
        %4569 = vmatprep.subr.bf16.mxu0 0
        %4570 = vmatpush1.bf16.msra.mxu0 0
        %4571 = vmatprep.subr.bf16.mxu0 0
        %4572 = vmatpush1.bf16.msra.mxu0 0
        %4573 = vmatprep.subr.bf16.mxu0 0
        %4574 = vmatpush1.bf16.msra.mxu0 0
        %4575 = vmatprep.subr.bf16.mxu0 0
        %4576 = vmatpush1.bf16.msra.mxu0 0
        %4577 = vmatprep.subr.bf16.mxu0 0
        %4578 = vmatpush1.bf16.msra.mxu0 0
        %4579 = vmatprep.subr.bf16.mxu0 0
        %4580 = vmatpush1.bf16.msra.mxu0 0
        %4581 = vmatprep.subr.bf16.mxu0 0
        %4582 = vmatpush1.bf16.msra.mxu0 0
        %4583 = vmatprep.subr.bf16.mxu0 0
        %4584 = vmatpush1.bf16.msra.mxu0 0
        %4585 = vmatprep.subr.bf16.mxu0 0
        %4586 = vmatpush1.bf16.msra.mxu0 0
        %4587 = vmatprep.subr.bf16.mxu0 0
        %4588 = vmatpush1.bf16.msra.mxu0 0
        %4589 = vmatprep.subr.bf16.mxu0 0
        %4590 = vmatpush1.bf16.msra.mxu0 0
        %4591 = vmatprep.subr.bf16.mxu0 0
        %4592 = vmatpush1.bf16.msra.mxu0 0
        %4593 = vmatprep.mubr.bf16.mxu0 0
        %4594 = vmatmul.mubr.bf16.gmra.mrb[0].mxu0 %v4509
        %v4595 = vpop.f32.mrb[0].mxu0
        %v4596 = vadd.f32 0.0, %v4595
        %v4597 = vpop.f32.mrb[0].mxu0
        %v4598 = vpop.f32.mrb[0].mxu0
        %v4599 = vpop.f32.mrb[0].mxu0
        %4600 = vdwg.mxu0
        %v4601 = vadd.f32 %v4492, %v4555
        %v4602 = vadd.f32 %v4493, %v4557
        %v4603 = vadd.f32 %v4494, %v4596
        %v4604 = vld [vmem:[#allocation18] sm:$0xff]
        %4606 = vset.pattern.permute.xlu0 0
        %4607 = vperm.xlu0 %4606, %v4604
        %v4608 = vpop.permute.xlu0 %4607
        %v4610 = vadd.f32 %v4601, %v4608
        %v4611 = vadd.f32 %v4602, %v4608
        %v4612 = vadd.f32 %v4603, %v4608
        %4613 = vst [vmem:[%s496] sm:$0xff] %v4610
        %4614 = vst [vmem:[%s496 + $0x8] sm:$0xff] %v4611
        %4615 = vst [vmem:[%s496 + $0x10] sm:$0xff] %v4612
        %s4616 = sand.u32 %s255, 1
        %s4617 = scalar_lea.sflag [#allocation6], %s4616
        %s4618 = sand.u32 %s255, 1
        %s4619 = smul.addr %s4618, 24
        %s4620 = scalar_lea.vmem [#allocation21], %s4619
        // Predicated region
        $region101: #{refine_module_forward.2} parent=59 // pred_check
          %p4621 = pneg %p265
        $region102: #{refine_module_forward.2} parent=59 // pred_check_branch
          %4623 = sbr.rel (%p4621) target = $region104
        $region103: #{refine_module_forward.2} parent=59 // pred_region
          %s4625 = ssub.s32 384, 384
          %4626 = vsyncadd %s4617, %s4625
          %s4627 = smul.addr %s32, 3
          %s4628 = smul.addr %s4627, 128
          %s4629 = scalar_lea.hbm %s10, %s4628
          %s4631 = sshll.u32 %s4620, 4
          %s4632 = int_to_ptr.vmem [resolvable:$true] %s4631
          %4634 = dma.vmem_to_hbm [thread:$0]  %s4632, 384, %s4629, %s4617
        $region104: #{refine_module_forward.2} parent=59 // pred_fallthru
          _
      $region60: #{refine_module_forward.2} parent=5 // pred_fallthru
        _
      %p4635 = scmp.le.s32.totalorder 2, %s27
      // Predicated region
      $region105: #{refine_module_forward.2} parent=5 // pred_check
        %p4636 = pneg %p4635
      $region106: #{refine_module_forward.2} parent=5 // pred_check_branch
        %4638 = sbr.rel (%p4636) target = $region108
      $region107: #{refine_module_forward.2} parent=5 // pred_region
        %s4639 = ssub.s32 %s27, 2
        // Predicated region
        $region109: #{refine_module_forward.2} parent=107 // pred_check
          %p4640 = pneg %p271
        $region110: #{refine_module_forward.2} parent=107 // pred_check_branch
          %4642 = sbr.rel (%p4640) target = $region112
        $region111: #{refine_module_forward.2} parent=107 // pred_region
          %s4643 = sand.u32 %s256, 1
          %s4644 = scalar_lea.sflag [#allocation6], %s4643
          %s4645 = sand.u32 %s256, 1
          %s4646 = smul.addr %s4645, 24
          %s4647 = scalar_lea.vmem [#allocation21], %s4646
          %4648 = dma.done %s4644, 384
        $region112: #{refine_module_forward.2} parent=107 // pred_fallthru
          _
      $region108: #{refine_module_forward.2} parent=5 // pred_fallthru
        _
    $region6: #{refine_module_forward.2} parent=1 // loop_footer
      %s31 = sadd.s32 1, %s27
    $region7: #{refine_module_forward.2} parent=1 // loop_footer_branch
      %26 = sbr.rel target = $region3
    $region8: #{refine_module_forward.2} parent=1 // loop_exit
      _
    %4649 = vsyncpa [#allocation5], 1
    %s4650 = scalar_lea.sflag [#allocation5], 1
    %4651 = vsyncpa %s4650, 1
    %4652 = vsyncpa [#allocation8], 1
    %4653 = vsyncpa [#allocation11], 1
    %4654 = vsyncpa [#allocation14], 1
    %4655 = vsyncpa [#allocation17], 1
    %4656 = vsyncpa [#allocation20], 1
    %4657 = vsyncpa [#allocation6], 1
    %s4658 = scalar_lea.sflag [#allocation6], 1
    %4659 = vsyncpa %s4658, 1

</llo_original>
